<compile_context>
chip_gen: v7x
topology: tpu7x:2x2x1
jax: 0.10.0
libtpu: 0.0.40
codegen_flags: <defaults>
</compile_context>

<pallas_src>
import jax
import jax.numpy as jnp
from jax.experimental import pallas as pl
from jax.experimental.pallas import tpu as pltpu

# Model dims (TestModel: Linear(12,8) -> MHA(d=8, n_heads=2, d_head=4) -> Linear(8,10))
D_IN = 12
D_MODEL = 8
N_HEADS = 2
D_HEAD = D_MODEL // N_HEADS
D_OUT = 10
D_FUSED = D_MODEL + 3 * D_MODEL  # 32: [out1(8) | q(8) | k(8) | v(8)]


def testmodel_kernel(
    x_ref,      # (TB, S, D_IN)
    wf_ref,     # (D_IN, D_FUSED)   fused [W1t | W1t @ Wqkvt]   (q columns pre-scaled)
    bf_ref,     # (1, D_FUSED)      fused [b1  | b1 @ Wqkvt + bqkv]
    w2t_ref,    # (D_MODEL, D_OUT)
    b2_ref,     # (1, D_OUT)
    out1_ref,   # (TB, S, D_MODEL)
    out2_ref,   # (TB, S, D_MODEL)
    out3_ref,   # (TB, S, D_OUT)
):
    TB, S, _ = x_ref.shape

    # ---- fused mlp_1 + QKV projection: one (TB*S, 12) @ (12, 32) matmul ----
    x = x_ref[...].reshape(TB * S, D_IN)
    fused = jnp.dot(x, wf_ref[...], preferred_element_type=jnp.float32) + bf_ref[...]
    fused = fused.reshape(TB, S, D_FUSED)

    # lanes 0:8 are exactly x @ W1t + b1  (mlp_1 output)
    out1_ref[...] = fused[:, :, :D_MODEL]
    qkv = fused[:, :, D_MODEL:]          # (TB, S, 24): [q_h0 q_h1 | k_h0 k_h1 | v_h0 v_h1]

    # ---- per-head attention (N_HEADS == 2, static unroll; 1/sqrt(d_head) already in q) ----
    head_outs = []
    for h in range(N_HEADS):
        lo = h * D_HEAD
        q = qkv[:, :, lo:lo + D_HEAD]                               # (TB, S, 4), pre-scaled
        k = qkv[:, :, D_MODEL + lo:D_MODEL + lo + D_HEAD]
        v = qkv[:, :, 2 * D_MODEL + lo:2 * D_MODEL + lo + D_HEAD]
        scores = jnp.einsum("bqd,bkd->bqk", q, k,
                            preferred_element_type=jnp.float32)    # (TB, S, S)
        m = jnp.max(scores, axis=-1, keepdims=True)
        e = jnp.exp(scores - m)
        attn = e / jnp.sum(e, axis=-1, keepdims=True)               # exact softmax
        head_outs.append(jnp.einsum("bqk,bkd->bqd", attn, v,
                                    preferred_element_type=jnp.float32))
    out2 = jnp.concatenate(head_outs, axis=-1)                      # (TB, S, D_MODEL)
    out2_ref[...] = out2

    # ---- mlp_2: Linear(8 -> 10) over all rows ----
    out3 = jnp.dot(out2.reshape(TB * S, D_MODEL), w2t_ref[...],
                   preferred_element_type=jnp.float32) + b2_ref[...]
    out3_ref[...] = out3.reshape(TB, S, D_OUT)


def _pack_fused(params):
    """Pack per-head q/k/v Linear(4,4) into block-diag form, fold in 1/sqrt(d_head),
    then fuse with mlp_1 into a single (D_IN, 32) weight and (1, 32) bias."""
    scale = 1.0 / (float(D_HEAD) ** 0.5)
    wq = jax.scipy.linalg.block_diag(*[params["wqt"][h] for h in range(N_HEADS)]) * scale
    wk = jax.scipy.linalg.block_diag(*[params["wkt"][h] for h in range(N_HEADS)])
    wv = jax.scipy.linalg.block_diag(*[params["wvt"][h] for h in range(N_HEADS)])
    wqkvt = jnp.concatenate([wq, wk, wv], axis=1)                           # (8, 24)
    bqkv = jnp.concatenate([params["bq"].reshape(1, D_MODEL) * scale,
                            params["bk"].reshape(1, D_MODEL),
                            params["bv"].reshape(1, D_MODEL)], axis=1)      # (1, 24)
    w1t, b1 = params["w1t"], params["b1"]                                   # (12, 8), (1, 8)
    hi = jax.lax.Precision.HIGHEST
    w1_qkv = jnp.dot(w1t, wqkvt, precision=hi)                              # (12, 24)
    b_qkv = jnp.dot(b1, wqkvt, precision=hi) + bqkv                         # (1, 24)
    w_fused = jnp.concatenate([w1t, w1_qkv], axis=1)                        # (12, 32)
    b_fused = jnp.concatenate([b1, b_qkv], axis=1)                          # (1, 32)
    return w_fused, b_fused


def _round_up(x, m):
    return (x + m - 1) // m * m


def _device_budget():
    """(num TensorCores per chip, VMEM budget in bytes for the pipelined data blocks)."""
    kind = ""
    try:
        kind = jax.devices()[0].device_kind.lower()
    except Exception:
        pass
    if "v7" in kind:
        return 2, 24 * 1024 * 1024    # 64 MiB physical VMEM -> stay well under half
    if "v6" in kind:
        return 1, 28 * 1024 * 1024    # 32 MiB scoped default, 128 MiB physical
    return 1, 12 * 1024 * 1024        # v5e / unknown: 16 MiB scoped default


def _choose_tb(B, S, budget_bytes, num_tc):
    """Batch elements per grid step, using *padded* (8,128) tile accounting."""
    s_pad = _round_up(S, 8)
    # 4 fp32 streams per batch element (x, out1, out2, out3); each block pads its last dim
    # (12/8/8/10) to 128 lanes and S to a multiple of 8; each stream is double-buffered.
    per_b = 2 * 4 * s_pad * 128 * 4
    tb = max(1, min(B, budget_bytes // per_b))
    if num_tc > 1 and B >= num_tc:
        # only force multiple grid steps where "parallel" can shard across TensorCores (v7x)
        tb = min(tb, -(-B // num_tc))
    return tb


@jax.jit
def testmodel_forward(images, params):
    B, S, _ = images.shape
    num_tc, budget = _device_budget()
    tb = _choose_tb(B, S, budget, num_tc)
    nb = pl.cdiv(B, tb)
    w_fused, b_fused = _pack_fused(params)

    full = lambda shape: pl.BlockSpec(shape, lambda b: tuple(0 for _ in shape))
    in_specs = [
        pl.BlockSpec((tb, S, D_IN), lambda b: (b, 0, 0)),
        full((D_IN, D_FUSED)),
        full((1, D_FUSED)),
        full((D_MODEL, D_OUT)),
        full((1, D_OUT)),
    ]
    out_specs = [
        pl.BlockSpec((tb, S, D_MODEL), lambda b: (b, 0, 0)),
        pl.BlockSpec((tb, S, D_MODEL), lambda b: (b, 0, 0)),
        pl.BlockSpec((tb, S, D_OUT), lambda b: (b, 0, 0)),
    ]
    out_shapes = (
        jax.ShapeDtypeStruct((B, S, D_MODEL), jnp.float32),
        jax.ShapeDtypeStruct((B, S, D_MODEL), jnp.float32),
        jax.ShapeDtypeStruct((B, S, D_OUT), jnp.float32),
    )

    # explicit scoped-VMEM limit consistent with the padded budget (covers weights + headroom)
    vmem_limit = budget + (8 * 1024 * 1024)

    flops = (2 * B * S * D_IN * D_FUSED              # fused mlp_1 + QKV
             + 4 * B * N_HEADS * S * S * D_HEAD      # QK^T and attn @ V
             + 2 * B * S * D_MODEL * D_OUT)          # mlp_2
    transcendentals = B * N_HEADS * S * S
    bytes_accessed = 4 * (B * S * (D_IN + 2 * D_MODEL + D_OUT)
                          + D_IN * D_FUSED + D_FUSED
                          + D_MODEL * D_OUT + D_OUT)

    return pl.pallas_call(
        testmodel_kernel,
        out_shape=out_shapes,
        grid_spec=pltpu.PrefetchScalarGridSpec(
            num_scalar_prefetch=0,
            grid=(nb,),
            in_specs=in_specs,
            out_specs=out_specs,
        ),
        compiler_params=pltpu.CompilerParams(
            dimension_semantics=("parallel",),
            vmem_limit_bytes=vmem_limit,
        ),
        cost_estimate=pl.CostEstimate(flops=flops, transcendentals=transcendentals,
                                      bytes_accessed=bytes_accessed),
    )(images, w_fused, b_fused, params["w2t"], params["b2"])


def init_params(key):
    """Deterministic parameter init (synthetic; not a checkpoint load)."""
    ks = jax.random.split(key, 8)
    p = {}
    # nn.Linear(12, 8): stored transposed for x @ W^T
    p["w1t"] = jax.random.normal(ks[0], (D_IN, D_MODEL), jnp.float32) * 0.1
    p["b1"] = jax.random.normal(ks[1], (1, D_MODEL), jnp.float32) * 0.1
    # per-head nn.Linear(4, 4) for q/k/v, stacked over heads
    p["wqt"] = jax.random.normal(ks[2], (N_HEADS, D_HEAD, D_HEAD), jnp.float32) * 0.2
    p["bq"] = jax.random.normal(ks[3], (N_HEADS, 1, D_HEAD), jnp.float32) * 0.1
    p["wkt"] = jax.random.normal(ks[4], (N_HEADS, D_HEAD, D_HEAD), jnp.float32) * 0.2
    p["bk"] = jax.random.normal(ks[5], (N_HEADS, 1, D_HEAD), jnp.float32) * 0.1
    p["wvt"] = jax.random.normal(ks[6], (N_HEADS, D_HEAD, D_HEAD), jnp.float32) * 0.2
    p["bv"] = jax.random.normal(ks[7], (N_HEADS, 1, D_HEAD), jnp.float32) * 0.1
    # nn.Linear(8, 10)
    p["w2t"] = jax.random.normal(jax.random.PRNGKey(42), (D_MODEL, D_OUT), jnp.float32) * 0.1
    p["b2"] = jax.random.normal(jax.random.PRNGKey(43), (1, D_OUT), jnp.float32) * 0.1
    return p


def reference_forward(images, p):
    """Pure-JAX reference matching the PyTorch forward semantics (per-head params)."""
    out1 = images @ p["w1t"] + p["b1"][0]                          # (B,S,8)
    heads = []
    for h in range(N_HEADS):
        seq = out1[..., h * D_HEAD:(h + 1) * D_HEAD]               # (B,S,4)
        q = seq @ p["wqt"][h] + p["bq"][h, 0]
        k = seq @ p["wkt"][h] + p["bk"][h, 0]
        v = seq @ p["wvt"][h] + p["bv"][h, 0]
        scores = jnp.einsum("bqd,bkd->bqk", q, k) / (D_HEAD ** 0.5)
        attn = jax.nn.softmax(scores, axis=-1)
        heads.append(jnp.einsum("bqk,bkd->bqd", attn, v))
    out2 = jnp.concatenate(heads, axis=-1)                          # (B,S,8)
    out3 = out2 @ p["w2t"] + p["b2"][0]                             # (B,S,10)
    return out1, out2, out3


if __name__ == "__main__":
    # TODO(synk): backward-pass grad hooks (register_hook taps) have no forward-kernel
    # equivalent; this kernel implements the forward pass only.
    key = jax.random.PRNGKey(0)
    B, S = 8, 8
    kx, kp = jax.random.split(key)
    images = jax.random.normal(kx, (B, S, D_IN), jnp.float32)
    params = init_params(kp)

    out1, out2, out3 = testmodel_forward(images, params)
    jax.block_until_ready((out1, out2, out3))

    r1, r2, r3 = reference_forward(images, params)
    # out1 is bitwise the same computation (lane slice of the fused matmul); out2/out3 differ
    # only by the (pre-folded) weight fusion reassociation -> tight tolerances, exact softmax.
    assert jnp.allclose(out1, r1, atol=1e-5, rtol=1e-5)
    assert jnp.allclose(out2, r2, atol=1e-4, rtol=1e-4)
    assert jnp.allclose(out3, r3, atol=1e-4, rtol=1e-4)

    print("KERNEL_OK")
</pallas_src>

<mosaic_0001>
module attributes {stable_mosaic.version = 11 : i64} {
  func.func @testmodel_kernel(%arg0: i32, %arg1: memref<8x8x12xf32, #tpu.memory_space<vmem>>, %arg2: memref<12x32xf32, #tpu.memory_space<vmem>>, %arg3: memref<1x32xf32, #tpu.memory_space<vmem>>, %arg4: memref<8x10xf32, #tpu.memory_space<vmem>>, %arg5: memref<1x10xf32, #tpu.memory_space<vmem>>, %arg6: memref<8x8x8xf32, #tpu.memory_space<vmem>>, %arg7: memref<8x8x8xf32, #tpu.memory_space<vmem>>, %arg8: memref<8x8x10xf32, #tpu.memory_space<vmem>>) attributes {dimension_semantics = [#tpu.dimension_semantics<parallel>], iteration_bounds = array<i64: 1>, scalar_prefetch = 0 : i64, scratch_operands = 0 : i64, tpu.core_type = #tpu.core_type<tc>, window_params = [{transform_indices = @transform_0, window_bounds = array<i64: 8, 8, 12>}, {pipeline_mode = #tpu.pipeline_mode<synchronous>, transform_indices = @transform_1, window_bounds = array<i64: 12, 32>}, {pipeline_mode = #tpu.pipeline_mode<synchronous>, transform_indices = @transform_2, window_bounds = array<i64: 1, 32>}, {pipeline_mode = #tpu.pipeline_mode<synchronous>, transform_indices = @transform_3, window_bounds = array<i64: 8, 10>}, {pipeline_mode = #tpu.pipeline_mode<synchronous>, transform_indices = @transform_4, window_bounds = array<i64: 1, 10>}, {transform_indices = @transform_5, window_bounds = array<i64: 8, 8, 8>}, {transform_indices = @transform_6, window_bounds = array<i64: 8, 8, 8>}, {transform_indices = @transform_7, window_bounds = array<i64: 8, 8, 10>}]} {
    %c0 = arith.constant 0 : index
    %c0_0 = arith.constant 0 : index
    %c0_1 = arith.constant 0 : index
    %0 = vector.load %arg1[%c0, %c0_0, %c0_1] : memref<8x8x12xf32, #tpu.memory_space<vmem>>, vector<8x8x12xf32>
    %1 = vector.shape_cast %0 : vector<8x8x12xf32> to vector<64x12xf32>
    %c0_2 = arith.constant 0 : index
    %c0_3 = arith.constant 0 : index
    %2 = vector.load %arg2[%c0_2, %c0_3] : memref<12x32xf32, #tpu.memory_space<vmem>>, vector<12x32xf32>
    %cst = arith.constant dense<0.000000e+00> : vector<64x32xf32>
    %3 = tpu.matmul %1, %2, %cst {dimension_numbers = #tpu.dot_dimension_numbers<[1], [0], [0], [1], [0, 0, 1, 1], [], []>} : vector<64x12xf32>, vector<12x32xf32>, vector<64x32xf32> -> vector<64x32xf32>
    %c0_4 = arith.constant 0 : index
    %c0_5 = arith.constant 0 : index
    %4 = vector.load %arg3[%c0_4, %c0_5] : memref<1x32xf32, #tpu.memory_space<vmem>>, vector<1x32xf32>
    %5 = vector.broadcast %4 : vector<1x32xf32> to vector<64x32xf32>
    %6 = arith.addf %3, %5 : vector<64x32xf32>
    %7 = vector.shape_cast %6 : vector<64x32xf32> to vector<8x8x32xf32>
    %8 = vector.extract_strided_slice %7 {offsets = [0, 0, 0], sizes = [8, 8, 8], strides = [1, 1, 1]} : vector<8x8x32xf32> to vector<8x8x8xf32>
    %c0_6 = arith.constant 0 : index
    %c0_7 = arith.constant 0 : index
    %c0_8 = arith.constant 0 : index
    %9 = vector.load %arg6[%c0_6, %c0_7, %c0_8] : memref<8x8x8xf32, #tpu.memory_space<vmem>>, vector<8x8x8xf32>
    tpu.vector_store %arg6[%c0_6, %c0_7, %c0_8], %8 {strides = array<i32>} : memref<8x8x8xf32, #tpu.memory_space<vmem>>, vector<8x8x8xf32>,
    %10 = vector.extract_strided_slice %7 {offsets = [0, 0, 8], sizes = [8, 8, 24], strides = [1, 1, 1]} : vector<8x8x32xf32> to vector<8x8x24xf32>
    %11 = vector.extract_strided_slice %10 {offsets = [0, 0, 0], sizes = [8, 8, 4], strides = [1, 1, 1]} : vector<8x8x24xf32> to vector<8x8x4xf32>
    %12 = vector.extract_strided_slice %10 {offsets = [0, 0, 8], sizes = [8, 8, 4], strides = [1, 1, 1]} : vector<8x8x24xf32> to vector<8x8x4xf32>
    %13 = vector.extract_strided_slice %10 {offsets = [0, 0, 16], sizes = [8, 8, 4], strides = [1, 1, 1]} : vector<8x8x24xf32> to vector<8x8x4xf32>
    "tpu.trace_start"() <{level = 10 : i32, message = "bqd,bkd->bqk"}> : () -> ()
    %cst_9 = arith.constant dense<0.000000e+00> : vector<8x8x8xf32>
    %14 = tpu.matmul %11, %12, %cst_9 {dimension_numbers = #tpu.dot_dimension_numbers<[2], [2], [1], [1], [0, 0, 0, 1, 1, 1], [0], [0]>} : vector<8x8x4xf32>, vector<8x8x4xf32>, vector<8x8x8xf32> -> vector<8x8x8xf32>
    "tpu.trace_stop"() : () -> ()
    %cst_10 = arith.constant dense<0xFF800000> : vector<8x8xf32>
    %15 = vector.multi_reduction <maximumf>, %14, %cst_10 [2] : vector<8x8x8xf32> to vector<8x8xf32>
    %16 = vector.shape_cast %15 : vector<8x8xf32> to vector<8x8x1xf32>
    %17 = vector.broadcast %16 : vector<8x8x1xf32> to vector<8x8x8xf32>
    %18 = arith.subf %14, %17 : vector<8x8x8xf32>
    %19 = math.exp %18 : vector<8x8x8xf32>
    %cst_11 = arith.constant dense<0.000000e+00> : vector<8x8xf32>
    %20 = vector.multi_reduction <add>, %19, %cst_11 [2] : vector<8x8x8xf32> to vector<8x8xf32>
    %21 = vector.shape_cast %20 : vector<8x8xf32> to vector<8x8x1xf32>
    %22 = vector.broadcast %21 : vector<8x8x1xf32> to vector<8x8x8xf32>
    %23 = arith.divf %19, %22 : vector<8x8x8xf32>
    "tpu.trace_start"() <{level = 10 : i32, message = "bqk,bkd->bqd"}> : () -> ()
    %cst_12 = arith.constant dense<0.000000e+00> : vector<8x8x4xf32>
    %24 = tpu.matmul %23, %13, %cst_12 {dimension_numbers = #tpu.dot_dimension_numbers<[2], [1], [1], [2], [0, 0, 0, 1, 1, 2], [0], [0]>} : vector<8x8x8xf32>, vector<8x8x4xf32>, vector<8x8x4xf32> -> vector<8x8x4xf32>
    "tpu.trace_stop"() : () -> ()
    %25 = vector.extract_strided_slice %10 {offsets = [0, 0, 4], sizes = [8, 8, 4], strides = [1, 1, 1]} : vector<8x8x24xf32> to vector<8x8x4xf32>
    %26 = vector.extract_strided_slice %10 {offsets = [0, 0, 12], sizes = [8, 8, 4], strides = [1, 1, 1]} : vector<8x8x24xf32> to vector<8x8x4xf32>
    %27 = vector.extract_strided_slice %10 {offsets = [0, 0, 20], sizes = [8, 8, 4], strides = [1, 1, 1]} : vector<8x8x24xf32> to vector<8x8x4xf32>
    "tpu.trace_start"() <{level = 10 : i32, message = "bqd,bkd->bqk"}> : () -> ()
    %cst_13 = arith.constant dense<0.000000e+00> : vector<8x8x8xf32>
    %28 = tpu.matmul %25, %26, %cst_13 {dimension_numbers = #tpu.dot_dimension_numbers<[2], [2], [1], [1], [0, 0, 0, 1, 1, 1], [0], [0]>} : vector<8x8x4xf32>, vector<8x8x4xf32>, vector<8x8x8xf32> -> vector<8x8x8xf32>
    "tpu.trace_stop"() : () -> ()
    %cst_14 = arith.constant dense<0xFF800000> : vector<8x8xf32>
    %29 = vector.multi_reduction <maximumf>, %28, %cst_14 [2] : vector<8x8x8xf32> to vector<8x8xf32>
    %30 = vector.shape_cast %29 : vector<8x8xf32> to vector<8x8x1xf32>
    %31 = vector.broadcast %30 : vector<8x8x1xf32> to vector<8x8x8xf32>
    %32 = arith.subf %28, %31 : vector<8x8x8xf32>
    %33 = math.exp %32 : vector<8x8x8xf32>
    %cst_15 = arith.constant dense<0.000000e+00> : vector<8x8xf32>
    %34 = vector.multi_reduction <add>, %33, %cst_15 [2] : vector<8x8x8xf32> to vector<8x8xf32>
    %35 = vector.shape_cast %34 : vector<8x8xf32> to vector<8x8x1xf32>
    %36 = vector.broadcast %35 : vector<8x8x1xf32> to vector<8x8x8xf32>
    %37 = arith.divf %33, %36 : vector<8x8x8xf32>
    "tpu.trace_start"() <{level = 10 : i32, message = "bqk,bkd->bqd"}> : () -> ()
    %cst_16 = arith.constant dense<0.000000e+00> : vector<8x8x4xf32>
    %38 = tpu.matmul %37, %27, %cst_16 {dimension_numbers = #tpu.dot_dimension_numbers<[2], [1], [1], [2], [0, 0, 0, 1, 1, 2], [0], [0]>} : vector<8x8x8xf32>, vector<8x8x4xf32>, vector<8x8x4xf32> -> vector<8x8x4xf32>
    "tpu.trace_stop"() : () -> ()
    %39 = tpu.concatenate %24, %38 in 2 : vector<8x8x4xf32>, vector<8x8x4xf32> -> vector<8x8x8xf32>
    %c0_17 = arith.constant 0 : index
    %c0_18 = arith.constant 0 : index
    %c0_19 = arith.constant 0 : index
    %40 = vector.load %arg7[%c0_17, %c0_18, %c0_19] : memref<8x8x8xf32, #tpu.memory_space<vmem>>, vector<8x8x8xf32>
    tpu.vector_store %arg7[%c0_17, %c0_18, %c0_19], %39 {strides = array<i32>} : memref<8x8x8xf32, #tpu.memory_space<vmem>>, vector<8x8x8xf32>,
    %41 = vector.shape_cast %39 : vector<8x8x8xf32> to vector<64x8xf32>
    %c0_20 = arith.constant 0 : index
    %c0_21 = arith.constant 0 : index
    %42 = vector.load %arg4[%c0_20, %c0_21] : memref<8x10xf32, #tpu.memory_space<vmem>>, vector<8x10xf32>
    %cst_22 = arith.constant dense<0.000000e+00> : vector<64x10xf32>
    %43 = tpu.matmul %41, %42, %cst_22 {dimension_numbers = #tpu.dot_dimension_numbers<[1], [0], [0], [1], [0, 0, 1, 1], [], []>} : vector<64x8xf32>, vector<8x10xf32>, vector<64x10xf32> -> vector<64x10xf32>
    %c0_23 = arith.constant 0 : index
    %c0_24 = arith.constant 0 : index
    %44 = vector.load %arg5[%c0_23, %c0_24] : memref<1x10xf32, #tpu.memory_space<vmem>>, vector<1x10xf32>
    %45 = vector.broadcast %44 : vector<1x10xf32> to vector<64x10xf32>
    %46 = arith.addf %43, %45 : vector<64x10xf32>
    %47 = vector.shape_cast %46 : vector<64x10xf32> to vector<8x8x10xf32>
    %c0_25 = arith.constant 0 : index
    %c0_26 = arith.constant 0 : index
    %c0_27 = arith.constant 0 : index
    %48 = vector.load %arg8[%c0_25, %c0_26, %c0_27] : memref<8x8x10xf32, #tpu.memory_space<vmem>>, vector<8x8x10xf32>
    tpu.vector_store %arg8[%c0_25, %c0_26, %c0_27], %47 {strides = array<i32>} : memref<8x8x10xf32, #tpu.memory_space<vmem>>, vector<8x8x10xf32>,
    return
  }
  func.func @transform_0(%arg0: i32) -> (i32, i32, i32) {
    %c0_i32 = arith.constant 0 : i32
    %c0_i32_0 = arith.constant 0 : i32
    %c0_i32_1 = arith.constant 0 : i32
    return %arg0, %c0_i32, %c0_i32_0 : i32, i32, i32
  }
  func.func @transform_1(%arg0: i32) -> (i32, i32) {
    %c0_i32 = arith.constant 0 : i32
    %c0_i32_0 = arith.constant 0 : i32
    %c0_i32_1 = arith.constant 0 : i32
    return %c0_i32, %c0_i32_0 : i32, i32
  }
  func.func @transform_2(%arg0: i32) -> (i32, i32) {
    %c0_i32 = arith.constant 0 : i32
    %c0_i32_0 = arith.constant 0 : i32
    %c0_i32_1 = arith.constant 0 : i32
    return %c0_i32, %c0_i32_0 : i32, i32
  }
  func.func @transform_3(%arg0: i32) -> (i32, i32) {
    %c0_i32 = arith.constant 0 : i32
    %c0_i32_0 = arith.constant 0 : i32
    %c0_i32_1 = arith.constant 0 : i32
    return %c0_i32, %c0_i32_0 : i32, i32
  }
  func.func @transform_4(%arg0: i32) -> (i32, i32) {
    %c0_i32 = arith.constant 0 : i32
    %c0_i32_0 = arith.constant 0 : i32
    %c0_i32_1 = arith.constant 0 : i32
    return %c0_i32, %c0_i32_0 : i32, i32
  }
  func.func @transform_5(%arg0: i32) -> (i32, i32, i32) {
    %c0_i32 = arith.constant 0 : i32
    %c0_i32_0 = arith.constant 0 : i32
    %c0_i32_1 = arith.constant 0 : i32
    return %arg0, %c0_i32, %c0_i32_0 : i32, i32, i32
  }
  func.func @transform_6(%arg0: i32) -> (i32, i32, i32) {
    %c0_i32 = arith.constant 0 : i32
    %c0_i32_0 = arith.constant 0 : i32
    %c0_i32_1 = arith.constant 0 : i32
    return %arg0, %c0_i32, %c0_i32_0 : i32, i32, i32
  }
  func.func @transform_7(%arg0: i32) -> (i32, i32, i32) {
    %c0_i32 = arith.constant 0 : i32
    %c0_i32_0 = arith.constant 0 : i32
    %c0_i32_1 = arith.constant 0 : i32
    return %arg0, %c0_i32, %c0_i32_0 : i32, i32, i32
  }
}

</mosaic_0001>

<llo_original>
// kernel: testmodel_forward.1
$region0: #{testmodel_forward.1}
  #allocation0 [shape = 'u32[]', space=smem, size = 0x4, offset = 0x4, fixed_abs, tag = 'smem constant byte address 0x4 - core index']
  #allocation1 [shape = 'u32[144,128]{1,0:T(1,128)}', space=vmem, size = 0x12000, scoped, tag = 'internal scratch']
  %s0 = inlined_call_operand.vmem [shape: f32[8,8,12], index: 0, kind: input, shape index: {}]
  %s1 = inlined_call_operand.vmem [shape: f32[12,32], index: 1, kind: input, shape index: {}]
  %s2 = inlined_call_operand.vmem [shape: f32[1,32], index: 2, kind: input, shape index: {}]
  %s3 = inlined_call_operand.vmem [shape: f32[8,10], index: 3, kind: input, shape index: {}]
  %s4 = inlined_call_operand.vmem [shape: f32[1,10], index: 4, kind: input, shape index: {}]
  %s5 = inlined_call_operand.hbm [shape: f32[8,8,8], index: 5, kind: output, shape index: {0}]
  %s6 = inlined_call_operand.hbm [shape: f32[8,8,8], index: 6, kind: output, shape index: {1}]
  %s7 = inlined_call_operand.hbm [shape: f32[8,8,10], index: 7, kind: output, shape index: {2}]
  %8 = xla_tuple %s5, %s6, %s7
  %s9 = sld [smem:[#allocation0]]
  $region46: #{testmodel_forward.1} parent=0
    _
  %s11 = ssub.s32 1, %s9
  %s12 = scalar_select 0, %s11, %s9
  $region1: #{testmodel_forward.1} parent=0
    #allocation2 [shape = 'u8[32768]{0}', space=vmem, size = 0x8000, scoped, tag = 'output window, operand 0, single buffered']
    #allocation3 [shape = 's32[1]{0}', space=sflag, size = 0x4, scoped, tag = 'scoped memory for testmodel_forward.1']
    #allocation4 [shape = 'u8[32768]{0}', space=vmem, size = 0x8000, scoped, tag = 'output window, operand 1, single buffered']
    #allocation5 [shape = 's32[1]{0}', space=sflag, size = 0x4, scoped, tag = 'scoped memory for testmodel_forward.1']
    #allocation6 [shape = 'u8[32768]{0}', space=vmem, size = 0x8000, scoped, tag = 'output window, operand 2, single buffered']
    %13 = vsyncpa [#allocation3], 0
    %14 = vsyncpa [#allocation5], 0
    // Predicated region
    $region2: #{testmodel_forward.1} parent=1 // pred_check
      _
    $region3: #{testmodel_forward.1} parent=1 // pred_check_branch
      %16 = sbr.rel (0) target = $region5
    $region4: #{testmodel_forward.1} parent=1 // pred_region
      _
    $region5: #{testmodel_forward.1} parent=1 // pred_fallthru
      _
    // Predicated region
    $region6: #{testmodel_forward.1} parent=1 // pred_check
      _
    $region7: #{testmodel_forward.1} parent=1 // pred_check_branch
      %18 = sbr.rel (0) target = $region9
    $region8: #{testmodel_forward.1} parent=1 // pred_region
      _
    $region9: #{testmodel_forward.1} parent=1 // pred_fallthru
      _
    // Predicated region
    $region10: #{testmodel_forward.1} parent=1 // pred_check
      _
    $region11: #{testmodel_forward.1} parent=1 // pred_check_branch
      %20 = sbr.rel (0) target = $region13
    $region12: #{testmodel_forward.1} parent=1 // pred_region
      _
    $region13: #{testmodel_forward.1} parent=1 // pred_fallthru
      _
    // Predicated region
    $region14: #{testmodel_forward.1} parent=1 // pred_check
      _
    $region15: #{testmodel_forward.1} parent=1 // pred_check_branch
      %22 = sbr.rel (0) target = $region17
    $region16: #{testmodel_forward.1} parent=1 // pred_region
      _
    $region17: #{testmodel_forward.1} parent=1 // pred_fallthru
      _
    // Predicated region
    $region18: #{testmodel_forward.1} parent=1 // pred_check
      _
    $region19: #{testmodel_forward.1} parent=1 // pred_check_branch
      %24 = sbr.rel (0) target = $region21
    $region20: #{testmodel_forward.1} parent=1 // pred_region
      _
    $region21: #{testmodel_forward.1} parent=1 // pred_fallthru
      _
    %v25 = vld [vmem:[%s0] sm:$0xff]
    %v26 = vld [vmem:[%s0 + $0x8] sm:$0xff]
    %v27 = vld [vmem:[%s0 + $0x10] sm:$0xff]
    %v28 = vld [vmem:[%s0 + $0x18] sm:$0xff]
    %v29 = vld [vmem:[%s0 + $0x20] sm:$0xff]
    %v30 = vld [vmem:[%s0 + $0x28] sm:$0xff]
    %v31 = vld [vmem:[%s0 + $0x30] sm:$0xff]
    %v32 = vld [vmem:[%s0 + $0x38] sm:$0xff]
    %v33 = vld [vmem:[%s1] sm:$0xff]
    %v34 = vld [vmem:[%s1 + $0x8] sm:$0xf]
    %v35 = vld [vmem:[%s2] sm:$0x1]
    %v37 = vlaneseq
    %v38 = vshrl.u32 %v37, 7
    %v39 = vsub.s32 0, %v38
    %v40 = vrot.slane %v35, %v39
    %vm42 = vcmask 97280
    %v44 = vsel %vm42, %v25, 0
    %v47 = vsel %vm42, %v26, 0
    %v50 = vsel %vm42, %v27, 0
    %v53 = vsel %vm42, %v28, 0
    %v56 = vsel %vm42, %v29, 0
    %v59 = vsel %vm42, %v30, 0
    %v62 = vsel %vm42, %v31, 0
    %v65 = vsel %vm42, %v32, 0
    %vm67 = vcmask 1043456
    %v69 = vsel %vm67, %v34, 0
    %71 = vmatprep.subr.mxu0 0.0
    %72 = vmatpush1.msra.mxu0 %v33
    %73 = vmatprep.subr.mxu0 0.0
    %74 = vmatpush1.msra.mxu0 %v69
    %75 = vmatprep.subr.mxu0 0.0
    %76 = vmatpush1.msra.mxu0 0.0
    %77 = vmatprep.subr.mxu0 0.0
    %78 = vmatpush1.msra.mxu0 0.0
    %79 = vmatprep.subr.mxu0 0.0
    %80 = vmatpush1.msra.mxu0 0.0
    %81 = vmatprep.subr.mxu0 0.0
    %82 = vmatpush1.msra.mxu0 0.0
    %83 = vmatprep.subr.mxu0 0.0
    %84 = vmatpush1.msra.mxu0 0.0
    %85 = vmatprep.subr.mxu0 0.0
    %86 = vmatpush1.msra.mxu0 0.0
    %87 = vmatprep.subr.mxu0 0.0
    %88 = vmatpush1.msra.mxu0 0.0
    %89 = vmatprep.subr.mxu0 0.0
    %90 = vmatpush1.msra.mxu0 0.0
    %91 = vmatprep.subr.mxu0 0.0
    %92 = vmatpush1.msra.mxu0 0.0
    %93 = vmatprep.subr.mxu0 0.0
    %94 = vmatpush1.msra.mxu0 0.0
    %95 = vmatprep.subr.mxu0 0.0
    %96 = vmatpush1.msra.mxu0 0.0
    %97 = vmatprep.subr.mxu0 0.0
    %98 = vmatpush1.msra.mxu0 0.0
    %99 = vmatprep.subr.mxu0 0.0
    %100 = vmatpush1.msra.mxu0 0.0
    %101 = vmatprep.subr.mxu0 0.0
    %102 = vmatpush1.msra.mxu0 0.0
    %103 = vmatprep.subr.mxu0 0.0
    %104 = vmatpush1.msra.mxu0 0.0
    %105 = vmatprep.subr.mxu0 0.0
    %106 = vmatpush1.msra.mxu0 0.0
    %107 = vmatprep.subr.mxu0 0.0
    %108 = vmatpush1.msra.mxu0 0.0
    %109 = vmatprep.subr.mxu0 0.0
    %110 = vmatpush1.msra.mxu0 0.0
    %111 = vmatprep.subr.mxu0 0.0
    %112 = vmatpush1.msra.mxu0 0.0
    %113 = vmatprep.subr.mxu0 0.0
    %114 = vmatpush1.msra.mxu0 0.0
    %115 = vmatprep.subr.mxu0 0.0
    %116 = vmatpush1.msra.mxu0 0.0
    %117 = vmatprep.subr.mxu0 0.0
    %118 = vmatpush1.msra.mxu0 0.0
    %119 = vmatprep.subr.mxu0 0.0
    %120 = vmatpush1.msra.mxu0 0.0
    %121 = vmatprep.subr.mxu0 0.0
    %122 = vmatpush1.msra.mxu0 0.0
    %123 = vmatprep.subr.mxu0 0.0
    %124 = vmatpush1.msra.mxu0 0.0
    %125 = vmatprep.subr.mxu0 0.0
    %126 = vmatpush1.msra.mxu0 0.0
    %127 = vmatprep.subr.mxu0 0.0
    %128 = vmatpush1.msra.mxu0 0.0
    %129 = vmatprep.subr.mxu0 0.0
    %130 = vmatpush1.msra.mxu0 0.0
    %131 = vmatprep.subr.mxu0 0.0
    %132 = vmatpush1.msra.mxu0 0.0
    %133 = vmatprep.subr.mxu0 0.0
    %134 = vmatpush1.msra.mxu0 0.0
    %135 = vmatprep.mubr.f32.mxu0 0.0
    %136 = vmatmul.mubr.f32.gmra.mrb[0].mxu0 %v44
    %v137 = vpop.f32.mrb[0].mxu0
    %v138 = vadd.f32 %v40, %v137
    %v139 = vpop.f32.mrb[0].mxu0
    %140 = vmatprep.mubr.f32.mxu0 0.0
    %141 = vmatmul.mubr.f32.gmra.mrb[0].mxu0 %v47
    %v142 = vpop.f32.mrb[0].mxu0
    %v143 = vadd.f32 %v40, %v142
    %v144 = vpop.f32.mrb[0].mxu0
    %145 = vmatprep.mubr.f32.mxu0 0.0
    %146 = vmatmul.mubr.f32.gmra.mrb[0].mxu0 %v50
    %v147 = vpop.f32.mrb[0].mxu0
    %v148 = vadd.f32 %v40, %v147
    %v149 = vpop.f32.mrb[0].mxu0
    %150 = vmatprep.mubr.f32.mxu0 0.0
    %151 = vmatmul.mubr.f32.gmra.mrb[0].mxu0 %v53
    %v152 = vpop.f32.mrb[0].mxu0
    %v153 = vadd.f32 %v40, %v152
    %v154 = vpop.f32.mrb[0].mxu0
    %155 = vmatprep.mubr.f32.mxu0 0.0
    %156 = vmatmul.mubr.f32.gmra.mrb[0].mxu0 %v56
    %v157 = vpop.f32.mrb[0].mxu0
    %v158 = vadd.f32 %v40, %v157
    %v159 = vpop.f32.mrb[0].mxu0
    %160 = vmatprep.mubr.f32.mxu0 0.0
    %161 = vmatmul.mubr.f32.gmra.mrb[0].mxu0 %v59
    %v162 = vpop.f32.mrb[0].mxu0
    %v163 = vadd.f32 %v40, %v162
    %v164 = vpop.f32.mrb[0].mxu0
    %165 = vmatprep.mubr.f32.mxu0 0.0
    %166 = vmatmul.mubr.f32.gmra.mrb[0].mxu0 %v62
    %v167 = vpop.f32.mrb[0].mxu0
    %v168 = vadd.f32 %v40, %v167
    %v169 = vpop.f32.mrb[0].mxu0
    %170 = vmatprep.mubr.f32.mxu0 0.0
    %171 = vmatmul.mubr.f32.gmra.mrb[0].mxu0 %v65
    %v172 = vpop.f32.mrb[0].mxu0
    %v173 = vadd.f32 %v40, %v172
    %v174 = vpop.f32.mrb[0].mxu0
    %175 = vdwg.mxu0
    %vm176 = vcmask 64512
    %177 = vst.msk [vmem:[#allocation2] sm:$0xff] %vm176, %v138
    %178 = vst.msk [vmem:[#allocation2 + $0x8] sm:$0xff] %vm176, %v143
    %179 = vst.msk [vmem:[#allocation2 + $0x10] sm:$0xff] %vm176, %v148
    %180 = vst.msk [vmem:[#allocation2 + $0x18] sm:$0xff] %vm176, %v153
    %181 = vst.msk [vmem:[#allocation2 + $0x20] sm:$0xff] %vm176, %v158
    %182 = vst.msk [vmem:[#allocation2 + $0x28] sm:$0xff] %vm176, %v163
    %183 = vst.msk [vmem:[#allocation2 + $0x30] sm:$0xff] %vm176, %v168
    %184 = vst.msk [vmem:[#allocation2 + $0x38] sm:$0xff] %vm176, %v173
    %186 = vrot.lane.b32.xlu0 %v138, 120
    %v187 = vpop.permute.xlu0 %186
    %188 = vrot.lane.b32.xlu0 %v138, 112
    %v189 = vpop.permute.xlu0 %188
    %vm190 = vcmask 31744
    %v191 = vsel %vm190, %v187, 0
    %v193 = vsel %vm190, %v189, 0
    %195 = vmatprep.subr.mxu0 0.0
    %196 = vmatpush1.xpose.msra.mxu0 %v193
    %197 = vmatprep.subr.mxu0 0.0
    %198 = vmatpush1.xpose.msra.mxu0 0.0
    %199 = vmatprep.subr.mxu0 0.0
    %200 = vmatpush1.xpose.msra.mxu0 0.0
    %201 = vmatprep.subr.mxu0 0.0
    %202 = vmatpush1.xpose.msra.mxu0 0.0
    %203 = vmatprep.subr.mxu0 0.0
    %204 = vmatpush1.xpose.msra.mxu0 0.0
    %205 = vmatprep.subr.mxu0 0.0
    %206 = vmatpush1.xpose.msra.mxu0 0.0
    %207 = vmatprep.subr.mxu0 0.0
    %208 = vmatpush1.xpose.msra.mxu0 0.0
    %209 = vmatprep.subr.mxu0 0.0
    %210 = vmatpush1.xpose.msra.mxu0 0.0
    %211 = vmatprep.subr.mxu0 0.0
    %212 = vmatpush1.xpose.msra.mxu0 0.0
    %213 = vmatprep.subr.mxu0 0.0
    %214 = vmatpush1.xpose.msra.mxu0 0.0
    %215 = vmatprep.subr.mxu0 0.0
    %216 = vmatpush1.xpose.msra.mxu0 0.0
    %217 = vmatprep.subr.mxu0 0.0
    %218 = vmatpush1.xpose.msra.mxu0 0.0
    %219 = vmatprep.subr.mxu0 0.0
    %220 = vmatpush1.xpose.msra.mxu0 0.0
    %221 = vmatprep.subr.mxu0 0.0
    %222 = vmatpush1.xpose.msra.mxu0 0.0
    %223 = vmatprep.subr.mxu0 0.0
    %224 = vmatpush1.xpose.msra.mxu0 0.0
    %225 = vmatprep.subr.mxu0 0.0
    %226 = vmatpush1.xpose.msra.mxu0 0.0
    %227 = vmatprep.subr.mxu0 0.0
    %228 = vmatpush1.xpose.msra.mxu0 0.0
    %229 = vmatprep.subr.mxu0 0.0
    %230 = vmatpush1.xpose.msra.mxu0 0.0
    %231 = vmatprep.subr.mxu0 0.0
    %232 = vmatpush1.xpose.msra.mxu0 0.0
    %233 = vmatprep.subr.mxu0 0.0
    %234 = vmatpush1.xpose.msra.mxu0 0.0
    %235 = vmatprep.subr.mxu0 0.0
    %236 = vmatpush1.xpose.msra.mxu0 0.0
    %237 = vmatprep.subr.mxu0 0.0
    %238 = vmatpush1.xpose.msra.mxu0 0.0
    %239 = vmatprep.subr.mxu0 0.0
    %240 = vmatpush1.xpose.msra.mxu0 0.0
    %241 = vmatprep.subr.mxu0 0.0
    %242 = vmatpush1.xpose.msra.mxu0 0.0
    %243 = vmatprep.subr.mxu0 0.0
    %244 = vmatpush1.xpose.msra.mxu0 0.0
    %245 = vmatprep.subr.mxu0 0.0
    %246 = vmatpush1.xpose.msra.mxu0 0.0
    %247 = vmatprep.subr.mxu0 0.0
    %248 = vmatpush1.xpose.msra.mxu0 0.0
    %249 = vmatprep.subr.mxu0 0.0
    %250 = vmatpush1.xpose.msra.mxu0 0.0
    %251 = vmatprep.subr.mxu0 0.0
    %252 = vmatpush1.xpose.msra.mxu0 0.0
    %253 = vmatprep.subr.mxu0 0.0
    %254 = vmatpush1.xpose.msra.mxu0 0.0
    %255 = vmatprep.subr.mxu0 0.0
    %256 = vmatpush1.xpose.msra.mxu0 0.0
    %257 = vmatprep.subr.mxu0 0.0
    %258 = vmatpush1.xpose.msra.mxu0 0.0
    %259 = vmatprep.mubr.f32.mxu0 0.0
    %260 = vmatmul.mubr.f32.gmra.mrb[0].mxu0 %v191
    %v261 = vpop.f32.mrb[0].mxu0
    %v262 = vadd.f32 0.0, %v261
    %v263 = vpop.f32.mrb[0].mxu0
    %264 = vdwg.mxu0
    %266 = vrot.lane.b32.xlu0 %v143, 120
    %v267 = vpop.permute.xlu0 %266
    %268 = vrot.lane.b32.xlu0 %v143, 112
    %v269 = vpop.permute.xlu0 %268
    %v270 = vsel %vm190, %v267, 0
    %v272 = vsel %vm190, %v269, 0
    %274 = vmatprep.subr.mxu0 0.0
    %275 = vmatpush1.xpose.msra.mxu0 %v272
    %276 = vmatprep.subr.mxu0 0.0
    %277 = vmatpush1.xpose.msra.mxu0 0.0
    %278 = vmatprep.subr.mxu0 0.0
    %279 = vmatpush1.xpose.msra.mxu0 0.0
    %280 = vmatprep.subr.mxu0 0.0
    %281 = vmatpush1.xpose.msra.mxu0 0.0
    %282 = vmatprep.subr.mxu0 0.0
    %283 = vmatpush1.xpose.msra.mxu0 0.0
    %284 = vmatprep.subr.mxu0 0.0
    %285 = vmatpush1.xpose.msra.mxu0 0.0
    %286 = vmatprep.subr.mxu0 0.0
    %287 = vmatpush1.xpose.msra.mxu0 0.0
    %288 = vmatprep.subr.mxu0 0.0
    %289 = vmatpush1.xpose.msra.mxu0 0.0
    %290 = vmatprep.subr.mxu0 0.0
    %291 = vmatpush1.xpose.msra.mxu0 0.0
    %292 = vmatprep.subr.mxu0 0.0
    %293 = vmatpush1.xpose.msra.mxu0 0.0
    %294 = vmatprep.subr.mxu0 0.0
    %295 = vmatpush1.xpose.msra.mxu0 0.0
    %296 = vmatprep.subr.mxu0 0.0
    %297 = vmatpush1.xpose.msra.mxu0 0.0
    %298 = vmatprep.subr.mxu0 0.0
    %299 = vmatpush1.xpose.msra.mxu0 0.0
    %300 = vmatprep.subr.mxu0 0.0
    %301 = vmatpush1.xpose.msra.mxu0 0.0
    %302 = vmatprep.subr.mxu0 0.0
    %303 = vmatpush1.xpose.msra.mxu0 0.0
    %304 = vmatprep.subr.mxu0 0.0
    %305 = vmatpush1.xpose.msra.mxu0 0.0
    %306 = vmatprep.subr.mxu0 0.0
    %307 = vmatpush1.xpose.msra.mxu0 0.0
    %308 = vmatprep.subr.mxu0 0.0
    %309 = vmatpush1.xpose.msra.mxu0 0.0
    %310 = vmatprep.subr.mxu0 0.0
    %311 = vmatpush1.xpose.msra.mxu0 0.0
    %312 = vmatprep.subr.mxu0 0.0
    %313 = vmatpush1.xpose.msra.mxu0 0.0
    %314 = vmatprep.subr.mxu0 0.0
    %315 = vmatpush1.xpose.msra.mxu0 0.0
    %316 = vmatprep.subr.mxu0 0.0
    %317 = vmatpush1.xpose.msra.mxu0 0.0
    %318 = vmatprep.subr.mxu0 0.0
    %319 = vmatpush1.xpose.msra.mxu0 0.0
    %320 = vmatprep.subr.mxu0 0.0
    %321 = vmatpush1.xpose.msra.mxu0 0.0
    %322 = vmatprep.subr.mxu0 0.0
    %323 = vmatpush1.xpose.msra.mxu0 0.0
    %324 = vmatprep.subr.mxu0 0.0
    %325 = vmatpush1.xpose.msra.mxu0 0.0
    %326 = vmatprep.subr.mxu0 0.0
    %327 = vmatpush1.xpose.msra.mxu0 0.0
    %328 = vmatprep.subr.mxu0 0.0
    %329 = vmatpush1.xpose.msra.mxu0 0.0
    %330 = vmatprep.subr.mxu0 0.0
    %331 = vmatpush1.xpose.msra.mxu0 0.0
    %332 = vmatprep.subr.mxu0 0.0
    %333 = vmatpush1.xpose.msra.mxu0 0.0
    %334 = vmatprep.subr.mxu0 0.0
    %335 = vmatpush1.xpose.msra.mxu0 0.0
    %336 = vmatprep.subr.mxu0 0.0
    %337 = vmatpush1.xpose.msra.mxu0 0.0
    %338 = vmatprep.mubr.f32.mxu0 0.0
    %339 = vmatmul.mubr.f32.gmra.mrb[0].mxu0 %v270
    %v340 = vpop.f32.mrb[0].mxu0
    %v341 = vadd.f32 0.0, %v340
    %v342 = vpop.f32.mrb[0].mxu0
    %343 = vdwg.mxu0
    %345 = vrot.lane.b32.xlu0 %v148, 120
    %v346 = vpop.permute.xlu0 %345
    %347 = vrot.lane.b32.xlu0 %v148, 112
    %v348 = vpop.permute.xlu0 %347
    %v349 = vsel %vm190, %v346, 0
    %v351 = vsel %vm190, %v348, 0
    %353 = vmatprep.subr.mxu0 0.0
    %354 = vmatpush1.xpose.msra.mxu0 %v351
    %355 = vmatprep.subr.mxu0 0.0
    %356 = vmatpush1.xpose.msra.mxu0 0.0
    %357 = vmatprep.subr.mxu0 0.0
    %358 = vmatpush1.xpose.msra.mxu0 0.0
    %359 = vmatprep.subr.mxu0 0.0
    %360 = vmatpush1.xpose.msra.mxu0 0.0
    %361 = vmatprep.subr.mxu0 0.0
    %362 = vmatpush1.xpose.msra.mxu0 0.0
    %363 = vmatprep.subr.mxu0 0.0
    %364 = vmatpush1.xpose.msra.mxu0 0.0
    %365 = vmatprep.subr.mxu0 0.0
    %366 = vmatpush1.xpose.msra.mxu0 0.0
    %367 = vmatprep.subr.mxu0 0.0
    %368 = vmatpush1.xpose.msra.mxu0 0.0
    %369 = vmatprep.subr.mxu0 0.0
    %370 = vmatpush1.xpose.msra.mxu0 0.0
    %371 = vmatprep.subr.mxu0 0.0
    %372 = vmatpush1.xpose.msra.mxu0 0.0
    %373 = vmatprep.subr.mxu0 0.0
    %374 = vmatpush1.xpose.msra.mxu0 0.0
    %375 = vmatprep.subr.mxu0 0.0
    %376 = vmatpush1.xpose.msra.mxu0 0.0
    %377 = vmatprep.subr.mxu0 0.0
    %378 = vmatpush1.xpose.msra.mxu0 0.0
    %379 = vmatprep.subr.mxu0 0.0
    %380 = vmatpush1.xpose.msra.mxu0 0.0
    %381 = vmatprep.subr.mxu0 0.0
    %382 = vmatpush1.xpose.msra.mxu0 0.0
    %383 = vmatprep.subr.mxu0 0.0
    %384 = vmatpush1.xpose.msra.mxu0 0.0
    %385 = vmatprep.subr.mxu0 0.0
    %386 = vmatpush1.xpose.msra.mxu0 0.0
    %387 = vmatprep.subr.mxu0 0.0
    %388 = vmatpush1.xpose.msra.mxu0 0.0
    %389 = vmatprep.subr.mxu0 0.0
    %390 = vmatpush1.xpose.msra.mxu0 0.0
    %391 = vmatprep.subr.mxu0 0.0
    %392 = vmatpush1.xpose.msra.mxu0 0.0
    %393 = vmatprep.subr.mxu0 0.0
    %394 = vmatpush1.xpose.msra.mxu0 0.0
    %395 = vmatprep.subr.mxu0 0.0
    %396 = vmatpush1.xpose.msra.mxu0 0.0
    %397 = vmatprep.subr.mxu0 0.0
    %398 = vmatpush1.xpose.msra.mxu0 0.0
    %399 = vmatprep.subr.mxu0 0.0
    %400 = vmatpush1.xpose.msra.mxu0 0.0
    %401 = vmatprep.subr.mxu0 0.0
    %402 = vmatpush1.xpose.msra.mxu0 0.0
    %403 = vmatprep.subr.mxu0 0.0
    %404 = vmatpush1.xpose.msra.mxu0 0.0
    %405 = vmatprep.subr.mxu0 0.0
    %406 = vmatpush1.xpose.msra.mxu0 0.0
    %407 = vmatprep.subr.mxu0 0.0
    %408 = vmatpush1.xpose.msra.mxu0 0.0
    %409 = vmatprep.subr.mxu0 0.0
    %410 = vmatpush1.xpose.msra.mxu0 0.0
    %411 = vmatprep.subr.mxu0 0.0
    %412 = vmatpush1.xpose.msra.mxu0 0.0
    %413 = vmatprep.subr.mxu0 0.0
    %414 = vmatpush1.xpose.msra.mxu0 0.0
    %415 = vmatprep.subr.mxu0 0.0
    %416 = vmatpush1.xpose.msra.mxu0 0.0
    %417 = vmatprep.mubr.f32.mxu0 0.0
    %418 = vmatmul.mubr.f32.gmra.mrb[0].mxu0 %v349
    %v419 = vpop.f32.mrb[0].mxu0
    %v420 = vadd.f32 0.0, %v419
    %v421 = vpop.f32.mrb[0].mxu0
    %422 = vdwg.mxu0
    %424 = vrot.lane.b32.xlu0 %v153, 120
    %v425 = vpop.permute.xlu0 %424
    %426 = vrot.lane.b32.xlu0 %v153, 112
    %v427 = vpop.permute.xlu0 %426
    %v428 = vsel %vm190, %v425, 0
    %v430 = vsel %vm190, %v427, 0
    %432 = vmatprep.subr.mxu0 0.0
    %433 = vmatpush1.xpose.msra.mxu0 %v430
    %434 = vmatprep.subr.mxu0 0.0
    %435 = vmatpush1.xpose.msra.mxu0 0.0
    %436 = vmatprep.subr.mxu0 0.0
    %437 = vmatpush1.xpose.msra.mxu0 0.0
    %438 = vmatprep.subr.mxu0 0.0
    %439 = vmatpush1.xpose.msra.mxu0 0.0
    %440 = vmatprep.subr.mxu0 0.0
    %441 = vmatpush1.xpose.msra.mxu0 0.0
    %442 = vmatprep.subr.mxu0 0.0
    %443 = vmatpush1.xpose.msra.mxu0 0.0
    %444 = vmatprep.subr.mxu0 0.0
    %445 = vmatpush1.xpose.msra.mxu0 0.0
    %446 = vmatprep.subr.mxu0 0.0
    %447 = vmatpush1.xpose.msra.mxu0 0.0
    %448 = vmatprep.subr.mxu0 0.0
    %449 = vmatpush1.xpose.msra.mxu0 0.0
    %450 = vmatprep.subr.mxu0 0.0
    %451 = vmatpush1.xpose.msra.mxu0 0.0
    %452 = vmatprep.subr.mxu0 0.0
    %453 = vmatpush1.xpose.msra.mxu0 0.0
    %454 = vmatprep.subr.mxu0 0.0
    %455 = vmatpush1.xpose.msra.mxu0 0.0
    %456 = vmatprep.subr.mxu0 0.0
    %457 = vmatpush1.xpose.msra.mxu0 0.0
    %458 = vmatprep.subr.mxu0 0.0
    %459 = vmatpush1.xpose.msra.mxu0 0.0
    %460 = vmatprep.subr.mxu0 0.0
    %461 = vmatpush1.xpose.msra.mxu0 0.0
    %462 = vmatprep.subr.mxu0 0.0
    %463 = vmatpush1.xpose.msra.mxu0 0.0
    %464 = vmatprep.subr.mxu0 0.0
    %465 = vmatpush1.xpose.msra.mxu0 0.0
    %466 = vmatprep.subr.mxu0 0.0
    %467 = vmatpush1.xpose.msra.mxu0 0.0
    %468 = vmatprep.subr.mxu0 0.0
    %469 = vmatpush1.xpose.msra.mxu0 0.0
    %470 = vmatprep.subr.mxu0 0.0
    %471 = vmatpush1.xpose.msra.mxu0 0.0
    %472 = vmatprep.subr.mxu0 0.0
    %473 = vmatpush1.xpose.msra.mxu0 0.0
    %474 = vmatprep.subr.mxu0 0.0
    %475 = vmatpush1.xpose.msra.mxu0 0.0
    %476 = vmatprep.subr.mxu0 0.0
    %477 = vmatpush1.xpose.msra.mxu0 0.0
    %478 = vmatprep.subr.mxu0 0.0
    %479 = vmatpush1.xpose.msra.mxu0 0.0
    %480 = vmatprep.subr.mxu0 0.0
    %481 = vmatpush1.xpose.msra.mxu0 0.0
    %482 = vmatprep.subr.mxu0 0.0
    %483 = vmatpush1.xpose.msra.mxu0 0.0
    %484 = vmatprep.subr.mxu0 0.0
    %485 = vmatpush1.xpose.msra.mxu0 0.0
    %486 = vmatprep.subr.mxu0 0.0
    %487 = vmatpush1.xpose.msra.mxu0 0.0
    %488 = vmatprep.subr.mxu0 0.0
    %489 = vmatpush1.xpose.msra.mxu0 0.0
    %490 = vmatprep.subr.mxu0 0.0
    %491 = vmatpush1.xpose.msra.mxu0 0.0
    %492 = vmatprep.subr.mxu0 0.0
    %493 = vmatpush1.xpose.msra.mxu0 0.0
    %494 = vmatprep.subr.mxu0 0.0
    %495 = vmatpush1.xpose.msra.mxu0 0.0
    %496 = vmatprep.mubr.f32.mxu0 0.0
    %497 = vmatmul.mubr.f32.gmra.mrb[0].mxu0 %v428
    %v498 = vpop.f32.mrb[0].mxu0
    %v499 = vadd.f32 0.0, %v498
    %v500 = vpop.f32.mrb[0].mxu0
    %501 = vdwg.mxu0
    %503 = vrot.lane.b32.xlu0 %v158, 120
    %v504 = vpop.permute.xlu0 %503
    %505 = vrot.lane.b32.xlu0 %v158, 112
    %v506 = vpop.permute.xlu0 %505
    %v507 = vsel %vm190, %v504, 0
    %v509 = vsel %vm190, %v506, 0
    %511 = vmatprep.subr.mxu0 0.0
    %512 = vmatpush1.xpose.msra.mxu0 %v509
    %513 = vmatprep.subr.mxu0 0.0
    %514 = vmatpush1.xpose.msra.mxu0 0.0
    %515 = vmatprep.subr.mxu0 0.0
    %516 = vmatpush1.xpose.msra.mxu0 0.0
    %517 = vmatprep.subr.mxu0 0.0
    %518 = vmatpush1.xpose.msra.mxu0 0.0
    %519 = vmatprep.subr.mxu0 0.0
    %520 = vmatpush1.xpose.msra.mxu0 0.0
    %521 = vmatprep.subr.mxu0 0.0
    %522 = vmatpush1.xpose.msra.mxu0 0.0
    %523 = vmatprep.subr.mxu0 0.0
    %524 = vmatpush1.xpose.msra.mxu0 0.0
    %525 = vmatprep.subr.mxu0 0.0
    %526 = vmatpush1.xpose.msra.mxu0 0.0
    %527 = vmatprep.subr.mxu0 0.0
    %528 = vmatpush1.xpose.msra.mxu0 0.0
    %529 = vmatprep.subr.mxu0 0.0
    %530 = vmatpush1.xpose.msra.mxu0 0.0
    %531 = vmatprep.subr.mxu0 0.0
    %532 = vmatpush1.xpose.msra.mxu0 0.0
    %533 = vmatprep.subr.mxu0 0.0
    %534 = vmatpush1.xpose.msra.mxu0 0.0
    %535 = vmatprep.subr.mxu0 0.0
    %536 = vmatpush1.xpose.msra.mxu0 0.0
    %537 = vmatprep.subr.mxu0 0.0
    %538 = vmatpush1.xpose.msra.mxu0 0.0
    %539 = vmatprep.subr.mxu0 0.0
    %540 = vmatpush1.xpose.msra.mxu0 0.0
    %541 = vmatprep.subr.mxu0 0.0
    %542 = vmatpush1.xpose.msra.mxu0 0.0
    %543 = vmatprep.subr.mxu0 0.0
    %544 = vmatpush1.xpose.msra.mxu0 0.0
    %545 = vmatprep.subr.mxu0 0.0
    %546 = vmatpush1.xpose.msra.mxu0 0.0
    %547 = vmatprep.subr.mxu0 0.0
    %548 = vmatpush1.xpose.msra.mxu0 0.0
    %549 = vmatprep.subr.mxu0 0.0
    %550 = vmatpush1.xpose.msra.mxu0 0.0
    %551 = vmatprep.subr.mxu0 0.0
    %552 = vmatpush1.xpose.msra.mxu0 0.0
    %553 = vmatprep.subr.mxu0 0.0
    %554 = vmatpush1.xpose.msra.mxu0 0.0
    %555 = vmatprep.subr.mxu0 0.0
    %556 = vmatpush1.xpose.msra.mxu0 0.0
    %557 = vmatprep.subr.mxu0 0.0
    %558 = vmatpush1.xpose.msra.mxu0 0.0
    %559 = vmatprep.subr.mxu0 0.0
    %560 = vmatpush1.xpose.msra.mxu0 0.0
    %561 = vmatprep.subr.mxu0 0.0
    %562 = vmatpush1.xpose.msra.mxu0 0.0
    %563 = vmatprep.subr.mxu0 0.0
    %564 = vmatpush1.xpose.msra.mxu0 0.0
    %565 = vmatprep.subr.mxu0 0.0
    %566 = vmatpush1.xpose.msra.mxu0 0.0
    %567 = vmatprep.subr.mxu0 0.0
    %568 = vmatpush1.xpose.msra.mxu0 0.0
    %569 = vmatprep.subr.mxu0 0.0
    %570 = vmatpush1.xpose.msra.mxu0 0.0
    %571 = vmatprep.subr.mxu0 0.0
    %572 = vmatpush1.xpose.msra.mxu0 0.0
    %573 = vmatprep.subr.mxu0 0.0
    %574 = vmatpush1.xpose.msra.mxu0 0.0
    %575 = vmatprep.mubr.f32.mxu0 0.0
    %576 = vmatmul.mubr.f32.gmra.mrb[0].mxu0 %v507
    %v577 = vpop.f32.mrb[0].mxu0
    %v578 = vadd.f32 0.0, %v577
    %v579 = vpop.f32.mrb[0].mxu0
    %580 = vdwg.mxu0
    %582 = vrot.lane.b32.xlu0 %v163, 120
    %v583 = vpop.permute.xlu0 %582
    %584 = vrot.lane.b32.xlu0 %v163, 112
    %v585 = vpop.permute.xlu0 %584
    %v586 = vsel %vm190, %v583, 0
    %v588 = vsel %vm190, %v585, 0
    %590 = vmatprep.subr.mxu0 0.0
    %591 = vmatpush1.xpose.msra.mxu0 %v588
    %592 = vmatprep.subr.mxu0 0.0
    %593 = vmatpush1.xpose.msra.mxu0 0.0
    %594 = vmatprep.subr.mxu0 0.0
    %595 = vmatpush1.xpose.msra.mxu0 0.0
    %596 = vmatprep.subr.mxu0 0.0
    %597 = vmatpush1.xpose.msra.mxu0 0.0
    %598 = vmatprep.subr.mxu0 0.0
    %599 = vmatpush1.xpose.msra.mxu0 0.0
    %600 = vmatprep.subr.mxu0 0.0
    %601 = vmatpush1.xpose.msra.mxu0 0.0
    %602 = vmatprep.subr.mxu0 0.0
    %603 = vmatpush1.xpose.msra.mxu0 0.0
    %604 = vmatprep.subr.mxu0 0.0
    %605 = vmatpush1.xpose.msra.mxu0 0.0
    %606 = vmatprep.subr.mxu0 0.0
    %607 = vmatpush1.xpose.msra.mxu0 0.0
    %608 = vmatprep.subr.mxu0 0.0
    %609 = vmatpush1.xpose.msra.mxu0 0.0
    %610 = vmatprep.subr.mxu0 0.0
    %611 = vmatpush1.xpose.msra.mxu0 0.0
    %612 = vmatprep.subr.mxu0 0.0
    %613 = vmatpush1.xpose.msra.mxu0 0.0
    %614 = vmatprep.subr.mxu0 0.0
    %615 = vmatpush1.xpose.msra.mxu0 0.0
    %616 = vmatprep.subr.mxu0 0.0
    %617 = vmatpush1.xpose.msra.mxu0 0.0
    %618 = vmatprep.subr.mxu0 0.0
    %619 = vmatpush1.xpose.msra.mxu0 0.0
    %620 = vmatprep.subr.mxu0 0.0
    %621 = vmatpush1.xpose.msra.mxu0 0.0
    %622 = vmatprep.subr.mxu0 0.0
    %623 = vmatpush1.xpose.msra.mxu0 0.0
    %624 = vmatprep.subr.mxu0 0.0
    %625 = vmatpush1.xpose.msra.mxu0 0.0
    %626 = vmatprep.subr.mxu0 0.0
    %627 = vmatpush1.xpose.msra.mxu0 0.0
    %628 = vmatprep.subr.mxu0 0.0
    %629 = vmatpush1.xpose.msra.mxu0 0.0
    %630 = vmatprep.subr.mxu0 0.0
    %631 = vmatpush1.xpose.msra.mxu0 0.0
    %632 = vmatprep.subr.mxu0 0.0
    %633 = vmatpush1.xpose.msra.mxu0 0.0
    %634 = vmatprep.subr.mxu0 0.0
    %635 = vmatpush1.xpose.msra.mxu0 0.0
    %636 = vmatprep.subr.mxu0 0.0
    %637 = vmatpush1.xpose.msra.mxu0 0.0
    %638 = vmatprep.subr.mxu0 0.0
    %639 = vmatpush1.xpose.msra.mxu0 0.0
    %640 = vmatprep.subr.mxu0 0.0
    %641 = vmatpush1.xpose.msra.mxu0 0.0
    %642 = vmatprep.subr.mxu0 0.0
    %643 = vmatpush1.xpose.msra.mxu0 0.0
    %644 = vmatprep.subr.mxu0 0.0
    %645 = vmatpush1.xpose.msra.mxu0 0.0
    %646 = vmatprep.subr.mxu0 0.0
    %647 = vmatpush1.xpose.msra.mxu0 0.0
    %648 = vmatprep.subr.mxu0 0.0
    %649 = vmatpush1.xpose.msra.mxu0 0.0
    %650 = vmatprep.subr.mxu0 0.0
    %651 = vmatpush1.xpose.msra.mxu0 0.0
    %652 = vmatprep.subr.mxu0 0.0
    %653 = vmatpush1.xpose.msra.mxu0 0.0
    %654 = vmatprep.mubr.f32.mxu0 0.0
    %655 = vmatmul.mubr.f32.gmra.mrb[0].mxu0 %v586
    %v656 = vpop.f32.mrb[0].mxu0
    %v657 = vadd.f32 0.0, %v656
    %v658 = vpop.f32.mrb[0].mxu0
    %659 = vdwg.mxu0
    %661 = vrot.lane.b32.xlu0 %v168, 120
    %v662 = vpop.permute.xlu0 %661
    %663 = vrot.lane.b32.xlu0 %v168, 112
    %v664 = vpop.permute.xlu0 %663
    %v665 = vsel %vm190, %v662, 0
    %v667 = vsel %vm190, %v664, 0
    %669 = vmatprep.subr.mxu0 0.0
    %670 = vmatpush1.xpose.msra.mxu0 %v667
    %671 = vmatprep.subr.mxu0 0.0
    %672 = vmatpush1.xpose.msra.mxu0 0.0
    %673 = vmatprep.subr.mxu0 0.0
    %674 = vmatpush1.xpose.msra.mxu0 0.0
    %675 = vmatprep.subr.mxu0 0.0
    %676 = vmatpush1.xpose.msra.mxu0 0.0
    %677 = vmatprep.subr.mxu0 0.0
    %678 = vmatpush1.xpose.msra.mxu0 0.0
    %679 = vmatprep.subr.mxu0 0.0
    %680 = vmatpush1.xpose.msra.mxu0 0.0
    %681 = vmatprep.subr.mxu0 0.0
    %682 = vmatpush1.xpose.msra.mxu0 0.0
    %683 = vmatprep.subr.mxu0 0.0
    %684 = vmatpush1.xpose.msra.mxu0 0.0
    %685 = vmatprep.subr.mxu0 0.0
    %686 = vmatpush1.xpose.msra.mxu0 0.0
    %687 = vmatprep.subr.mxu0 0.0
    %688 = vmatpush1.xpose.msra.mxu0 0.0
    %689 = vmatprep.subr.mxu0 0.0
    %690 = vmatpush1.xpose.msra.mxu0 0.0
    %691 = vmatprep.subr.mxu0 0.0
    %692 = vmatpush1.xpose.msra.mxu0 0.0
    %693 = vmatprep.subr.mxu0 0.0
    %694 = vmatpush1.xpose.msra.mxu0 0.0
    %695 = vmatprep.subr.mxu0 0.0
    %696 = vmatpush1.xpose.msra.mxu0 0.0
    %697 = vmatprep.subr.mxu0 0.0
    %698 = vmatpush1.xpose.msra.mxu0 0.0
    %699 = vmatprep.subr.mxu0 0.0
    %700 = vmatpush1.xpose.msra.mxu0 0.0
    %701 = vmatprep.subr.mxu0 0.0
    %702 = vmatpush1.xpose.msra.mxu0 0.0
    %703 = vmatprep.subr.mxu0 0.0
    %704 = vmatpush1.xpose.msra.mxu0 0.0
    %705 = vmatprep.subr.mxu0 0.0
    %706 = vmatpush1.xpose.msra.mxu0 0.0
    %707 = vmatprep.subr.mxu0 0.0
    %708 = vmatpush1.xpose.msra.mxu0 0.0
    %709 = vmatprep.subr.mxu0 0.0
    %710 = vmatpush1.xpose.msra.mxu0 0.0
    %711 = vmatprep.subr.mxu0 0.0
    %712 = vmatpush1.xpose.msra.mxu0 0.0
    %713 = vmatprep.subr.mxu0 0.0
    %714 = vmatpush1.xpose.msra.mxu0 0.0
    %715 = vmatprep.subr.mxu0 0.0
    %716 = vmatpush1.xpose.msra.mxu0 0.0
    %717 = vmatprep.subr.mxu0 0.0
    %718 = vmatpush1.xpose.msra.mxu0 0.0
    %719 = vmatprep.subr.mxu0 0.0
    %720 = vmatpush1.xpose.msra.mxu0 0.0
    %721 = vmatprep.subr.mxu0 0.0
    %722 = vmatpush1.xpose.msra.mxu0 0.0
    %723 = vmatprep.subr.mxu0 0.0
    %724 = vmatpush1.xpose.msra.mxu0 0.0
    %725 = vmatprep.subr.mxu0 0.0
    %726 = vmatpush1.xpose.msra.mxu0 0.0
    %727 = vmatprep.subr.mxu0 0.0
    %728 = vmatpush1.xpose.msra.mxu0 0.0
    %729 = vmatprep.subr.mxu0 0.0
    %730 = vmatpush1.xpose.msra.mxu0 0.0
    %731 = vmatprep.subr.mxu0 0.0
    %732 = vmatpush1.xpose.msra.mxu0 0.0
    %733 = vmatprep.mubr.f32.mxu0 0.0
    %734 = vmatmul.mubr.f32.gmra.mrb[0].mxu0 %v665
    %v735 = vpop.f32.mrb[0].mxu0
    %v736 = vadd.f32 0.0, %v735
    %v737 = vpop.f32.mrb[0].mxu0
    %738 = vdwg.mxu0
    %740 = vrot.lane.b32.xlu0 %v173, 120
    %v741 = vpop.permute.xlu0 %740
    %742 = vrot.lane.b32.xlu0 %v173, 112
    %v743 = vpop.permute.xlu0 %742
    %v744 = vsel %vm190, %v741, 0
    %v746 = vsel %vm190, %v743, 0
    %748 = vmatprep.subr.mxu0 0.0
    %749 = vmatpush1.xpose.msra.mxu0 %v746
    %750 = vmatprep.subr.mxu0 0.0
    %751 = vmatpush1.xpose.msra.mxu0 0.0
    %752 = vmatprep.subr.mxu0 0.0
    %753 = vmatpush1.xpose.msra.mxu0 0.0
    %754 = vmatprep.subr.mxu0 0.0
    %755 = vmatpush1.xpose.msra.mxu0 0.0
    %756 = vmatprep.subr.mxu0 0.0
    %757 = vmatpush1.xpose.msra.mxu0 0.0
    %758 = vmatprep.subr.mxu0 0.0
    %759 = vmatpush1.xpose.msra.mxu0 0.0
    %760 = vmatprep.subr.mxu0 0.0
    %761 = vmatpush1.xpose.msra.mxu0 0.0
    %762 = vmatprep.subr.mxu0 0.0
    %763 = vmatpush1.xpose.msra.mxu0 0.0
    %764 = vmatprep.subr.mxu0 0.0
    %765 = vmatpush1.xpose.msra.mxu0 0.0
    %766 = vmatprep.subr.mxu0 0.0
    %767 = vmatpush1.xpose.msra.mxu0 0.0
    %768 = vmatprep.subr.mxu0 0.0
    %769 = vmatpush1.xpose.msra.mxu0 0.0
    %770 = vmatprep.subr.mxu0 0.0
    %771 = vmatpush1.xpose.msra.mxu0 0.0
    %772 = vmatprep.subr.mxu0 0.0
    %773 = vmatpush1.xpose.msra.mxu0 0.0
    %774 = vmatprep.subr.mxu0 0.0
    %775 = vmatpush1.xpose.msra.mxu0 0.0
    %776 = vmatprep.subr.mxu0 0.0
    %777 = vmatpush1.xpose.msra.mxu0 0.0
    %778 = vmatprep.subr.mxu0 0.0
    %779 = vmatpush1.xpose.msra.mxu0 0.0
    %780 = vmatprep.subr.mxu0 0.0
    %781 = vmatpush1.xpose.msra.mxu0 0.0
    %782 = vmatprep.subr.mxu0 0.0
    %783 = vmatpush1.xpose.msra.mxu0 0.0
    %784 = vmatprep.subr.mxu0 0.0
    %785 = vmatpush1.xpose.msra.mxu0 0.0
    %786 = vmatprep.subr.mxu0 0.0
    %787 = vmatpush1.xpose.msra.mxu0 0.0
    %788 = vmatprep.subr.mxu0 0.0
    %789 = vmatpush1.xpose.msra.mxu0 0.0
    %790 = vmatprep.subr.mxu0 0.0
    %791 = vmatpush1.xpose.msra.mxu0 0.0
    %792 = vmatprep.subr.mxu0 0.0
    %793 = vmatpush1.xpose.msra.mxu0 0.0
    %794 = vmatprep.subr.mxu0 0.0
    %795 = vmatpush1.xpose.msra.mxu0 0.0
    %796 = vmatprep.subr.mxu0 0.0
    %797 = vmatpush1.xpose.msra.mxu0 0.0
    %798 = vmatprep.subr.mxu0 0.0
    %799 = vmatpush1.xpose.msra.mxu0 0.0
    %800 = vmatprep.subr.mxu0 0.0
    %801 = vmatpush1.xpose.msra.mxu0 0.0
    %802 = vmatprep.subr.mxu0 0.0
    %803 = vmatpush1.xpose.msra.mxu0 0.0
    %804 = vmatprep.subr.mxu0 0.0
    %805 = vmatpush1.xpose.msra.mxu0 0.0
    %806 = vmatprep.subr.mxu0 0.0
    %807 = vmatpush1.xpose.msra.mxu0 0.0
    %808 = vmatprep.subr.mxu0 0.0
    %809 = vmatpush1.xpose.msra.mxu0 0.0
    %810 = vmatprep.subr.mxu0 0.0
    %811 = vmatpush1.xpose.msra.mxu0 0.0
    %812 = vmatprep.mubr.f32.mxu0 0.0
    %813 = vmatmul.mubr.f32.gmra.mrb[0].mxu0 %v744
    %v814 = vpop.f32.mrb[0].mxu0
    %v815 = vadd.f32 0.0, %v814
    %v816 = vpop.f32.mrb[0].mxu0
    %817 = vdwg.mxu0
    %v818 = vsel %vm176, %v262, -inf
    %819 = vmax.xlane.f32.xlu0 %v818
    %v820 = vpop.xlane.xlu0 %819
    %v821 = vsel %vm176, %v341, -inf
    %822 = vmax.xlane.f32.xlu0 %v821
    %v823 = vpop.xlane.xlu0 %822
    %v824 = vsel %vm176, %v420, -inf
    %825 = vmax.xlane.f32.xlu0 %v824
    %v826 = vpop.xlane.xlu0 %825
    %v827 = vsel %vm176, %v499, -inf
    %828 = vmax.xlane.f32.xlu0 %v827
    %v829 = vpop.xlane.xlu0 %828
    %v830 = vsel %vm176, %v578, -inf
    %831 = vmax.xlane.f32.xlu0 %v830
    %v832 = vpop.xlane.xlu0 %831
    %v833 = vsel %vm176, %v657, -inf
    %834 = vmax.xlane.f32.xlu0 %v833
    %v835 = vpop.xlane.xlu0 %834
    %v836 = vsel %vm176, %v736, -inf
    %837 = vmax.xlane.f32.xlu0 %v836
    %v838 = vpop.xlane.xlu0 %837
    %v839 = vsel %vm176, %v815, -inf
    %840 = vmax.xlane.f32.xlu0 %v839
    %v841 = vpop.xlane.xlu0 %840
    %v842 = vsub.f32 %v262, %v820
    %v843 = vsub.f32 %v341, %v823
    %v844 = vsub.f32 %v420, %v826
    %v845 = vsub.f32 %v499, %v829
    %v846 = vsub.f32 %v578, %v832
    %v847 = vsub.f32 %v657, %v835
    %v848 = vsub.f32 %v736, %v838
    %v849 = vsub.f32 %v815, %v841
    %v850 = vmul.f32 %v842, 1.442695
    %v851 = vpow.pop %v850
    %v852 = vmul.f32 %v843, 1.442695
    %v853 = vpow.pop %v852
    %v854 = vmul.f32 %v844, 1.442695
    %v855 = vpow.pop %v854
    %v856 = vmul.f32 %v845, 1.442695
    %v857 = vpow.pop %v856
    %v858 = vmul.f32 %v846, 1.442695
    %v859 = vpow.pop %v858
    %v860 = vmul.f32 %v847, 1.442695
    %v861 = vpow.pop %v860
    %v862 = vmul.f32 %v848, 1.442695
    %v863 = vpow.pop %v862
    %v864 = vmul.f32 %v849, 1.442695
    %v865 = vpow.pop %v864
    %v866 = vsel %vm176, %v851, 0.0
    %867 = vadd.xlane.f32.xlu0 %v866
    %v868 = vpop.xlane.xlu0 %867
    %v869 = vsel %vm176, %v853, 0.0
    %870 = vadd.xlane.f32.xlu0 %v869
    %v871 = vpop.xlane.xlu0 %870
    %v872 = vsel %vm176, %v855, 0.0
    %873 = vadd.xlane.f32.xlu0 %v872
    %v874 = vpop.xlane.xlu0 %873
    %v875 = vsel %vm176, %v857, 0.0
    %876 = vadd.xlane.f32.xlu0 %v875
    %v877 = vpop.xlane.xlu0 %876
    %v878 = vsel %vm176, %v859, 0.0
    %879 = vadd.xlane.f32.xlu0 %v878
    %v880 = vpop.xlane.xlu0 %879
    %v881 = vsel %vm176, %v861, 0.0
    %882 = vadd.xlane.f32.xlu0 %v881
    %v883 = vpop.xlane.xlu0 %882
    %v884 = vsel %vm176, %v863, 0.0
    %885 = vadd.xlane.f32.xlu0 %v884
    %v886 = vpop.xlane.xlu0 %885
    %v887 = vsel %vm176, %v865, 0.0
    %888 = vadd.xlane.f32.xlu0 %v887
    %v889 = vpop.xlane.xlu0 %888
    %v890 = vrcp.pop %v868
    %v891 = vmul.f32 %v851, %v890
    %v892 = vrcp.pop %v871
    %v893 = vmul.f32 %v853, %v892
    %v894 = vrcp.pop %v874
    %v895 = vmul.f32 %v855, %v894
    %v896 = vrcp.pop %v877
    %v897 = vmul.f32 %v857, %v896
    %v898 = vrcp.pop %v880
    %v899 = vmul.f32 %v859, %v898
    %v900 = vrcp.pop %v883
    %v901 = vmul.f32 %v861, %v900
    %v902 = vrcp.pop %v886
    %v903 = vmul.f32 %v863, %v902
    %v904 = vrcp.pop %v889
    %v905 = vmul.f32 %v865, %v904
    %906 = vrot.lane.b32.xlu0 %v138, 104
    %v907 = vpop.permute.xlu0 %906
    %v910 = vsel %vm176, %v891, 0
    %912 = vmatprep.subr.mxu0 0.0
    %913 = vmatpush1.msra.mxu0 %v907
    %914 = vmatprep.subr.mxu0 0.0
    %915 = vmatpush1.msra.mxu0 0.0
    %916 = vmatprep.subr.mxu0 0.0
    %917 = vmatpush1.msra.mxu0 0.0
    %918 = vmatprep.subr.mxu0 0.0
    %919 = vmatpush1.msra.mxu0 0.0
    %920 = vmatprep.subr.mxu0 0.0
    %921 = vmatpush1.msra.mxu0 0.0
    %922 = vmatprep.subr.mxu0 0.0
    %923 = vmatpush1.msra.mxu0 0.0
    %924 = vmatprep.subr.mxu0 0.0
    %925 = vmatpush1.msra.mxu0 0.0
    %926 = vmatprep.subr.mxu0 0.0
    %927 = vmatpush1.msra.mxu0 0.0
    %928 = vmatprep.subr.mxu0 0.0
    %929 = vmatpush1.msra.mxu0 0.0
    %930 = vmatprep.subr.mxu0 0.0
    %931 = vmatpush1.msra.mxu0 0.0
    %932 = vmatprep.subr.mxu0 0.0
    %933 = vmatpush1.msra.mxu0 0.0
    %934 = vmatprep.subr.mxu0 0.0
    %935 = vmatpush1.msra.mxu0 0.0
    %936 = vmatprep.subr.mxu0 0.0
    %937 = vmatpush1.msra.mxu0 0.0
    %938 = vmatprep.subr.mxu0 0.0
    %939 = vmatpush1.msra.mxu0 0.0
    %940 = vmatprep.subr.mxu0 0.0
    %941 = vmatpush1.msra.mxu0 0.0
    %942 = vmatprep.subr.mxu0 0.0
    %943 = vmatpush1.msra.mxu0 0.0
    %944 = vmatprep.subr.mxu0 0.0
    %945 = vmatpush1.msra.mxu0 0.0
    %946 = vmatprep.subr.mxu0 0.0
    %947 = vmatpush1.msra.mxu0 0.0
    %948 = vmatprep.subr.mxu0 0.0
    %949 = vmatpush1.msra.mxu0 0.0
    %950 = vmatprep.subr.mxu0 0.0
    %951 = vmatpush1.msra.mxu0 0.0
    %952 = vmatprep.subr.mxu0 0.0
    %953 = vmatpush1.msra.mxu0 0.0
    %954 = vmatprep.subr.mxu0 0.0
    %955 = vmatpush1.msra.mxu0 0.0
    %956 = vmatprep.subr.mxu0 0.0
    %957 = vmatpush1.msra.mxu0 0.0
    %958 = vmatprep.subr.mxu0 0.0
    %959 = vmatpush1.msra.mxu0 0.0
    %960 = vmatprep.subr.mxu0 0.0
    %961 = vmatpush1.msra.mxu0 0.0
    %962 = vmatprep.subr.mxu0 0.0
    %963 = vmatpush1.msra.mxu0 0.0
    %964 = vmatprep.subr.mxu0 0.0
    %965 = vmatpush1.msra.mxu0 0.0
    %966 = vmatprep.subr.mxu0 0.0
    %967 = vmatpush1.msra.mxu0 0.0
    %968 = vmatprep.subr.mxu0 0.0
    %969 = vmatpush1.msra.mxu0 0.0
    %970 = vmatprep.subr.mxu0 0.0
    %971 = vmatpush1.msra.mxu0 0.0
    %972 = vmatprep.subr.mxu0 0.0
    %973 = vmatpush1.msra.mxu0 0.0
    %974 = vmatprep.subr.mxu0 0.0
    %975 = vmatpush1.msra.mxu0 0.0
    %976 = vmatprep.mubr.f32.mxu0 0.0
    %977 = vmatmul.mubr.f32.gmra.mrb[0].mxu0 %v910
    %v978 = vpop.f32.mrb[0].mxu0
    %v979 = vadd.f32 0.0, %v978
    %v980 = vpop.f32.mrb[0].mxu0
    %981 = vdwg.mxu0
    %982 = vrot.lane.b32.xlu0 %v143, 104
    %v983 = vpop.permute.xlu0 %982
    %v986 = vsel %vm176, %v893, 0
    %988 = vmatprep.subr.mxu0 0.0
    %989 = vmatpush1.msra.mxu0 %v983
    %990 = vmatprep.subr.mxu0 0.0
    %991 = vmatpush1.msra.mxu0 0.0
    %992 = vmatprep.subr.mxu0 0.0
    %993 = vmatpush1.msra.mxu0 0.0
    %994 = vmatprep.subr.mxu0 0.0
    %995 = vmatpush1.msra.mxu0 0.0
    %996 = vmatprep.subr.mxu0 0.0
    %997 = vmatpush1.msra.mxu0 0.0
    %998 = vmatprep.subr.mxu0 0.0
    %999 = vmatpush1.msra.mxu0 0.0
    %1000 = vmatprep.subr.mxu0 0.0
    %1001 = vmatpush1.msra.mxu0 0.0
    %1002 = vmatprep.subr.mxu0 0.0
    %1003 = vmatpush1.msra.mxu0 0.0
    %1004 = vmatprep.subr.mxu0 0.0
    %1005 = vmatpush1.msra.mxu0 0.0
    %1006 = vmatprep.subr.mxu0 0.0
    %1007 = vmatpush1.msra.mxu0 0.0
    %1008 = vmatprep.subr.mxu0 0.0
    %1009 = vmatpush1.msra.mxu0 0.0
    %1010 = vmatprep.subr.mxu0 0.0
    %1011 = vmatpush1.msra.mxu0 0.0
    %1012 = vmatprep.subr.mxu0 0.0
    %1013 = vmatpush1.msra.mxu0 0.0
    %1014 = vmatprep.subr.mxu0 0.0
    %1015 = vmatpush1.msra.mxu0 0.0
    %1016 = vmatprep.subr.mxu0 0.0
    %1017 = vmatpush1.msra.mxu0 0.0
    %1018 = vmatprep.subr.mxu0 0.0
    %1019 = vmatpush1.msra.mxu0 0.0
    %1020 = vmatprep.subr.mxu0 0.0
    %1021 = vmatpush1.msra.mxu0 0.0
    %1022 = vmatprep.subr.mxu0 0.0
    %1023 = vmatpush1.msra.mxu0 0.0
    %1024 = vmatprep.subr.mxu0 0.0
    %1025 = vmatpush1.msra.mxu0 0.0
    %1026 = vmatprep.subr.mxu0 0.0
    %1027 = vmatpush1.msra.mxu0 0.0
    %1028 = vmatprep.subr.mxu0 0.0
    %1029 = vmatpush1.msra.mxu0 0.0
    %1030 = vmatprep.subr.mxu0 0.0
    %1031 = vmatpush1.msra.mxu0 0.0
    %1032 = vmatprep.subr.mxu0 0.0
    %1033 = vmatpush1.msra.mxu0 0.0
    %1034 = vmatprep.subr.mxu0 0.0
    %1035 = vmatpush1.msra.mxu0 0.0
    %1036 = vmatprep.subr.mxu0 0.0
    %1037 = vmatpush1.msra.mxu0 0.0
    %1038 = vmatprep.subr.mxu0 0.0
    %1039 = vmatpush1.msra.mxu0 0.0
    %1040 = vmatprep.subr.mxu0 0.0
    %1041 = vmatpush1.msra.mxu0 0.0
    %1042 = vmatprep.subr.mxu0 0.0
    %1043 = vmatpush1.msra.mxu0 0.0
    %1044 = vmatprep.subr.mxu0 0.0
    %1045 = vmatpush1.msra.mxu0 0.0
    %1046 = vmatprep.subr.mxu0 0.0
    %1047 = vmatpush1.msra.mxu0 0.0
    %1048 = vmatprep.subr.mxu0 0.0
    %1049 = vmatpush1.msra.mxu0 0.0
    %1050 = vmatprep.subr.mxu0 0.0
    %1051 = vmatpush1.msra.mxu0 0.0
    %1052 = vmatprep.mubr.f32.mxu0 0.0
    %1053 = vmatmul.mubr.f32.gmra.mrb[0].mxu0 %v986
    %v1054 = vpop.f32.mrb[0].mxu0
    %v1055 = vadd.f32 0.0, %v1054
    %v1056 = vpop.f32.mrb[0].mxu0
    %1057 = vdwg.mxu0
    %1058 = vrot.lane.b32.xlu0 %v148, 104
    %v1059 = vpop.permute.xlu0 %1058
    %v1062 = vsel %vm176, %v895, 0
    %1064 = vmatprep.subr.mxu0 0.0
    %1065 = vmatpush1.msra.mxu0 %v1059
    %1066 = vmatprep.subr.mxu0 0.0
    %1067 = vmatpush1.msra.mxu0 0.0
    %1068 = vmatprep.subr.mxu0 0.0
    %1069 = vmatpush1.msra.mxu0 0.0
    %1070 = vmatprep.subr.mxu0 0.0
    %1071 = vmatpush1.msra.mxu0 0.0
    %1072 = vmatprep.subr.mxu0 0.0
    %1073 = vmatpush1.msra.mxu0 0.0
    %1074 = vmatprep.subr.mxu0 0.0
    %1075 = vmatpush1.msra.mxu0 0.0
    %1076 = vmatprep.subr.mxu0 0.0
    %1077 = vmatpush1.msra.mxu0 0.0
    %1078 = vmatprep.subr.mxu0 0.0
    %1079 = vmatpush1.msra.mxu0 0.0
    %1080 = vmatprep.subr.mxu0 0.0
    %1081 = vmatpush1.msra.mxu0 0.0
    %1082 = vmatprep.subr.mxu0 0.0
    %1083 = vmatpush1.msra.mxu0 0.0
    %1084 = vmatprep.subr.mxu0 0.0
    %1085 = vmatpush1.msra.mxu0 0.0
    %1086 = vmatprep.subr.mxu0 0.0
    %1087 = vmatpush1.msra.mxu0 0.0
    %1088 = vmatprep.subr.mxu0 0.0
    %1089 = vmatpush1.msra.mxu0 0.0
    %1090 = vmatprep.subr.mxu0 0.0
    %1091 = vmatpush1.msra.mxu0 0.0
    %1092 = vmatprep.subr.mxu0 0.0
    %1093 = vmatpush1.msra.mxu0 0.0
    %1094 = vmatprep.subr.mxu0 0.0
    %1095 = vmatpush1.msra.mxu0 0.0
    %1096 = vmatprep.subr.mxu0 0.0
    %1097 = vmatpush1.msra.mxu0 0.0
    %1098 = vmatprep.subr.mxu0 0.0
    %1099 = vmatpush1.msra.mxu0 0.0
    %1100 = vmatprep.subr.mxu0 0.0
    %1101 = vmatpush1.msra.mxu0 0.0
    %1102 = vmatprep.subr.mxu0 0.0
    %1103 = vmatpush1.msra.mxu0 0.0
    %1104 = vmatprep.subr.mxu0 0.0
    %1105 = vmatpush1.msra.mxu0 0.0
    %1106 = vmatprep.subr.mxu0 0.0
    %1107 = vmatpush1.msra.mxu0 0.0
    %1108 = vmatprep.subr.mxu0 0.0
    %1109 = vmatpush1.msra.mxu0 0.0
    %1110 = vmatprep.subr.mxu0 0.0
    %1111 = vmatpush1.msra.mxu0 0.0
    %1112 = vmatprep.subr.mxu0 0.0
    %1113 = vmatpush1.msra.mxu0 0.0
    %1114 = vmatprep.subr.mxu0 0.0
    %1115 = vmatpush1.msra.mxu0 0.0
    %1116 = vmatprep.subr.mxu0 0.0
    %1117 = vmatpush1.msra.mxu0 0.0
    %1118 = vmatprep.subr.mxu0 0.0
    %1119 = vmatpush1.msra.mxu0 0.0
    %1120 = vmatprep.subr.mxu0 0.0
    %1121 = vmatpush1.msra.mxu0 0.0
    %1122 = vmatprep.subr.mxu0 0.0
    %1123 = vmatpush1.msra.mxu0 0.0
    %1124 = vmatprep.subr.mxu0 0.0
    %1125 = vmatpush1.msra.mxu0 0.0
    %1126 = vmatprep.subr.mxu0 0.0
    %1127 = vmatpush1.msra.mxu0 0.0
    %1128 = vmatprep.mubr.f32.mxu0 0.0
    %1129 = vmatmul.mubr.f32.gmra.mrb[0].mxu0 %v1062
    %v1130 = vpop.f32.mrb[0].mxu0
    %v1131 = vadd.f32 0.0, %v1130
    %v1132 = vpop.f32.mrb[0].mxu0
    %1133 = vdwg.mxu0
    %1134 = vrot.lane.b32.xlu0 %v153, 104
    %v1135 = vpop.permute.xlu0 %1134
    %v1138 = vsel %vm176, %v897, 0
    %1140 = vmatprep.subr.mxu0 0.0
    %1141 = vmatpush1.msra.mxu0 %v1135
    %1142 = vmatprep.subr.mxu0 0.0
    %1143 = vmatpush1.msra.mxu0 0.0
    %1144 = vmatprep.subr.mxu0 0.0
    %1145 = vmatpush1.msra.mxu0 0.0
    %1146 = vmatprep.subr.mxu0 0.0
    %1147 = vmatpush1.msra.mxu0 0.0
    %1148 = vmatprep.subr.mxu0 0.0
    %1149 = vmatpush1.msra.mxu0 0.0
    %1150 = vmatprep.subr.mxu0 0.0
    %1151 = vmatpush1.msra.mxu0 0.0
    %1152 = vmatprep.subr.mxu0 0.0
    %1153 = vmatpush1.msra.mxu0 0.0
    %1154 = vmatprep.subr.mxu0 0.0
    %1155 = vmatpush1.msra.mxu0 0.0
    %1156 = vmatprep.subr.mxu0 0.0
    %1157 = vmatpush1.msra.mxu0 0.0
    %1158 = vmatprep.subr.mxu0 0.0
    %1159 = vmatpush1.msra.mxu0 0.0
    %1160 = vmatprep.subr.mxu0 0.0
    %1161 = vmatpush1.msra.mxu0 0.0
    %1162 = vmatprep.subr.mxu0 0.0
    %1163 = vmatpush1.msra.mxu0 0.0
    %1164 = vmatprep.subr.mxu0 0.0
    %1165 = vmatpush1.msra.mxu0 0.0
    %1166 = vmatprep.subr.mxu0 0.0
    %1167 = vmatpush1.msra.mxu0 0.0
    %1168 = vmatprep.subr.mxu0 0.0
    %1169 = vmatpush1.msra.mxu0 0.0
    %1170 = vmatprep.subr.mxu0 0.0
    %1171 = vmatpush1.msra.mxu0 0.0
    %1172 = vmatprep.subr.mxu0 0.0
    %1173 = vmatpush1.msra.mxu0 0.0
    %1174 = vmatprep.subr.mxu0 0.0
    %1175 = vmatpush1.msra.mxu0 0.0
    %1176 = vmatprep.subr.mxu0 0.0
    %1177 = vmatpush1.msra.mxu0 0.0
    %1178 = vmatprep.subr.mxu0 0.0
    %1179 = vmatpush1.msra.mxu0 0.0
    %1180 = vmatprep.subr.mxu0 0.0
    %1181 = vmatpush1.msra.mxu0 0.0
    %1182 = vmatprep.subr.mxu0 0.0
    %1183 = vmatpush1.msra.mxu0 0.0
    %1184 = vmatprep.subr.mxu0 0.0
    %1185 = vmatpush1.msra.mxu0 0.0
    %1186 = vmatprep.subr.mxu0 0.0
    %1187 = vmatpush1.msra.mxu0 0.0
    %1188 = vmatprep.subr.mxu0 0.0
    %1189 = vmatpush1.msra.mxu0 0.0
    %1190 = vmatprep.subr.mxu0 0.0
    %1191 = vmatpush1.msra.mxu0 0.0
    %1192 = vmatprep.subr.mxu0 0.0
    %1193 = vmatpush1.msra.mxu0 0.0
    %1194 = vmatprep.subr.mxu0 0.0
    %1195 = vmatpush1.msra.mxu0 0.0
    %1196 = vmatprep.subr.mxu0 0.0
    %1197 = vmatpush1.msra.mxu0 0.0
    %1198 = vmatprep.subr.mxu0 0.0
    %1199 = vmatpush1.msra.mxu0 0.0
    %1200 = vmatprep.subr.mxu0 0.0
    %1201 = vmatpush1.msra.mxu0 0.0
    %1202 = vmatprep.subr.mxu0 0.0
    %1203 = vmatpush1.msra.mxu0 0.0
    %1204 = vmatprep.mubr.f32.mxu0 0.0
    %1205 = vmatmul.mubr.f32.gmra.mrb[0].mxu0 %v1138
    %v1206 = vpop.f32.mrb[0].mxu0
    %v1207 = vadd.f32 0.0, %v1206
    %v1208 = vpop.f32.mrb[0].mxu0
    %1209 = vdwg.mxu0
    %1210 = vrot.lane.b32.xlu0 %v158, 104
    %v1211 = vpop.permute.xlu0 %1210
    %v1214 = vsel %vm176, %v899, 0
    %1216 = vmatprep.subr.mxu0 0.0
    %1217 = vmatpush1.msra.mxu0 %v1211
    %1218 = vmatprep.subr.mxu0 0.0
    %1219 = vmatpush1.msra.mxu0 0.0
    %1220 = vmatprep.subr.mxu0 0.0
    %1221 = vmatpush1.msra.mxu0 0.0
    %1222 = vmatprep.subr.mxu0 0.0
    %1223 = vmatpush1.msra.mxu0 0.0
    %1224 = vmatprep.subr.mxu0 0.0
    %1225 = vmatpush1.msra.mxu0 0.0
    %1226 = vmatprep.subr.mxu0 0.0
    %1227 = vmatpush1.msra.mxu0 0.0
    %1228 = vmatprep.subr.mxu0 0.0
    %1229 = vmatpush1.msra.mxu0 0.0
    %1230 = vmatprep.subr.mxu0 0.0
    %1231 = vmatpush1.msra.mxu0 0.0
    %1232 = vmatprep.subr.mxu0 0.0
    %1233 = vmatpush1.msra.mxu0 0.0
    %1234 = vmatprep.subr.mxu0 0.0
    %1235 = vmatpush1.msra.mxu0 0.0
    %1236 = vmatprep.subr.mxu0 0.0
    %1237 = vmatpush1.msra.mxu0 0.0
    %1238 = vmatprep.subr.mxu0 0.0
    %1239 = vmatpush1.msra.mxu0 0.0
    %1240 = vmatprep.subr.mxu0 0.0
    %1241 = vmatpush1.msra.mxu0 0.0
    %1242 = vmatprep.subr.mxu0 0.0
    %1243 = vmatpush1.msra.mxu0 0.0
    %1244 = vmatprep.subr.mxu0 0.0
    %1245 = vmatpush1.msra.mxu0 0.0
    %1246 = vmatprep.subr.mxu0 0.0
    %1247 = vmatpush1.msra.mxu0 0.0
    %1248 = vmatprep.subr.mxu0 0.0
    %1249 = vmatpush1.msra.mxu0 0.0
    %1250 = vmatprep.subr.mxu0 0.0
    %1251 = vmatpush1.msra.mxu0 0.0
    %1252 = vmatprep.subr.mxu0 0.0
    %1253 = vmatpush1.msra.mxu0 0.0
    %1254 = vmatprep.subr.mxu0 0.0
    %1255 = vmatpush1.msra.mxu0 0.0
    %1256 = vmatprep.subr.mxu0 0.0
    %1257 = vmatpush1.msra.mxu0 0.0
    %1258 = vmatprep.subr.mxu0 0.0
    %1259 = vmatpush1.msra.mxu0 0.0
    %1260 = vmatprep.subr.mxu0 0.0
    %1261 = vmatpush1.msra.mxu0 0.0
    %1262 = vmatprep.subr.mxu0 0.0
    %1263 = vmatpush1.msra.mxu0 0.0
    %1264 = vmatprep.subr.mxu0 0.0
    %1265 = vmatpush1.msra.mxu0 0.0
    %1266 = vmatprep.subr.mxu0 0.0
    %1267 = vmatpush1.msra.mxu0 0.0
    %1268 = vmatprep.subr.mxu0 0.0
    %1269 = vmatpush1.msra.mxu0 0.0
    %1270 = vmatprep.subr.mxu0 0.0
    %1271 = vmatpush1.msra.mxu0 0.0
    %1272 = vmatprep.subr.mxu0 0.0
    %1273 = vmatpush1.msra.mxu0 0.0
    %1274 = vmatprep.subr.mxu0 0.0
    %1275 = vmatpush1.msra.mxu0 0.0
    %1276 = vmatprep.subr.mxu0 0.0
    %1277 = vmatpush1.msra.mxu0 0.0
    %1278 = vmatprep.subr.mxu0 0.0
    %1279 = vmatpush1.msra.mxu0 0.0
    %1280 = vmatprep.mubr.f32.mxu0 0.0
    %1281 = vmatmul.mubr.f32.gmra.mrb[0].mxu0 %v1214
    %v1282 = vpop.f32.mrb[0].mxu0
    %v1283 = vadd.f32 0.0, %v1282
    %v1284 = vpop.f32.mrb[0].mxu0
    %1285 = vdwg.mxu0
    %1286 = vrot.lane.b32.xlu0 %v163, 104
    %v1287 = vpop.permute.xlu0 %1286
    %v1290 = vsel %vm176, %v901, 0
    %1292 = vmatprep.subr.mxu0 0.0
    %1293 = vmatpush1.msra.mxu0 %v1287
    %1294 = vmatprep.subr.mxu0 0.0
    %1295 = vmatpush1.msra.mxu0 0.0
    %1296 = vmatprep.subr.mxu0 0.0
    %1297 = vmatpush1.msra.mxu0 0.0
    %1298 = vmatprep.subr.mxu0 0.0
    %1299 = vmatpush1.msra.mxu0 0.0
    %1300 = vmatprep.subr.mxu0 0.0
    %1301 = vmatpush1.msra.mxu0 0.0
    %1302 = vmatprep.subr.mxu0 0.0
    %1303 = vmatpush1.msra.mxu0 0.0
    %1304 = vmatprep.subr.mxu0 0.0
    %1305 = vmatpush1.msra.mxu0 0.0
    %1306 = vmatprep.subr.mxu0 0.0
    %1307 = vmatpush1.msra.mxu0 0.0
    %1308 = vmatprep.subr.mxu0 0.0
    %1309 = vmatpush1.msra.mxu0 0.0
    %1310 = vmatprep.subr.mxu0 0.0
    %1311 = vmatpush1.msra.mxu0 0.0
    %1312 = vmatprep.subr.mxu0 0.0
    %1313 = vmatpush1.msra.mxu0 0.0
    %1314 = vmatprep.subr.mxu0 0.0
    %1315 = vmatpush1.msra.mxu0 0.0
    %1316 = vmatprep.subr.mxu0 0.0
    %1317 = vmatpush1.msra.mxu0 0.0
    %1318 = vmatprep.subr.mxu0 0.0
    %1319 = vmatpush1.msra.mxu0 0.0
    %1320 = vmatprep.subr.mxu0 0.0
    %1321 = vmatpush1.msra.mxu0 0.0
    %1322 = vmatprep.subr.mxu0 0.0
    %1323 = vmatpush1.msra.mxu0 0.0
    %1324 = vmatprep.subr.mxu0 0.0
    %1325 = vmatpush1.msra.mxu0 0.0
    %1326 = vmatprep.subr.mxu0 0.0
    %1327 = vmatpush1.msra.mxu0 0.0
    %1328 = vmatprep.subr.mxu0 0.0
    %1329 = vmatpush1.msra.mxu0 0.0
    %1330 = vmatprep.subr.mxu0 0.0
    %1331 = vmatpush1.msra.mxu0 0.0
    %1332 = vmatprep.subr.mxu0 0.0
    %1333 = vmatpush1.msra.mxu0 0.0
    %1334 = vmatprep.subr.mxu0 0.0
    %1335 = vmatpush1.msra.mxu0 0.0
    %1336 = vmatprep.subr.mxu0 0.0
    %1337 = vmatpush1.msra.mxu0 0.0
    %1338 = vmatprep.subr.mxu0 0.0
    %1339 = vmatpush1.msra.mxu0 0.0
    %1340 = vmatprep.subr.mxu0 0.0
    %1341 = vmatpush1.msra.mxu0 0.0
    %1342 = vmatprep.subr.mxu0 0.0
    %1343 = vmatpush1.msra.mxu0 0.0
    %1344 = vmatprep.subr.mxu0 0.0
    %1345 = vmatpush1.msra.mxu0 0.0
    %1346 = vmatprep.subr.mxu0 0.0
    %1347 = vmatpush1.msra.mxu0 0.0
    %1348 = vmatprep.subr.mxu0 0.0
    %1349 = vmatpush1.msra.mxu0 0.0
    %1350 = vmatprep.subr.mxu0 0.0
    %1351 = vmatpush1.msra.mxu0 0.0
    %1352 = vmatprep.subr.mxu0 0.0
    %1353 = vmatpush1.msra.mxu0 0.0
    %1354 = vmatprep.subr.mxu0 0.0
    %1355 = vmatpush1.msra.mxu0 0.0
    %1356 = vmatprep.mubr.f32.mxu0 0.0
    %1357 = vmatmul.mubr.f32.gmra.mrb[0].mxu0 %v1290
    %v1358 = vpop.f32.mrb[0].mxu0
    %v1359 = vadd.f32 0.0, %v1358
    %v1360 = vpop.f32.mrb[0].mxu0
    %1361 = vdwg.mxu0
    %1362 = vrot.lane.b32.xlu0 %v168, 104
    %v1363 = vpop.permute.xlu0 %1362
    %v1366 = vsel %vm176, %v903, 0
    %1368 = vmatprep.subr.mxu0 0.0
    %1369 = vmatpush1.msra.mxu0 %v1363
    %1370 = vmatprep.subr.mxu0 0.0
    %1371 = vmatpush1.msra.mxu0 0.0
    %1372 = vmatprep.subr.mxu0 0.0
    %1373 = vmatpush1.msra.mxu0 0.0
    %1374 = vmatprep.subr.mxu0 0.0
    %1375 = vmatpush1.msra.mxu0 0.0
    %1376 = vmatprep.subr.mxu0 0.0
    %1377 = vmatpush1.msra.mxu0 0.0
    %1378 = vmatprep.subr.mxu0 0.0
    %1379 = vmatpush1.msra.mxu0 0.0
    %1380 = vmatprep.subr.mxu0 0.0
    %1381 = vmatpush1.msra.mxu0 0.0
    %1382 = vmatprep.subr.mxu0 0.0
    %1383 = vmatpush1.msra.mxu0 0.0
    %1384 = vmatprep.subr.mxu0 0.0
    %1385 = vmatpush1.msra.mxu0 0.0
    %1386 = vmatprep.subr.mxu0 0.0
    %1387 = vmatpush1.msra.mxu0 0.0
    %1388 = vmatprep.subr.mxu0 0.0
    %1389 = vmatpush1.msra.mxu0 0.0
    %1390 = vmatprep.subr.mxu0 0.0
    %1391 = vmatpush1.msra.mxu0 0.0
    %1392 = vmatprep.subr.mxu0 0.0
    %1393 = vmatpush1.msra.mxu0 0.0
    %1394 = vmatprep.subr.mxu0 0.0
    %1395 = vmatpush1.msra.mxu0 0.0
    %1396 = vmatprep.subr.mxu0 0.0
    %1397 = vmatpush1.msra.mxu0 0.0
    %1398 = vmatprep.subr.mxu0 0.0
    %1399 = vmatpush1.msra.mxu0 0.0
    %1400 = vmatprep.subr.mxu0 0.0
    %1401 = vmatpush1.msra.mxu0 0.0
    %1402 = vmatprep.subr.mxu0 0.0
    %1403 = vmatpush1.msra.mxu0 0.0
    %1404 = vmatprep.subr.mxu0 0.0
    %1405 = vmatpush1.msra.mxu0 0.0
    %1406 = vmatprep.subr.mxu0 0.0
    %1407 = vmatpush1.msra.mxu0 0.0
    %1408 = vmatprep.subr.mxu0 0.0
    %1409 = vmatpush1.msra.mxu0 0.0
    %1410 = vmatprep.subr.mxu0 0.0
    %1411 = vmatpush1.msra.mxu0 0.0
    %1412 = vmatprep.subr.mxu0 0.0
    %1413 = vmatpush1.msra.mxu0 0.0
    %1414 = vmatprep.subr.mxu0 0.0
    %1415 = vmatpush1.msra.mxu0 0.0
    %1416 = vmatprep.subr.mxu0 0.0
    %1417 = vmatpush1.msra.mxu0 0.0
    %1418 = vmatprep.subr.mxu0 0.0
    %1419 = vmatpush1.msra.mxu0 0.0
    %1420 = vmatprep.subr.mxu0 0.0
    %1421 = vmatpush1.msra.mxu0 0.0
    %1422 = vmatprep.subr.mxu0 0.0
    %1423 = vmatpush1.msra.mxu0 0.0
    %1424 = vmatprep.subr.mxu0 0.0
    %1425 = vmatpush1.msra.mxu0 0.0
    %1426 = vmatprep.subr.mxu0 0.0
    %1427 = vmatpush1.msra.mxu0 0.0
    %1428 = vmatprep.subr.mxu0 0.0
    %1429 = vmatpush1.msra.mxu0 0.0
    %1430 = vmatprep.subr.mxu0 0.0
    %1431 = vmatpush1.msra.mxu0 0.0
    %1432 = vmatprep.mubr.f32.mxu0 0.0
    %1433 = vmatmul.mubr.f32.gmra.mrb[0].mxu0 %v1366
    %v1434 = vpop.f32.mrb[0].mxu0
    %v1435 = vadd.f32 0.0, %v1434
    %v1436 = vpop.f32.mrb[0].mxu0
    %1437 = vdwg.mxu0
    %1438 = vrot.lane.b32.xlu0 %v173, 104
    %v1439 = vpop.permute.xlu0 %1438
    %v1442 = vsel %vm176, %v905, 0
    %1444 = vmatprep.subr.mxu0 0.0
    %1445 = vmatpush1.msra.mxu0 %v1439
    %1446 = vmatprep.subr.mxu0 0.0
    %1447 = vmatpush1.msra.mxu0 0.0
    %1448 = vmatprep.subr.mxu0 0.0
    %1449 = vmatpush1.msra.mxu0 0.0
    %1450 = vmatprep.subr.mxu0 0.0
    %1451 = vmatpush1.msra.mxu0 0.0
    %1452 = vmatprep.subr.mxu0 0.0
    %1453 = vmatpush1.msra.mxu0 0.0
    %1454 = vmatprep.subr.mxu0 0.0
    %1455 = vmatpush1.msra.mxu0 0.0
    %1456 = vmatprep.subr.mxu0 0.0
    %1457 = vmatpush1.msra.mxu0 0.0
    %1458 = vmatprep.subr.mxu0 0.0
    %1459 = vmatpush1.msra.mxu0 0.0
    %1460 = vmatprep.subr.mxu0 0.0
    %1461 = vmatpush1.msra.mxu0 0.0
    %1462 = vmatprep.subr.mxu0 0.0
    %1463 = vmatpush1.msra.mxu0 0.0
    %1464 = vmatprep.subr.mxu0 0.0
    %1465 = vmatpush1.msra.mxu0 0.0
    %1466 = vmatprep.subr.mxu0 0.0
    %1467 = vmatpush1.msra.mxu0 0.0
    %1468 = vmatprep.subr.mxu0 0.0
    %1469 = vmatpush1.msra.mxu0 0.0
    %1470 = vmatprep.subr.mxu0 0.0
    %1471 = vmatpush1.msra.mxu0 0.0
    %1472 = vmatprep.subr.mxu0 0.0
    %1473 = vmatpush1.msra.mxu0 0.0
    %1474 = vmatprep.subr.mxu0 0.0
    %1475 = vmatpush1.msra.mxu0 0.0
    %1476 = vmatprep.subr.mxu0 0.0
    %1477 = vmatpush1.msra.mxu0 0.0
    %1478 = vmatprep.subr.mxu0 0.0
    %1479 = vmatpush1.msra.mxu0 0.0
    %1480 = vmatprep.subr.mxu0 0.0
    %1481 = vmatpush1.msra.mxu0 0.0
    %1482 = vmatprep.subr.mxu0 0.0
    %1483 = vmatpush1.msra.mxu0 0.0
    %1484 = vmatprep.subr.mxu0 0.0
    %1485 = vmatpush1.msra.mxu0 0.0
    %1486 = vmatprep.subr.mxu0 0.0
    %1487 = vmatpush1.msra.mxu0 0.0
    %1488 = vmatprep.subr.mxu0 0.0
    %1489 = vmatpush1.msra.mxu0 0.0
    %1490 = vmatprep.subr.mxu0 0.0
    %1491 = vmatpush1.msra.mxu0 0.0
    %1492 = vmatprep.subr.mxu0 0.0
    %1493 = vmatpush1.msra.mxu0 0.0
    %1494 = vmatprep.subr.mxu0 0.0
    %1495 = vmatpush1.msra.mxu0 0.0
    %1496 = vmatprep.subr.mxu0 0.0
    %1497 = vmatpush1.msra.mxu0 0.0
    %1498 = vmatprep.subr.mxu0 0.0
    %1499 = vmatpush1.msra.mxu0 0.0
    %1500 = vmatprep.subr.mxu0 0.0
    %1501 = vmatpush1.msra.mxu0 0.0
    %1502 = vmatprep.subr.mxu0 0.0
    %1503 = vmatpush1.msra.mxu0 0.0
    %1504 = vmatprep.subr.mxu0 0.0
    %1505 = vmatpush1.msra.mxu0 0.0
    %1506 = vmatprep.subr.mxu0 0.0
    %1507 = vmatpush1.msra.mxu0 0.0
    %1508 = vmatprep.mubr.f32.mxu0 0.0
    %1509 = vmatmul.mubr.f32.gmra.mrb[0].mxu0 %v1442
    %v1510 = vpop.f32.mrb[0].mxu0
    %v1511 = vadd.f32 0.0, %v1510
    %v1512 = vpop.f32.mrb[0].mxu0
    %1513 = vdwg.mxu0
    %1514 = vrot.lane.b32.xlu0 %v138, 116
    %v1515 = vpop.permute.xlu0 %1514
    %1516 = vrot.lane.b32.xlu0 %v138, 108
    %v1517 = vpop.permute.xlu0 %1516
    %v1518 = vsel %vm190, %v1515, 0
    %v1520 = vsel %vm190, %v1517, 0
    %1522 = vmatprep.subr.mxu0 0.0
    %1523 = vmatpush1.xpose.msra.mxu0 %v1520
    %1524 = vmatprep.subr.mxu0 0.0
    %1525 = vmatpush1.xpose.msra.mxu0 0.0
    %1526 = vmatprep.subr.mxu0 0.0
    %1527 = vmatpush1.xpose.msra.mxu0 0.0
    %1528 = vmatprep.subr.mxu0 0.0
    %1529 = vmatpush1.xpose.msra.mxu0 0.0
    %1530 = vmatprep.subr.mxu0 0.0
    %1531 = vmatpush1.xpose.msra.mxu0 0.0
    %1532 = vmatprep.subr.mxu0 0.0
    %1533 = vmatpush1.xpose.msra.mxu0 0.0
    %1534 = vmatprep.subr.mxu0 0.0
    %1535 = vmatpush1.xpose.msra.mxu0 0.0
    %1536 = vmatprep.subr.mxu0 0.0
    %1537 = vmatpush1.xpose.msra.mxu0 0.0
    %1538 = vmatprep.subr.mxu0 0.0
    %1539 = vmatpush1.xpose.msra.mxu0 0.0
    %1540 = vmatprep.subr.mxu0 0.0
    %1541 = vmatpush1.xpose.msra.mxu0 0.0
    %1542 = vmatprep.subr.mxu0 0.0
    %1543 = vmatpush1.xpose.msra.mxu0 0.0
    %1544 = vmatprep.subr.mxu0 0.0
    %1545 = vmatpush1.xpose.msra.mxu0 0.0
    %1546 = vmatprep.subr.mxu0 0.0
    %1547 = vmatpush1.xpose.msra.mxu0 0.0
    %1548 = vmatprep.subr.mxu0 0.0
    %1549 = vmatpush1.xpose.msra.mxu0 0.0
    %1550 = vmatprep.subr.mxu0 0.0
    %1551 = vmatpush1.xpose.msra.mxu0 0.0
    %1552 = vmatprep.subr.mxu0 0.0
    %1553 = vmatpush1.xpose.msra.mxu0 0.0
    %1554 = vmatprep.subr.mxu0 0.0
    %1555 = vmatpush1.xpose.msra.mxu0 0.0
    %1556 = vmatprep.subr.mxu0 0.0
    %1557 = vmatpush1.xpose.msra.mxu0 0.0
    %1558 = vmatprep.subr.mxu0 0.0
    %1559 = vmatpush1.xpose.msra.mxu0 0.0
    %1560 = vmatprep.subr.mxu0 0.0
    %1561 = vmatpush1.xpose.msra.mxu0 0.0
    %1562 = vmatprep.subr.mxu0 0.0
    %1563 = vmatpush1.xpose.msra.mxu0 0.0
    %1564 = vmatprep.subr.mxu0 0.0
    %1565 = vmatpush1.xpose.msra.mxu0 0.0
    %1566 = vmatprep.subr.mxu0 0.0
    %1567 = vmatpush1.xpose.msra.mxu0 0.0
    %1568 = vmatprep.subr.mxu0 0.0
    %1569 = vmatpush1.xpose.msra.mxu0 0.0
    %1570 = vmatprep.subr.mxu0 0.0
    %1571 = vmatpush1.xpose.msra.mxu0 0.0
    %1572 = vmatprep.subr.mxu0 0.0
    %1573 = vmatpush1.xpose.msra.mxu0 0.0
    %1574 = vmatprep.subr.mxu0 0.0
    %1575 = vmatpush1.xpose.msra.mxu0 0.0
    %1576 = vmatprep.subr.mxu0 0.0
    %1577 = vmatpush1.xpose.msra.mxu0 0.0
    %1578 = vmatprep.subr.mxu0 0.0
    %1579 = vmatpush1.xpose.msra.mxu0 0.0
    %1580 = vmatprep.subr.mxu0 0.0
    %1581 = vmatpush1.xpose.msra.mxu0 0.0
    %1582 = vmatprep.subr.mxu0 0.0
    %1583 = vmatpush1.xpose.msra.mxu0 0.0
    %1584 = vmatprep.subr.mxu0 0.0
    %1585 = vmatpush1.xpose.msra.mxu0 0.0
    %1586 = vmatprep.mubr.f32.mxu0 0.0
    %1587 = vmatmul.mubr.f32.gmra.mrb[0].mxu0 %v1518
    %v1588 = vpop.f32.mrb[0].mxu0
    %v1589 = vadd.f32 0.0, %v1588
    %v1590 = vpop.f32.mrb[0].mxu0
    %1591 = vdwg.mxu0
    %1592 = vrot.lane.b32.xlu0 %v143, 116
    %v1593 = vpop.permute.xlu0 %1592
    %1594 = vrot.lane.b32.xlu0 %v143, 108
    %v1595 = vpop.permute.xlu0 %1594
    %v1596 = vsel %vm190, %v1593, 0
    %v1598 = vsel %vm190, %v1595, 0
    %1600 = vmatprep.subr.mxu0 0.0
    %1601 = vmatpush1.xpose.msra.mxu0 %v1598
    %1602 = vmatprep.subr.mxu0 0.0
    %1603 = vmatpush1.xpose.msra.mxu0 0.0
    %1604 = vmatprep.subr.mxu0 0.0
    %1605 = vmatpush1.xpose.msra.mxu0 0.0
    %1606 = vmatprep.subr.mxu0 0.0
    %1607 = vmatpush1.xpose.msra.mxu0 0.0
    %1608 = vmatprep.subr.mxu0 0.0
    %1609 = vmatpush1.xpose.msra.mxu0 0.0
    %1610 = vmatprep.subr.mxu0 0.0
    %1611 = vmatpush1.xpose.msra.mxu0 0.0
    %1612 = vmatprep.subr.mxu0 0.0
    %1613 = vmatpush1.xpose.msra.mxu0 0.0
    %1614 = vmatprep.subr.mxu0 0.0
    %1615 = vmatpush1.xpose.msra.mxu0 0.0
    %1616 = vmatprep.subr.mxu0 0.0
    %1617 = vmatpush1.xpose.msra.mxu0 0.0
    %1618 = vmatprep.subr.mxu0 0.0
    %1619 = vmatpush1.xpose.msra.mxu0 0.0
    %1620 = vmatprep.subr.mxu0 0.0
    %1621 = vmatpush1.xpose.msra.mxu0 0.0
    %1622 = vmatprep.subr.mxu0 0.0
    %1623 = vmatpush1.xpose.msra.mxu0 0.0
    %1624 = vmatprep.subr.mxu0 0.0
    %1625 = vmatpush1.xpose.msra.mxu0 0.0
    %1626 = vmatprep.subr.mxu0 0.0
    %1627 = vmatpush1.xpose.msra.mxu0 0.0
    %1628 = vmatprep.subr.mxu0 0.0
    %1629 = vmatpush1.xpose.msra.mxu0 0.0
    %1630 = vmatprep.subr.mxu0 0.0
    %1631 = vmatpush1.xpose.msra.mxu0 0.0
    %1632 = vmatprep.subr.mxu0 0.0
    %1633 = vmatpush1.xpose.msra.mxu0 0.0
    %1634 = vmatprep.subr.mxu0 0.0
    %1635 = vmatpush1.xpose.msra.mxu0 0.0
    %1636 = vmatprep.subr.mxu0 0.0
    %1637 = vmatpush1.xpose.msra.mxu0 0.0
    %1638 = vmatprep.subr.mxu0 0.0
    %1639 = vmatpush1.xpose.msra.mxu0 0.0
    %1640 = vmatprep.subr.mxu0 0.0
    %1641 = vmatpush1.xpose.msra.mxu0 0.0
    %1642 = vmatprep.subr.mxu0 0.0
    %1643 = vmatpush1.xpose.msra.mxu0 0.0
    %1644 = vmatprep.subr.mxu0 0.0
    %1645 = vmatpush1.xpose.msra.mxu0 0.0
    %1646 = vmatprep.subr.mxu0 0.0
    %1647 = vmatpush1.xpose.msra.mxu0 0.0
    %1648 = vmatprep.subr.mxu0 0.0
    %1649 = vmatpush1.xpose.msra.mxu0 0.0
    %1650 = vmatprep.subr.mxu0 0.0
    %1651 = vmatpush1.xpose.msra.mxu0 0.0
    %1652 = vmatprep.subr.mxu0 0.0
    %1653 = vmatpush1.xpose.msra.mxu0 0.0
    %1654 = vmatprep.subr.mxu0 0.0
    %1655 = vmatpush1.xpose.msra.mxu0 0.0
    %1656 = vmatprep.subr.mxu0 0.0
    %1657 = vmatpush1.xpose.msra.mxu0 0.0
    %1658 = vmatprep.subr.mxu0 0.0
    %1659 = vmatpush1.xpose.msra.mxu0 0.0
    %1660 = vmatprep.subr.mxu0 0.0
    %1661 = vmatpush1.xpose.msra.mxu0 0.0
    %1662 = vmatprep.subr.mxu0 0.0
    %1663 = vmatpush1.xpose.msra.mxu0 0.0
    %1664 = vmatprep.mubr.f32.mxu0 0.0
    %1665 = vmatmul.mubr.f32.gmra.mrb[0].mxu0 %v1596
    %v1666 = vpop.f32.mrb[0].mxu0
    %v1667 = vadd.f32 0.0, %v1666
    %v1668 = vpop.f32.mrb[0].mxu0
    %1669 = vdwg.mxu0
    %1670 = vrot.lane.b32.xlu0 %v148, 116
    %v1671 = vpop.permute.xlu0 %1670
    %1672 = vrot.lane.b32.xlu0 %v148, 108
    %v1673 = vpop.permute.xlu0 %1672
    %v1674 = vsel %vm190, %v1671, 0
    %v1676 = vsel %vm190, %v1673, 0
    %1678 = vmatprep.subr.mxu0 0.0
    %1679 = vmatpush1.xpose.msra.mxu0 %v1676
    %1680 = vmatprep.subr.mxu0 0.0
    %1681 = vmatpush1.xpose.msra.mxu0 0.0
    %1682 = vmatprep.subr.mxu0 0.0
    %1683 = vmatpush1.xpose.msra.mxu0 0.0
    %1684 = vmatprep.subr.mxu0 0.0
    %1685 = vmatpush1.xpose.msra.mxu0 0.0
    %1686 = vmatprep.subr.mxu0 0.0
    %1687 = vmatpush1.xpose.msra.mxu0 0.0
    %1688 = vmatprep.subr.mxu0 0.0
    %1689 = vmatpush1.xpose.msra.mxu0 0.0
    %1690 = vmatprep.subr.mxu0 0.0
    %1691 = vmatpush1.xpose.msra.mxu0 0.0
    %1692 = vmatprep.subr.mxu0 0.0
    %1693 = vmatpush1.xpose.msra.mxu0 0.0
    %1694 = vmatprep.subr.mxu0 0.0
    %1695 = vmatpush1.xpose.msra.mxu0 0.0
    %1696 = vmatprep.subr.mxu0 0.0
    %1697 = vmatpush1.xpose.msra.mxu0 0.0
    %1698 = vmatprep.subr.mxu0 0.0
    %1699 = vmatpush1.xpose.msra.mxu0 0.0
    %1700 = vmatprep.subr.mxu0 0.0
    %1701 = vmatpush1.xpose.msra.mxu0 0.0
    %1702 = vmatprep.subr.mxu0 0.0
    %1703 = vmatpush1.xpose.msra.mxu0 0.0
    %1704 = vmatprep.subr.mxu0 0.0
    %1705 = vmatpush1.xpose.msra.mxu0 0.0
    %1706 = vmatprep.subr.mxu0 0.0
    %1707 = vmatpush1.xpose.msra.mxu0 0.0
    %1708 = vmatprep.subr.mxu0 0.0
    %1709 = vmatpush1.xpose.msra.mxu0 0.0
    %1710 = vmatprep.subr.mxu0 0.0
    %1711 = vmatpush1.xpose.msra.mxu0 0.0
    %1712 = vmatprep.subr.mxu0 0.0
    %1713 = vmatpush1.xpose.msra.mxu0 0.0
    %1714 = vmatprep.subr.mxu0 0.0
    %1715 = vmatpush1.xpose.msra.mxu0 0.0
    %1716 = vmatprep.subr.mxu0 0.0
    %1717 = vmatpush1.xpose.msra.mxu0 0.0
    %1718 = vmatprep.subr.mxu0 0.0
    %1719 = vmatpush1.xpose.msra.mxu0 0.0
    %1720 = vmatprep.subr.mxu0 0.0
    %1721 = vmatpush1.xpose.msra.mxu0 0.0
    %1722 = vmatprep.subr.mxu0 0.0
    %1723 = vmatpush1.xpose.msra.mxu0 0.0
    %1724 = vmatprep.subr.mxu0 0.0
    %1725 = vmatpush1.xpose.msra.mxu0 0.0
    %1726 = vmatprep.subr.mxu0 0.0
    %1727 = vmatpush1.xpose.msra.mxu0 0.0
    %1728 = vmatprep.subr.mxu0 0.0
    %1729 = vmatpush1.xpose.msra.mxu0 0.0
    %1730 = vmatprep.subr.mxu0 0.0
    %1731 = vmatpush1.xpose.msra.mxu0 0.0
    %1732 = vmatprep.subr.mxu0 0.0
    %1733 = vmatpush1.xpose.msra.mxu0 0.0
    %1734 = vmatprep.subr.mxu0 0.0
    %1735 = vmatpush1.xpose.msra.mxu0 0.0
    %1736 = vmatprep.subr.mxu0 0.0
    %1737 = vmatpush1.xpose.msra.mxu0 0.0
    %1738 = vmatprep.subr.mxu0 0.0
    %1739 = vmatpush1.xpose.msra.mxu0 0.0
    %1740 = vmatprep.subr.mxu0 0.0
    %1741 = vmatpush1.xpose.msra.mxu0 0.0
    %1742 = vmatprep.mubr.f32.mxu0 0.0
    %1743 = vmatmul.mubr.f32.gmra.mrb[0].mxu0 %v1674
    %v1744 = vpop.f32.mrb[0].mxu0
    %v1745 = vadd.f32 0.0, %v1744
    %v1746 = vpop.f32.mrb[0].mxu0
    %1747 = vdwg.mxu0
    %1748 = vrot.lane.b32.xlu0 %v153, 116
    %v1749 = vpop.permute.xlu0 %1748
    %1750 = vrot.lane.b32.xlu0 %v153, 108
    %v1751 = vpop.permute.xlu0 %1750
    %v1752 = vsel %vm190, %v1749, 0
    %v1754 = vsel %vm190, %v1751, 0
    %1756 = vmatprep.subr.mxu0 0.0
    %1757 = vmatpush1.xpose.msra.mxu0 %v1754
    %1758 = vmatprep.subr.mxu0 0.0
    %1759 = vmatpush1.xpose.msra.mxu0 0.0
    %1760 = vmatprep.subr.mxu0 0.0
    %1761 = vmatpush1.xpose.msra.mxu0 0.0
    %1762 = vmatprep.subr.mxu0 0.0
    %1763 = vmatpush1.xpose.msra.mxu0 0.0
    %1764 = vmatprep.subr.mxu0 0.0
    %1765 = vmatpush1.xpose.msra.mxu0 0.0
    %1766 = vmatprep.subr.mxu0 0.0
    %1767 = vmatpush1.xpose.msra.mxu0 0.0
    %1768 = vmatprep.subr.mxu0 0.0
    %1769 = vmatpush1.xpose.msra.mxu0 0.0
    %1770 = vmatprep.subr.mxu0 0.0
    %1771 = vmatpush1.xpose.msra.mxu0 0.0
    %1772 = vmatprep.subr.mxu0 0.0
    %1773 = vmatpush1.xpose.msra.mxu0 0.0
    %1774 = vmatprep.subr.mxu0 0.0
    %1775 = vmatpush1.xpose.msra.mxu0 0.0
    %1776 = vmatprep.subr.mxu0 0.0
    %1777 = vmatpush1.xpose.msra.mxu0 0.0
    %1778 = vmatprep.subr.mxu0 0.0
    %1779 = vmatpush1.xpose.msra.mxu0 0.0
    %1780 = vmatprep.subr.mxu0 0.0
    %1781 = vmatpush1.xpose.msra.mxu0 0.0
    %1782 = vmatprep.subr.mxu0 0.0
    %1783 = vmatpush1.xpose.msra.mxu0 0.0
    %1784 = vmatprep.subr.mxu0 0.0
    %1785 = vmatpush1.xpose.msra.mxu0 0.0
    %1786 = vmatprep.subr.mxu0 0.0
    %1787 = vmatpush1.xpose.msra.mxu0 0.0
    %1788 = vmatprep.subr.mxu0 0.0
    %1789 = vmatpush1.xpose.msra.mxu0 0.0
    %1790 = vmatprep.subr.mxu0 0.0
    %1791 = vmatpush1.xpose.msra.mxu0 0.0
    %1792 = vmatprep.subr.mxu0 0.0
    %1793 = vmatpush1.xpose.msra.mxu0 0.0
    %1794 = vmatprep.subr.mxu0 0.0
    %1795 = vmatpush1.xpose.msra.mxu0 0.0
    %1796 = vmatprep.subr.mxu0 0.0
    %1797 = vmatpush1.xpose.msra.mxu0 0.0
    %1798 = vmatprep.subr.mxu0 0.0
    %1799 = vmatpush1.xpose.msra.mxu0 0.0
    %1800 = vmatprep.subr.mxu0 0.0
    %1801 = vmatpush1.xpose.msra.mxu0 0.0
    %1802 = vmatprep.subr.mxu0 0.0
    %1803 = vmatpush1.xpose.msra.mxu0 0.0
    %1804 = vmatprep.subr.mxu0 0.0
    %1805 = vmatpush1.xpose.msra.mxu0 0.0
    %1806 = vmatprep.subr.mxu0 0.0
    %1807 = vmatpush1.xpose.msra.mxu0 0.0
    %1808 = vmatprep.subr.mxu0 0.0
    %1809 = vmatpush1.xpose.msra.mxu0 0.0
    %1810 = vmatprep.subr.mxu0 0.0
    %1811 = vmatpush1.xpose.msra.mxu0 0.0
    %1812 = vmatprep.subr.mxu0 0.0
    %1813 = vmatpush1.xpose.msra.mxu0 0.0
    %1814 = vmatprep.subr.mxu0 0.0
    %1815 = vmatpush1.xpose.msra.mxu0 0.0
    %1816 = vmatprep.subr.mxu0 0.0
    %1817 = vmatpush1.xpose.msra.mxu0 0.0
    %1818 = vmatprep.subr.mxu0 0.0
    %1819 = vmatpush1.xpose.msra.mxu0 0.0
    %1820 = vmatprep.mubr.f32.mxu0 0.0
    %1821 = vmatmul.mubr.f32.gmra.mrb[0].mxu0 %v1752
    %v1822 = vpop.f32.mrb[0].mxu0
    %v1823 = vadd.f32 0.0, %v1822
    %v1824 = vpop.f32.mrb[0].mxu0
    %1825 = vdwg.mxu0
    %1826 = vrot.lane.b32.xlu0 %v158, 116
    %v1827 = vpop.permute.xlu0 %1826
    %1828 = vrot.lane.b32.xlu0 %v158, 108
    %v1829 = vpop.permute.xlu0 %1828
    %v1830 = vsel %vm190, %v1827, 0
    %v1832 = vsel %vm190, %v1829, 0
    %1834 = vmatprep.subr.mxu0 0.0
    %1835 = vmatpush1.xpose.msra.mxu0 %v1832
    %1836 = vmatprep.subr.mxu0 0.0
    %1837 = vmatpush1.xpose.msra.mxu0 0.0
    %1838 = vmatprep.subr.mxu0 0.0
    %1839 = vmatpush1.xpose.msra.mxu0 0.0
    %1840 = vmatprep.subr.mxu0 0.0
    %1841 = vmatpush1.xpose.msra.mxu0 0.0
    %1842 = vmatprep.subr.mxu0 0.0
    %1843 = vmatpush1.xpose.msra.mxu0 0.0
    %1844 = vmatprep.subr.mxu0 0.0
    %1845 = vmatpush1.xpose.msra.mxu0 0.0
    %1846 = vmatprep.subr.mxu0 0.0
    %1847 = vmatpush1.xpose.msra.mxu0 0.0
    %1848 = vmatprep.subr.mxu0 0.0
    %1849 = vmatpush1.xpose.msra.mxu0 0.0
    %1850 = vmatprep.subr.mxu0 0.0
    %1851 = vmatpush1.xpose.msra.mxu0 0.0
    %1852 = vmatprep.subr.mxu0 0.0
    %1853 = vmatpush1.xpose.msra.mxu0 0.0
    %1854 = vmatprep.subr.mxu0 0.0
    %1855 = vmatpush1.xpose.msra.mxu0 0.0
    %1856 = vmatprep.subr.mxu0 0.0
    %1857 = vmatpush1.xpose.msra.mxu0 0.0
    %1858 = vmatprep.subr.mxu0 0.0
    %1859 = vmatpush1.xpose.msra.mxu0 0.0
    %1860 = vmatprep.subr.mxu0 0.0
    %1861 = vmatpush1.xpose.msra.mxu0 0.0
    %1862 = vmatprep.subr.mxu0 0.0
    %1863 = vmatpush1.xpose.msra.mxu0 0.0
    %1864 = vmatprep.subr.mxu0 0.0
    %1865 = vmatpush1.xpose.msra.mxu0 0.0
    %1866 = vmatprep.subr.mxu0 0.0
    %1867 = vmatpush1.xpose.msra.mxu0 0.0
    %1868 = vmatprep.subr.mxu0 0.0
    %1869 = vmatpush1.xpose.msra.mxu0 0.0
    %1870 = vmatprep.subr.mxu0 0.0
    %1871 = vmatpush1.xpose.msra.mxu0 0.0
    %1872 = vmatprep.subr.mxu0 0.0
    %1873 = vmatpush1.xpose.msra.mxu0 0.0
    %1874 = vmatprep.subr.mxu0 0.0
    %1875 = vmatpush1.xpose.msra.mxu0 0.0
    %1876 = vmatprep.subr.mxu0 0.0
    %1877 = vmatpush1.xpose.msra.mxu0 0.0
    %1878 = vmatprep.subr.mxu0 0.0
    %1879 = vmatpush1.xpose.msra.mxu0 0.0
    %1880 = vmatprep.subr.mxu0 0.0
    %1881 = vmatpush1.xpose.msra.mxu0 0.0
    %1882 = vmatprep.subr.mxu0 0.0
    %1883 = vmatpush1.xpose.msra.mxu0 0.0
    %1884 = vmatprep.subr.mxu0 0.0
    %1885 = vmatpush1.xpose.msra.mxu0 0.0
    %1886 = vmatprep.subr.mxu0 0.0
    %1887 = vmatpush1.xpose.msra.mxu0 0.0
    %1888 = vmatprep.subr.mxu0 0.0
    %1889 = vmatpush1.xpose.msra.mxu0 0.0
    %1890 = vmatprep.subr.mxu0 0.0
    %1891 = vmatpush1.xpose.msra.mxu0 0.0
    %1892 = vmatprep.subr.mxu0 0.0
    %1893 = vmatpush1.xpose.msra.mxu0 0.0
    %1894 = vmatprep.subr.mxu0 0.0
    %1895 = vmatpush1.xpose.msra.mxu0 0.0
    %1896 = vmatprep.subr.mxu0 0.0
    %1897 = vmatpush1.xpose.msra.mxu0 0.0
    %1898 = vmatprep.mubr.f32.mxu0 0.0
    %1899 = vmatmul.mubr.f32.gmra.mrb[0].mxu0 %v1830
    %v1900 = vpop.f32.mrb[0].mxu0
    %v1901 = vadd.f32 0.0, %v1900
    %v1902 = vpop.f32.mrb[0].mxu0
    %1903 = vdwg.mxu0
    %1904 = vrot.lane.b32.xlu0 %v163, 116
    %v1905 = vpop.permute.xlu0 %1904
    %1906 = vrot.lane.b32.xlu0 %v163, 108
    %v1907 = vpop.permute.xlu0 %1906
    %v1908 = vsel %vm190, %v1905, 0
    %v1910 = vsel %vm190, %v1907, 0
    %1912 = vmatprep.subr.mxu0 0.0
    %1913 = vmatpush1.xpose.msra.mxu0 %v1910
    %1914 = vmatprep.subr.mxu0 0.0
    %1915 = vmatpush1.xpose.msra.mxu0 0.0
    %1916 = vmatprep.subr.mxu0 0.0
    %1917 = vmatpush1.xpose.msra.mxu0 0.0
    %1918 = vmatprep.subr.mxu0 0.0
    %1919 = vmatpush1.xpose.msra.mxu0 0.0
    %1920 = vmatprep.subr.mxu0 0.0
    %1921 = vmatpush1.xpose.msra.mxu0 0.0
    %1922 = vmatprep.subr.mxu0 0.0
    %1923 = vmatpush1.xpose.msra.mxu0 0.0
    %1924 = vmatprep.subr.mxu0 0.0
    %1925 = vmatpush1.xpose.msra.mxu0 0.0
    %1926 = vmatprep.subr.mxu0 0.0
    %1927 = vmatpush1.xpose.msra.mxu0 0.0
    %1928 = vmatprep.subr.mxu0 0.0
    %1929 = vmatpush1.xpose.msra.mxu0 0.0
    %1930 = vmatprep.subr.mxu0 0.0
    %1931 = vmatpush1.xpose.msra.mxu0 0.0
    %1932 = vmatprep.subr.mxu0 0.0
    %1933 = vmatpush1.xpose.msra.mxu0 0.0
    %1934 = vmatprep.subr.mxu0 0.0
    %1935 = vmatpush1.xpose.msra.mxu0 0.0
    %1936 = vmatprep.subr.mxu0 0.0
    %1937 = vmatpush1.xpose.msra.mxu0 0.0
    %1938 = vmatprep.subr.mxu0 0.0
    %1939 = vmatpush1.xpose.msra.mxu0 0.0
    %1940 = vmatprep.subr.mxu0 0.0
    %1941 = vmatpush1.xpose.msra.mxu0 0.0
    %1942 = vmatprep.subr.mxu0 0.0
    %1943 = vmatpush1.xpose.msra.mxu0 0.0
    %1944 = vmatprep.subr.mxu0 0.0
    %1945 = vmatpush1.xpose.msra.mxu0 0.0
    %1946 = vmatprep.subr.mxu0 0.0
    %1947 = vmatpush1.xpose.msra.mxu0 0.0
    %1948 = vmatprep.subr.mxu0 0.0
    %1949 = vmatpush1.xpose.msra.mxu0 0.0
    %1950 = vmatprep.subr.mxu0 0.0
    %1951 = vmatpush1.xpose.msra.mxu0 0.0
    %1952 = vmatprep.subr.mxu0 0.0
    %1953 = vmatpush1.xpose.msra.mxu0 0.0
    %1954 = vmatprep.subr.mxu0 0.0
    %1955 = vmatpush1.xpose.msra.mxu0 0.0
    %1956 = vmatprep.subr.mxu0 0.0
    %1957 = vmatpush1.xpose.msra.mxu0 0.0
    %1958 = vmatprep.subr.mxu0 0.0
    %1959 = vmatpush1.xpose.msra.mxu0 0.0
    %1960 = vmatprep.subr.mxu0 0.0
    %1961 = vmatpush1.xpose.msra.mxu0 0.0
    %1962 = vmatprep.subr.mxu0 0.0
    %1963 = vmatpush1.xpose.msra.mxu0 0.0
    %1964 = vmatprep.subr.mxu0 0.0
    %1965 = vmatpush1.xpose.msra.mxu0 0.0
    %1966 = vmatprep.subr.mxu0 0.0
    %1967 = vmatpush1.xpose.msra.mxu0 0.0
    %1968 = vmatprep.subr.mxu0 0.0
    %1969 = vmatpush1.xpose.msra.mxu0 0.0
    %1970 = vmatprep.subr.mxu0 0.0
    %1971 = vmatpush1.xpose.msra.mxu0 0.0
    %1972 = vmatprep.subr.mxu0 0.0
    %1973 = vmatpush1.xpose.msra.mxu0 0.0
    %1974 = vmatprep.subr.mxu0 0.0
    %1975 = vmatpush1.xpose.msra.mxu0 0.0
    %1976 = vmatprep.mubr.f32.mxu0 0.0
    %1977 = vmatmul.mubr.f32.gmra.mrb[0].mxu0 %v1908
    %v1978 = vpop.f32.mrb[0].mxu0
    %v1979 = vadd.f32 0.0, %v1978
    %v1980 = vpop.f32.mrb[0].mxu0
    %1981 = vdwg.mxu0
    %1982 = vrot.lane.b32.xlu0 %v168, 116
    %v1983 = vpop.permute.xlu0 %1982
    %1984 = vrot.lane.b32.xlu0 %v168, 108
    %v1985 = vpop.permute.xlu0 %1984
    %v1986 = vsel %vm190, %v1983, 0
    %v1988 = vsel %vm190, %v1985, 0
    %1990 = vmatprep.subr.mxu0 0.0
    %1991 = vmatpush1.xpose.msra.mxu0 %v1988
    %1992 = vmatprep.subr.mxu0 0.0
    %1993 = vmatpush1.xpose.msra.mxu0 0.0
    %1994 = vmatprep.subr.mxu0 0.0
    %1995 = vmatpush1.xpose.msra.mxu0 0.0
    %1996 = vmatprep.subr.mxu0 0.0
    %1997 = vmatpush1.xpose.msra.mxu0 0.0
    %1998 = vmatprep.subr.mxu0 0.0
    %1999 = vmatpush1.xpose.msra.mxu0 0.0
    %2000 = vmatprep.subr.mxu0 0.0
    %2001 = vmatpush1.xpose.msra.mxu0 0.0
    %2002 = vmatprep.subr.mxu0 0.0
    %2003 = vmatpush1.xpose.msra.mxu0 0.0
    %2004 = vmatprep.subr.mxu0 0.0
    %2005 = vmatpush1.xpose.msra.mxu0 0.0
    %2006 = vmatprep.subr.mxu0 0.0
    %2007 = vmatpush1.xpose.msra.mxu0 0.0
    %2008 = vmatprep.subr.mxu0 0.0
    %2009 = vmatpush1.xpose.msra.mxu0 0.0
    %2010 = vmatprep.subr.mxu0 0.0
    %2011 = vmatpush1.xpose.msra.mxu0 0.0
    %2012 = vmatprep.subr.mxu0 0.0
    %2013 = vmatpush1.xpose.msra.mxu0 0.0
    %2014 = vmatprep.subr.mxu0 0.0
    %2015 = vmatpush1.xpose.msra.mxu0 0.0
    %2016 = vmatprep.subr.mxu0 0.0
    %2017 = vmatpush1.xpose.msra.mxu0 0.0
    %2018 = vmatprep.subr.mxu0 0.0
    %2019 = vmatpush1.xpose.msra.mxu0 0.0
    %2020 = vmatprep.subr.mxu0 0.0
    %2021 = vmatpush1.xpose.msra.mxu0 0.0
    %2022 = vmatprep.subr.mxu0 0.0
    %2023 = vmatpush1.xpose.msra.mxu0 0.0
    %2024 = vmatprep.subr.mxu0 0.0
    %2025 = vmatpush1.xpose.msra.mxu0 0.0
    %2026 = vmatprep.subr.mxu0 0.0
    %2027 = vmatpush1.xpose.msra.mxu0 0.0
    %2028 = vmatprep.subr.mxu0 0.0
    %2029 = vmatpush1.xpose.msra.mxu0 0.0
    %2030 = vmatprep.subr.mxu0 0.0
    %2031 = vmatpush1.xpose.msra.mxu0 0.0
    %2032 = vmatprep.subr.mxu0 0.0
    %2033 = vmatpush1.xpose.msra.mxu0 0.0
    %2034 = vmatprep.subr.mxu0 0.0
    %2035 = vmatpush1.xpose.msra.mxu0 0.0
    %2036 = vmatprep.subr.mxu0 0.0
    %2037 = vmatpush1.xpose.msra.mxu0 0.0
    %2038 = vmatprep.subr.mxu0 0.0
    %2039 = vmatpush1.xpose.msra.mxu0 0.0
    %2040 = vmatprep.subr.mxu0 0.0
    %2041 = vmatpush1.xpose.msra.mxu0 0.0
    %2042 = vmatprep.subr.mxu0 0.0
    %2043 = vmatpush1.xpose.msra.mxu0 0.0
    %2044 = vmatprep.subr.mxu0 0.0
    %2045 = vmatpush1.xpose.msra.mxu0 0.0
    %2046 = vmatprep.subr.mxu0 0.0
    %2047 = vmatpush1.xpose.msra.mxu0 0.0
    %2048 = vmatprep.subr.mxu0 0.0
    %2049 = vmatpush1.xpose.msra.mxu0 0.0
    %2050 = vmatprep.subr.mxu0 0.0
    %2051 = vmatpush1.xpose.msra.mxu0 0.0
    %2052 = vmatprep.subr.mxu0 0.0
    %2053 = vmatpush1.xpose.msra.mxu0 0.0
    %2054 = vmatprep.mubr.f32.mxu0 0.0
    %2055 = vmatmul.mubr.f32.gmra.mrb[0].mxu0 %v1986
    %v2056 = vpop.f32.mrb[0].mxu0
    %v2057 = vadd.f32 0.0, %v2056
    %v2058 = vpop.f32.mrb[0].mxu0
    %2059 = vdwg.mxu0
    %2060 = vrot.lane.b32.xlu0 %v173, 116
    %v2061 = vpop.permute.xlu0 %2060
    %2062 = vrot.lane.b32.xlu0 %v173, 108
    %v2063 = vpop.permute.xlu0 %2062
    %v2064 = vsel %vm190, %v2061, 0
    %v2066 = vsel %vm190, %v2063, 0
    %2068 = vmatprep.subr.mxu0 0.0
    %2069 = vmatpush1.xpose.msra.mxu0 %v2066
    %2070 = vmatprep.subr.mxu0 0.0
    %2071 = vmatpush1.xpose.msra.mxu0 0.0
    %2072 = vmatprep.subr.mxu0 0.0
    %2073 = vmatpush1.xpose.msra.mxu0 0.0
    %2074 = vmatprep.subr.mxu0 0.0
    %2075 = vmatpush1.xpose.msra.mxu0 0.0
    %2076 = vmatprep.subr.mxu0 0.0
    %2077 = vmatpush1.xpose.msra.mxu0 0.0
    %2078 = vmatprep.subr.mxu0 0.0
    %2079 = vmatpush1.xpose.msra.mxu0 0.0
    %2080 = vmatprep.subr.mxu0 0.0
    %2081 = vmatpush1.xpose.msra.mxu0 0.0
    %2082 = vmatprep.subr.mxu0 0.0
    %2083 = vmatpush1.xpose.msra.mxu0 0.0
    %2084 = vmatprep.subr.mxu0 0.0
    %2085 = vmatpush1.xpose.msra.mxu0 0.0
    %2086 = vmatprep.subr.mxu0 0.0
    %2087 = vmatpush1.xpose.msra.mxu0 0.0
    %2088 = vmatprep.subr.mxu0 0.0
    %2089 = vmatpush1.xpose.msra.mxu0 0.0
    %2090 = vmatprep.subr.mxu0 0.0
    %2091 = vmatpush1.xpose.msra.mxu0 0.0
    %2092 = vmatprep.subr.mxu0 0.0
    %2093 = vmatpush1.xpose.msra.mxu0 0.0
    %2094 = vmatprep.subr.mxu0 0.0
    %2095 = vmatpush1.xpose.msra.mxu0 0.0
    %2096 = vmatprep.subr.mxu0 0.0
    %2097 = vmatpush1.xpose.msra.mxu0 0.0
    %2098 = vmatprep.subr.mxu0 0.0
    %2099 = vmatpush1.xpose.msra.mxu0 0.0
    %2100 = vmatprep.subr.mxu0 0.0
    %2101 = vmatpush1.xpose.msra.mxu0 0.0
    %2102 = vmatprep.subr.mxu0 0.0
    %2103 = vmatpush1.xpose.msra.mxu0 0.0
    %2104 = vmatprep.subr.mxu0 0.0
    %2105 = vmatpush1.xpose.msra.mxu0 0.0
    %2106 = vmatprep.subr.mxu0 0.0
    %2107 = vmatpush1.xpose.msra.mxu0 0.0
    %2108 = vmatprep.subr.mxu0 0.0
    %2109 = vmatpush1.xpose.msra.mxu0 0.0
    %2110 = vmatprep.subr.mxu0 0.0
    %2111 = vmatpush1.xpose.msra.mxu0 0.0
    %2112 = vmatprep.subr.mxu0 0.0
    %2113 = vmatpush1.xpose.msra.mxu0 0.0
    %2114 = vmatprep.subr.mxu0 0.0
    %2115 = vmatpush1.xpose.msra.mxu0 0.0
    %2116 = vmatprep.subr.mxu0 0.0
    %2117 = vmatpush1.xpose.msra.mxu0 0.0
    %2118 = vmatprep.subr.mxu0 0.0
    %2119 = vmatpush1.xpose.msra.mxu0 0.0
    %2120 = vmatprep.subr.mxu0 0.0
    %2121 = vmatpush1.xpose.msra.mxu0 0.0
    %2122 = vmatprep.subr.mxu0 0.0
    %2123 = vmatpush1.xpose.msra.mxu0 0.0
    %2124 = vmatprep.subr.mxu0 0.0
    %2125 = vmatpush1.xpose.msra.mxu0 0.0
    %2126 = vmatprep.subr.mxu0 0.0
    %2127 = vmatpush1.xpose.msra.mxu0 0.0
    %2128 = vmatprep.subr.mxu0 0.0
    %2129 = vmatpush1.xpose.msra.mxu0 0.0
    %2130 = vmatprep.subr.mxu0 0.0
    %2131 = vmatpush1.xpose.msra.mxu0 0.0
    %2132 = vmatprep.mubr.f32.mxu0 0.0
    %2133 = vmatmul.mubr.f32.gmra.mrb[0].mxu0 %v2064
    %v2134 = vpop.f32.mrb[0].mxu0
    %v2135 = vadd.f32 0.0, %v2134
    %v2136 = vpop.f32.mrb[0].mxu0
    %2137 = vdwg.mxu0
    %v2138 = vsel %vm176, %v1589, -inf
    %2139 = vmax.xlane.f32.xlu0 %v2138
    %v2140 = vpop.xlane.xlu0 %2139
    %v2141 = vsel %vm176, %v1667, -inf
    %2142 = vmax.xlane.f32.xlu0 %v2141
    %v2143 = vpop.xlane.xlu0 %2142
    %v2144 = vsel %vm176, %v1745, -inf
    %2145 = vmax.xlane.f32.xlu0 %v2144
    %v2146 = vpop.xlane.xlu0 %2145
    %v2147 = vsel %vm176, %v1823, -inf
    %2148 = vmax.xlane.f32.xlu0 %v2147
    %v2149 = vpop.xlane.xlu0 %2148
    %v2150 = vsel %vm176, %v1901, -inf
    %2151 = vmax.xlane.f32.xlu0 %v2150
    %v2152 = vpop.xlane.xlu0 %2151
    %v2153 = vsel %vm176, %v1979, -inf
    %2154 = vmax.xlane.f32.xlu0 %v2153
    %v2155 = vpop.xlane.xlu0 %2154
    %v2156 = vsel %vm176, %v2057, -inf
    %2157 = vmax.xlane.f32.xlu0 %v2156
    %v2158 = vpop.xlane.xlu0 %2157
    %v2159 = vsel %vm176, %v2135, -inf
    %2160 = vmax.xlane.f32.xlu0 %v2159
    %v2161 = vpop.xlane.xlu0 %2160
    %v2162 = vsub.f32 %v1589, %v2140
    %v2163 = vsub.f32 %v1667, %v2143
    %v2164 = vsub.f32 %v1745, %v2146
    %v2165 = vsub.f32 %v1823, %v2149
    %v2166 = vsub.f32 %v1901, %v2152
    %v2167 = vsub.f32 %v1979, %v2155
    %v2168 = vsub.f32 %v2057, %v2158
    %v2169 = vsub.f32 %v2135, %v2161
    %v2170 = vmul.f32 %v2162, 1.442695
    %v2171 = vpow.pop %v2170
    %v2172 = vmul.f32 %v2163, 1.442695
    %v2173 = vpow.pop %v2172
    %v2174 = vmul.f32 %v2164, 1.442695
    %v2175 = vpow.pop %v2174
    %v2176 = vmul.f32 %v2165, 1.442695
    %v2177 = vpow.pop %v2176
    %v2178 = vmul.f32 %v2166, 1.442695
    %v2179 = vpow.pop %v2178
    %v2180 = vmul.f32 %v2167, 1.442695
    %v2181 = vpow.pop %v2180
    %v2182 = vmul.f32 %v2168, 1.442695
    %v2183 = vpow.pop %v2182
    %v2184 = vmul.f32 %v2169, 1.442695
    %v2185 = vpow.pop %v2184
    %v2186 = vsel %vm176, %v2171, 0.0
    %2187 = vadd.xlane.f32.xlu0 %v2186
    %v2188 = vpop.xlane.xlu0 %2187
    %v2189 = vsel %vm176, %v2173, 0.0
    %2190 = vadd.xlane.f32.xlu0 %v2189
    %v2191 = vpop.xlane.xlu0 %2190
    %v2192 = vsel %vm176, %v2175, 0.0
    %2193 = vadd.xlane.f32.xlu0 %v2192
    %v2194 = vpop.xlane.xlu0 %2193
    %v2195 = vsel %vm176, %v2177, 0.0
    %2196 = vadd.xlane.f32.xlu0 %v2195
    %v2197 = vpop.xlane.xlu0 %2196
    %v2198 = vsel %vm176, %v2179, 0.0
    %2199 = vadd.xlane.f32.xlu0 %v2198
    %v2200 = vpop.xlane.xlu0 %2199
    %v2201 = vsel %vm176, %v2181, 0.0
    %2202 = vadd.xlane.f32.xlu0 %v2201
    %v2203 = vpop.xlane.xlu0 %2202
    %v2204 = vsel %vm176, %v2183, 0.0
    %2205 = vadd.xlane.f32.xlu0 %v2204
    %v2206 = vpop.xlane.xlu0 %2205
    %v2207 = vsel %vm176, %v2185, 0.0
    %2208 = vadd.xlane.f32.xlu0 %v2207
    %v2209 = vpop.xlane.xlu0 %2208
    %v2210 = vrcp.pop %v2188
    %v2211 = vmul.f32 %v2171, %v2210
    %v2212 = vrcp.pop %v2191
    %v2213 = vmul.f32 %v2173, %v2212
    %v2214 = vrcp.pop %v2194
    %v2215 = vmul.f32 %v2175, %v2214
    %v2216 = vrcp.pop %v2197
    %v2217 = vmul.f32 %v2177, %v2216
    %v2218 = vrcp.pop %v2200
    %v2219 = vmul.f32 %v2179, %v2218
    %v2220 = vrcp.pop %v2203
    %v2221 = vmul.f32 %v2181, %v2220
    %v2222 = vrcp.pop %v2206
    %v2223 = vmul.f32 %v2183, %v2222
    %v2224 = vrcp.pop %v2209
    %v2225 = vmul.f32 %v2185, %v2224
    %2226 = vrot.lane.b32.xlu0 %v138, 100
    %v2227 = vpop.permute.xlu0 %2226
    %v2230 = vsel %vm176, %v2211, 0
    %2232 = vmatprep.subr.mxu0 0.0
    %2233 = vmatpush1.msra.mxu0 %v2227
    %2234 = vmatprep.subr.mxu0 0.0
    %2235 = vmatpush1.msra.mxu0 0.0
    %2236 = vmatprep.subr.mxu0 0.0
    %2237 = vmatpush1.msra.mxu0 0.0
    %2238 = vmatprep.subr.mxu0 0.0
    %2239 = vmatpush1.msra.mxu0 0.0
    %2240 = vmatprep.subr.mxu0 0.0
    %2241 = vmatpush1.msra.mxu0 0.0
    %2242 = vmatprep.subr.mxu0 0.0
    %2243 = vmatpush1.msra.mxu0 0.0
    %2244 = vmatprep.subr.mxu0 0.0
    %2245 = vmatpush1.msra.mxu0 0.0
    %2246 = vmatprep.subr.mxu0 0.0
    %2247 = vmatpush1.msra.mxu0 0.0
    %2248 = vmatprep.subr.mxu0 0.0
    %2249 = vmatpush1.msra.mxu0 0.0
    %2250 = vmatprep.subr.mxu0 0.0
    %2251 = vmatpush1.msra.mxu0 0.0
    %2252 = vmatprep.subr.mxu0 0.0
    %2253 = vmatpush1.msra.mxu0 0.0
    %2254 = vmatprep.subr.mxu0 0.0
    %2255 = vmatpush1.msra.mxu0 0.0
    %2256 = vmatprep.subr.mxu0 0.0
    %2257 = vmatpush1.msra.mxu0 0.0
    %2258 = vmatprep.subr.mxu0 0.0
    %2259 = vmatpush1.msra.mxu0 0.0
    %2260 = vmatprep.subr.mxu0 0.0
    %2261 = vmatpush1.msra.mxu0 0.0
    %2262 = vmatprep.subr.mxu0 0.0
    %2263 = vmatpush1.msra.mxu0 0.0
    %2264 = vmatprep.subr.mxu0 0.0
    %2265 = vmatpush1.msra.mxu0 0.0
    %2266 = vmatprep.subr.mxu0 0.0
    %2267 = vmatpush1.msra.mxu0 0.0
    %2268 = vmatprep.subr.mxu0 0.0
    %2269 = vmatpush1.msra.mxu0 0.0
    %2270 = vmatprep.subr.mxu0 0.0
    %2271 = vmatpush1.msra.mxu0 0.0
    %2272 = vmatprep.subr.mxu0 0.0
    %2273 = vmatpush1.msra.mxu0 0.0
    %2274 = vmatprep.subr.mxu0 0.0
    %2275 = vmatpush1.msra.mxu0 0.0
    %2276 = vmatprep.subr.mxu0 0.0
    %2277 = vmatpush1.msra.mxu0 0.0
    %2278 = vmatprep.subr.mxu0 0.0
    %2279 = vmatpush1.msra.mxu0 0.0
    %2280 = vmatprep.subr.mxu0 0.0
    %2281 = vmatpush1.msra.mxu0 0.0
    %2282 = vmatprep.subr.mxu0 0.0
    %2283 = vmatpush1.msra.mxu0 0.0
    %2284 = vmatprep.subr.mxu0 0.0
    %2285 = vmatpush1.msra.mxu0 0.0
    %2286 = vmatprep.subr.mxu0 0.0
    %2287 = vmatpush1.msra.mxu0 0.0
    %2288 = vmatprep.subr.mxu0 0.0
    %2289 = vmatpush1.msra.mxu0 0.0
    %2290 = vmatprep.subr.mxu0 0.0
    %2291 = vmatpush1.msra.mxu0 0.0
    %2292 = vmatprep.subr.mxu0 0.0
    %2293 = vmatpush1.msra.mxu0 0.0
    %2294 = vmatprep.subr.mxu0 0.0
    %2295 = vmatpush1.msra.mxu0 0.0
    %2296 = vmatprep.mubr.f32.mxu0 0.0
    %2297 = vmatmul.mubr.f32.gmra.mrb[0].mxu0 %v2230
    %v2298 = vpop.f32.mrb[0].mxu0
    %v2299 = vadd.f32 0.0, %v2298
    %v2300 = vpop.f32.mrb[0].mxu0
    %2301 = vdwg.mxu0
    %2302 = vrot.lane.b32.xlu0 %v143, 100
    %v2303 = vpop.permute.xlu0 %2302
    %v2306 = vsel %vm176, %v2213, 0
    %2308 = vmatprep.subr.mxu0 0.0
    %2309 = vmatpush1.msra.mxu0 %v2303
    %2310 = vmatprep.subr.mxu0 0.0
    %2311 = vmatpush1.msra.mxu0 0.0
    %2312 = vmatprep.subr.mxu0 0.0
    %2313 = vmatpush1.msra.mxu0 0.0
    %2314 = vmatprep.subr.mxu0 0.0
    %2315 = vmatpush1.msra.mxu0 0.0
    %2316 = vmatprep.subr.mxu0 0.0
    %2317 = vmatpush1.msra.mxu0 0.0
    %2318 = vmatprep.subr.mxu0 0.0
    %2319 = vmatpush1.msra.mxu0 0.0
    %2320 = vmatprep.subr.mxu0 0.0
    %2321 = vmatpush1.msra.mxu0 0.0
    %2322 = vmatprep.subr.mxu0 0.0
    %2323 = vmatpush1.msra.mxu0 0.0
    %2324 = vmatprep.subr.mxu0 0.0
    %2325 = vmatpush1.msra.mxu0 0.0
    %2326 = vmatprep.subr.mxu0 0.0
    %2327 = vmatpush1.msra.mxu0 0.0
    %2328 = vmatprep.subr.mxu0 0.0
    %2329 = vmatpush1.msra.mxu0 0.0
    %2330 = vmatprep.subr.mxu0 0.0
    %2331 = vmatpush1.msra.mxu0 0.0
    %2332 = vmatprep.subr.mxu0 0.0
    %2333 = vmatpush1.msra.mxu0 0.0
    %2334 = vmatprep.subr.mxu0 0.0
    %2335 = vmatpush1.msra.mxu0 0.0
    %2336 = vmatprep.subr.mxu0 0.0
    %2337 = vmatpush1.msra.mxu0 0.0
    %2338 = vmatprep.subr.mxu0 0.0
    %2339 = vmatpush1.msra.mxu0 0.0
    %2340 = vmatprep.subr.mxu0 0.0
    %2341 = vmatpush1.msra.mxu0 0.0
    %2342 = vmatprep.subr.mxu0 0.0
    %2343 = vmatpush1.msra.mxu0 0.0
    %2344 = vmatprep.subr.mxu0 0.0
    %2345 = vmatpush1.msra.mxu0 0.0
    %2346 = vmatprep.subr.mxu0 0.0
    %2347 = vmatpush1.msra.mxu0 0.0
    %2348 = vmatprep.subr.mxu0 0.0
    %2349 = vmatpush1.msra.mxu0 0.0
    %2350 = vmatprep.subr.mxu0 0.0
    %2351 = vmatpush1.msra.mxu0 0.0
    %2352 = vmatprep.subr.mxu0 0.0
    %2353 = vmatpush1.msra.mxu0 0.0
    %2354 = vmatprep.subr.mxu0 0.0
    %2355 = vmatpush1.msra.mxu0 0.0
    %2356 = vmatprep.subr.mxu0 0.0
    %2357 = vmatpush1.msra.mxu0 0.0
    %2358 = vmatprep.subr.mxu0 0.0
    %2359 = vmatpush1.msra.mxu0 0.0
    %2360 = vmatprep.subr.mxu0 0.0
    %2361 = vmatpush1.msra.mxu0 0.0
    %2362 = vmatprep.subr.mxu0 0.0
    %2363 = vmatpush1.msra.mxu0 0.0
    %2364 = vmatprep.subr.mxu0 0.0
    %2365 = vmatpush1.msra.mxu0 0.0
    %2366 = vmatprep.subr.mxu0 0.0
    %2367 = vmatpush1.msra.mxu0 0.0
    %2368 = vmatprep.subr.mxu0 0.0
    %2369 = vmatpush1.msra.mxu0 0.0
    %2370 = vmatprep.subr.mxu0 0.0
    %2371 = vmatpush1.msra.mxu0 0.0
    %2372 = vmatprep.mubr.f32.mxu0 0.0
    %2373 = vmatmul.mubr.f32.gmra.mrb[0].mxu0 %v2306
    %v2374 = vpop.f32.mrb[0].mxu0
    %v2375 = vadd.f32 0.0, %v2374
    %v2376 = vpop.f32.mrb[0].mxu0
    %2377 = vdwg.mxu0
    %2378 = vrot.lane.b32.xlu0 %v148, 100
    %v2379 = vpop.permute.xlu0 %2378
    %v2382 = vsel %vm176, %v2215, 0
    %2384 = vmatprep.subr.mxu0 0.0
    %2385 = vmatpush1.msra.mxu0 %v2379
    %2386 = vmatprep.subr.mxu0 0.0
    %2387 = vmatpush1.msra.mxu0 0.0
    %2388 = vmatprep.subr.mxu0 0.0
    %2389 = vmatpush1.msra.mxu0 0.0
    %2390 = vmatprep.subr.mxu0 0.0
    %2391 = vmatpush1.msra.mxu0 0.0
    %2392 = vmatprep.subr.mxu0 0.0
    %2393 = vmatpush1.msra.mxu0 0.0
    %2394 = vmatprep.subr.mxu0 0.0
    %2395 = vmatpush1.msra.mxu0 0.0
    %2396 = vmatprep.subr.mxu0 0.0
    %2397 = vmatpush1.msra.mxu0 0.0
    %2398 = vmatprep.subr.mxu0 0.0
    %2399 = vmatpush1.msra.mxu0 0.0
    %2400 = vmatprep.subr.mxu0 0.0
    %2401 = vmatpush1.msra.mxu0 0.0
    %2402 = vmatprep.subr.mxu0 0.0
    %2403 = vmatpush1.msra.mxu0 0.0
    %2404 = vmatprep.subr.mxu0 0.0
    %2405 = vmatpush1.msra.mxu0 0.0
    %2406 = vmatprep.subr.mxu0 0.0
    %2407 = vmatpush1.msra.mxu0 0.0
    %2408 = vmatprep.subr.mxu0 0.0
    %2409 = vmatpush1.msra.mxu0 0.0
    %2410 = vmatprep.subr.mxu0 0.0
    %2411 = vmatpush1.msra.mxu0 0.0
    %2412 = vmatprep.subr.mxu0 0.0
    %2413 = vmatpush1.msra.mxu0 0.0
    %2414 = vmatprep.subr.mxu0 0.0
    %2415 = vmatpush1.msra.mxu0 0.0
    %2416 = vmatprep.subr.mxu0 0.0
    %2417 = vmatpush1.msra.mxu0 0.0
    %2418 = vmatprep.subr.mxu0 0.0
    %2419 = vmatpush1.msra.mxu0 0.0
    %2420 = vmatprep.subr.mxu0 0.0
    %2421 = vmatpush1.msra.mxu0 0.0
    %2422 = vmatprep.subr.mxu0 0.0
    %2423 = vmatpush1.msra.mxu0 0.0
    %2424 = vmatprep.subr.mxu0 0.0
    %2425 = vmatpush1.msra.mxu0 0.0
    %2426 = vmatprep.subr.mxu0 0.0
    %2427 = vmatpush1.msra.mxu0 0.0
    %2428 = vmatprep.subr.mxu0 0.0
    %2429 = vmatpush1.msra.mxu0 0.0
    %2430 = vmatprep.subr.mxu0 0.0
    %2431 = vmatpush1.msra.mxu0 0.0
    %2432 = vmatprep.subr.mxu0 0.0
    %2433 = vmatpush1.msra.mxu0 0.0
    %2434 = vmatprep.subr.mxu0 0.0
    %2435 = vmatpush1.msra.mxu0 0.0
    %2436 = vmatprep.subr.mxu0 0.0
    %2437 = vmatpush1.msra.mxu0 0.0
    %2438 = vmatprep.subr.mxu0 0.0
    %2439 = vmatpush1.msra.mxu0 0.0
    %2440 = vmatprep.subr.mxu0 0.0
    %2441 = vmatpush1.msra.mxu0 0.0
    %2442 = vmatprep.subr.mxu0 0.0
    %2443 = vmatpush1.msra.mxu0 0.0
    %2444 = vmatprep.subr.mxu0 0.0
    %2445 = vmatpush1.msra.mxu0 0.0
    %2446 = vmatprep.subr.mxu0 0.0
    %2447 = vmatpush1.msra.mxu0 0.0
    %2448 = vmatprep.mubr.f32.mxu0 0.0
    %2449 = vmatmul.mubr.f32.gmra.mrb[0].mxu0 %v2382
    %v2450 = vpop.f32.mrb[0].mxu0
    %v2451 = vadd.f32 0.0, %v2450
    %v2452 = vpop.f32.mrb[0].mxu0
    %2453 = vdwg.mxu0
    %2454 = vrot.lane.b32.xlu0 %v153, 100
    %v2455 = vpop.permute.xlu0 %2454
    %v2458 = vsel %vm176, %v2217, 0
    %2460 = vmatprep.subr.mxu0 0.0
    %2461 = vmatpush1.msra.mxu0 %v2455
    %2462 = vmatprep.subr.mxu0 0.0
    %2463 = vmatpush1.msra.mxu0 0.0
    %2464 = vmatprep.subr.mxu0 0.0
    %2465 = vmatpush1.msra.mxu0 0.0
    %2466 = vmatprep.subr.mxu0 0.0
    %2467 = vmatpush1.msra.mxu0 0.0
    %2468 = vmatprep.subr.mxu0 0.0
    %2469 = vmatpush1.msra.mxu0 0.0
    %2470 = vmatprep.subr.mxu0 0.0
    %2471 = vmatpush1.msra.mxu0 0.0
    %2472 = vmatprep.subr.mxu0 0.0
    %2473 = vmatpush1.msra.mxu0 0.0
    %2474 = vmatprep.subr.mxu0 0.0
    %2475 = vmatpush1.msra.mxu0 0.0
    %2476 = vmatprep.subr.mxu0 0.0
    %2477 = vmatpush1.msra.mxu0 0.0
    %2478 = vmatprep.subr.mxu0 0.0
    %2479 = vmatpush1.msra.mxu0 0.0
    %2480 = vmatprep.subr.mxu0 0.0
    %2481 = vmatpush1.msra.mxu0 0.0
    %2482 = vmatprep.subr.mxu0 0.0
    %2483 = vmatpush1.msra.mxu0 0.0
    %2484 = vmatprep.subr.mxu0 0.0
    %2485 = vmatpush1.msra.mxu0 0.0
    %2486 = vmatprep.subr.mxu0 0.0
    %2487 = vmatpush1.msra.mxu0 0.0
    %2488 = vmatprep.subr.mxu0 0.0
    %2489 = vmatpush1.msra.mxu0 0.0
    %2490 = vmatprep.subr.mxu0 0.0
    %2491 = vmatpush1.msra.mxu0 0.0
    %2492 = vmatprep.subr.mxu0 0.0
    %2493 = vmatpush1.msra.mxu0 0.0
    %2494 = vmatprep.subr.mxu0 0.0
    %2495 = vmatpush1.msra.mxu0 0.0
    %2496 = vmatprep.subr.mxu0 0.0
    %2497 = vmatpush1.msra.mxu0 0.0
    %2498 = vmatprep.subr.mxu0 0.0
    %2499 = vmatpush1.msra.mxu0 0.0
    %2500 = vmatprep.subr.mxu0 0.0
    %2501 = vmatpush1.msra.mxu0 0.0
    %2502 = vmatprep.subr.mxu0 0.0
    %2503 = vmatpush1.msra.mxu0 0.0
    %2504 = vmatprep.subr.mxu0 0.0
    %2505 = vmatpush1.msra.mxu0 0.0
    %2506 = vmatprep.subr.mxu0 0.0
    %2507 = vmatpush1.msra.mxu0 0.0
    %2508 = vmatprep.subr.mxu0 0.0
    %2509 = vmatpush1.msra.mxu0 0.0
    %2510 = vmatprep.subr.mxu0 0.0
    %2511 = vmatpush1.msra.mxu0 0.0
    %2512 = vmatprep.subr.mxu0 0.0
    %2513 = vmatpush1.msra.mxu0 0.0
    %2514 = vmatprep.subr.mxu0 0.0
    %2515 = vmatpush1.msra.mxu0 0.0
    %2516 = vmatprep.subr.mxu0 0.0
    %2517 = vmatpush1.msra.mxu0 0.0
    %2518 = vmatprep.subr.mxu0 0.0
    %2519 = vmatpush1.msra.mxu0 0.0
    %2520 = vmatprep.subr.mxu0 0.0
    %2521 = vmatpush1.msra.mxu0 0.0
    %2522 = vmatprep.subr.mxu0 0.0
    %2523 = vmatpush1.msra.mxu0 0.0
    %2524 = vmatprep.mubr.f32.mxu0 0.0
    %2525 = vmatmul.mubr.f32.gmra.mrb[0].mxu0 %v2458
    %v2526 = vpop.f32.mrb[0].mxu0
    %v2527 = vadd.f32 0.0, %v2526
    %v2528 = vpop.f32.mrb[0].mxu0
    %2529 = vdwg.mxu0
    %2530 = vrot.lane.b32.xlu0 %v158, 100
    %v2531 = vpop.permute.xlu0 %2530
    %v2534 = vsel %vm176, %v2219, 0
    %2536 = vmatprep.subr.mxu0 0.0
    %2537 = vmatpush1.msra.mxu0 %v2531
    %2538 = vmatprep.subr.mxu0 0.0
    %2539 = vmatpush1.msra.mxu0 0.0
    %2540 = vmatprep.subr.mxu0 0.0
    %2541 = vmatpush1.msra.mxu0 0.0
    %2542 = vmatprep.subr.mxu0 0.0
    %2543 = vmatpush1.msra.mxu0 0.0
    %2544 = vmatprep.subr.mxu0 0.0
    %2545 = vmatpush1.msra.mxu0 0.0
    %2546 = vmatprep.subr.mxu0 0.0
    %2547 = vmatpush1.msra.mxu0 0.0
    %2548 = vmatprep.subr.mxu0 0.0
    %2549 = vmatpush1.msra.mxu0 0.0
    %2550 = vmatprep.subr.mxu0 0.0
    %2551 = vmatpush1.msra.mxu0 0.0
    %2552 = vmatprep.subr.mxu0 0.0
    %2553 = vmatpush1.msra.mxu0 0.0
    %2554 = vmatprep.subr.mxu0 0.0
    %2555 = vmatpush1.msra.mxu0 0.0
    %2556 = vmatprep.subr.mxu0 0.0
    %2557 = vmatpush1.msra.mxu0 0.0
    %2558 = vmatprep.subr.mxu0 0.0
    %2559 = vmatpush1.msra.mxu0 0.0
    %2560 = vmatprep.subr.mxu0 0.0
    %2561 = vmatpush1.msra.mxu0 0.0
    %2562 = vmatprep.subr.mxu0 0.0
    %2563 = vmatpush1.msra.mxu0 0.0
    %2564 = vmatprep.subr.mxu0 0.0
    %2565 = vmatpush1.msra.mxu0 0.0
    %2566 = vmatprep.subr.mxu0 0.0
    %2567 = vmatpush1.msra.mxu0 0.0
    %2568 = vmatprep.subr.mxu0 0.0
    %2569 = vmatpush1.msra.mxu0 0.0
    %2570 = vmatprep.subr.mxu0 0.0
    %2571 = vmatpush1.msra.mxu0 0.0
    %2572 = vmatprep.subr.mxu0 0.0
    %2573 = vmatpush1.msra.mxu0 0.0
    %2574 = vmatprep.subr.mxu0 0.0
    %2575 = vmatpush1.msra.mxu0 0.0
    %2576 = vmatprep.subr.mxu0 0.0
    %2577 = vmatpush1.msra.mxu0 0.0
    %2578 = vmatprep.subr.mxu0 0.0
    %2579 = vmatpush1.msra.mxu0 0.0
    %2580 = vmatprep.subr.mxu0 0.0
    %2581 = vmatpush1.msra.mxu0 0.0
    %2582 = vmatprep.subr.mxu0 0.0
    %2583 = vmatpush1.msra.mxu0 0.0
    %2584 = vmatprep.subr.mxu0 0.0
    %2585 = vmatpush1.msra.mxu0 0.0
    %2586 = vmatprep.subr.mxu0 0.0
    %2587 = vmatpush1.msra.mxu0 0.0
    %2588 = vmatprep.subr.mxu0 0.0
    %2589 = vmatpush1.msra.mxu0 0.0
    %2590 = vmatprep.subr.mxu0 0.0
    %2591 = vmatpush1.msra.mxu0 0.0
    %2592 = vmatprep.subr.mxu0 0.0
    %2593 = vmatpush1.msra.mxu0 0.0
    %2594 = vmatprep.subr.mxu0 0.0
    %2595 = vmatpush1.msra.mxu0 0.0
    %2596 = vmatprep.subr.mxu0 0.0
    %2597 = vmatpush1.msra.mxu0 0.0
    %2598 = vmatprep.subr.mxu0 0.0
    %2599 = vmatpush1.msra.mxu0 0.0
    %2600 = vmatprep.mubr.f32.mxu0 0.0
    %2601 = vmatmul.mubr.f32.gmra.mrb[0].mxu0 %v2534
    %v2602 = vpop.f32.mrb[0].mxu0
    %v2603 = vadd.f32 0.0, %v2602
    %v2604 = vpop.f32.mrb[0].mxu0
    %2605 = vdwg.mxu0
    %2606 = vrot.lane.b32.xlu0 %v163, 100
    %v2607 = vpop.permute.xlu0 %2606
    %v2610 = vsel %vm176, %v2221, 0
    %2612 = vmatprep.subr.mxu0 0.0
    %2613 = vmatpush1.msra.mxu0 %v2607
    %2614 = vmatprep.subr.mxu0 0.0
    %2615 = vmatpush1.msra.mxu0 0.0
    %2616 = vmatprep.subr.mxu0 0.0
    %2617 = vmatpush1.msra.mxu0 0.0
    %2618 = vmatprep.subr.mxu0 0.0
    %2619 = vmatpush1.msra.mxu0 0.0
    %2620 = vmatprep.subr.mxu0 0.0
    %2621 = vmatpush1.msra.mxu0 0.0
    %2622 = vmatprep.subr.mxu0 0.0
    %2623 = vmatpush1.msra.mxu0 0.0
    %2624 = vmatprep.subr.mxu0 0.0
    %2625 = vmatpush1.msra.mxu0 0.0
    %2626 = vmatprep.subr.mxu0 0.0
    %2627 = vmatpush1.msra.mxu0 0.0
    %2628 = vmatprep.subr.mxu0 0.0
    %2629 = vmatpush1.msra.mxu0 0.0
    %2630 = vmatprep.subr.mxu0 0.0
    %2631 = vmatpush1.msra.mxu0 0.0
    %2632 = vmatprep.subr.mxu0 0.0
    %2633 = vmatpush1.msra.mxu0 0.0
    %2634 = vmatprep.subr.mxu0 0.0
    %2635 = vmatpush1.msra.mxu0 0.0
    %2636 = vmatprep.subr.mxu0 0.0
    %2637 = vmatpush1.msra.mxu0 0.0
    %2638 = vmatprep.subr.mxu0 0.0
    %2639 = vmatpush1.msra.mxu0 0.0
    %2640 = vmatprep.subr.mxu0 0.0
    %2641 = vmatpush1.msra.mxu0 0.0
    %2642 = vmatprep.subr.mxu0 0.0
    %2643 = vmatpush1.msra.mxu0 0.0
    %2644 = vmatprep.subr.mxu0 0.0
    %2645 = vmatpush1.msra.mxu0 0.0
    %2646 = vmatprep.subr.mxu0 0.0
    %2647 = vmatpush1.msra.mxu0 0.0
    %2648 = vmatprep.subr.mxu0 0.0
    %2649 = vmatpush1.msra.mxu0 0.0
    %2650 = vmatprep.subr.mxu0 0.0
    %2651 = vmatpush1.msra.mxu0 0.0
    %2652 = vmatprep.subr.mxu0 0.0
    %2653 = vmatpush1.msra.mxu0 0.0
    %2654 = vmatprep.subr.mxu0 0.0
    %2655 = vmatpush1.msra.mxu0 0.0
    %2656 = vmatprep.subr.mxu0 0.0
    %2657 = vmatpush1.msra.mxu0 0.0
    %2658 = vmatprep.subr.mxu0 0.0
    %2659 = vmatpush1.msra.mxu0 0.0
    %2660 = vmatprep.subr.mxu0 0.0
    %2661 = vmatpush1.msra.mxu0 0.0
    %2662 = vmatprep.subr.mxu0 0.0
    %2663 = vmatpush1.msra.mxu0 0.0
    %2664 = vmatprep.subr.mxu0 0.0
    %2665 = vmatpush1.msra.mxu0 0.0
    %2666 = vmatprep.subr.mxu0 0.0
    %2667 = vmatpush1.msra.mxu0 0.0
    %2668 = vmatprep.subr.mxu0 0.0
    %2669 = vmatpush1.msra.mxu0 0.0
    %2670 = vmatprep.subr.mxu0 0.0
    %2671 = vmatpush1.msra.mxu0 0.0
    %2672 = vmatprep.subr.mxu0 0.0
    %2673 = vmatpush1.msra.mxu0 0.0
    %2674 = vmatprep.subr.mxu0 0.0
    %2675 = vmatpush1.msra.mxu0 0.0
    %2676 = vmatprep.mubr.f32.mxu0 0.0
    %2677 = vmatmul.mubr.f32.gmra.mrb[0].mxu0 %v2610
    %v2678 = vpop.f32.mrb[0].mxu0
    %v2679 = vadd.f32 0.0, %v2678
    %v2680 = vpop.f32.mrb[0].mxu0
    %2681 = vdwg.mxu0
    %2682 = vrot.lane.b32.xlu0 %v168, 100
    %v2683 = vpop.permute.xlu0 %2682
    %v2686 = vsel %vm176, %v2223, 0
    %2688 = vmatprep.subr.mxu0 0.0
    %2689 = vmatpush1.msra.mxu0 %v2683
    %2690 = vmatprep.subr.mxu0 0.0
    %2691 = vmatpush1.msra.mxu0 0.0
    %2692 = vmatprep.subr.mxu0 0.0
    %2693 = vmatpush1.msra.mxu0 0.0
    %2694 = vmatprep.subr.mxu0 0.0
    %2695 = vmatpush1.msra.mxu0 0.0
    %2696 = vmatprep.subr.mxu0 0.0
    %2697 = vmatpush1.msra.mxu0 0.0
    %2698 = vmatprep.subr.mxu0 0.0
    %2699 = vmatpush1.msra.mxu0 0.0
    %2700 = vmatprep.subr.mxu0 0.0
    %2701 = vmatpush1.msra.mxu0 0.0
    %2702 = vmatprep.subr.mxu0 0.0
    %2703 = vmatpush1.msra.mxu0 0.0
    %2704 = vmatprep.subr.mxu0 0.0
    %2705 = vmatpush1.msra.mxu0 0.0
    %2706 = vmatprep.subr.mxu0 0.0
    %2707 = vmatpush1.msra.mxu0 0.0
    %2708 = vmatprep.subr.mxu0 0.0
    %2709 = vmatpush1.msra.mxu0 0.0
    %2710 = vmatprep.subr.mxu0 0.0
    %2711 = vmatpush1.msra.mxu0 0.0
    %2712 = vmatprep.subr.mxu0 0.0
    %2713 = vmatpush1.msra.mxu0 0.0
    %2714 = vmatprep.subr.mxu0 0.0
    %2715 = vmatpush1.msra.mxu0 0.0
    %2716 = vmatprep.subr.mxu0 0.0
    %2717 = vmatpush1.msra.mxu0 0.0
    %2718 = vmatprep.subr.mxu0 0.0
    %2719 = vmatpush1.msra.mxu0 0.0
    %2720 = vmatprep.subr.mxu0 0.0
    %2721 = vmatpush1.msra.mxu0 0.0
    %2722 = vmatprep.subr.mxu0 0.0
    %2723 = vmatpush1.msra.mxu0 0.0
    %2724 = vmatprep.subr.mxu0 0.0
    %2725 = vmatpush1.msra.mxu0 0.0
    %2726 = vmatprep.subr.mxu0 0.0
    %2727 = vmatpush1.msra.mxu0 0.0
    %2728 = vmatprep.subr.mxu0 0.0
    %2729 = vmatpush1.msra.mxu0 0.0
    %2730 = vmatprep.subr.mxu0 0.0
    %2731 = vmatpush1.msra.mxu0 0.0
    %2732 = vmatprep.subr.mxu0 0.0
    %2733 = vmatpush1.msra.mxu0 0.0
    %2734 = vmatprep.subr.mxu0 0.0
    %2735 = vmatpush1.msra.mxu0 0.0
    %2736 = vmatprep.subr.mxu0 0.0
    %2737 = vmatpush1.msra.mxu0 0.0
    %2738 = vmatprep.subr.mxu0 0.0
    %2739 = vmatpush1.msra.mxu0 0.0
    %2740 = vmatprep.subr.mxu0 0.0
    %2741 = vmatpush1.msra.mxu0 0.0
    %2742 = vmatprep.subr.mxu0 0.0
    %2743 = vmatpush1.msra.mxu0 0.0
    %2744 = vmatprep.subr.mxu0 0.0
    %2745 = vmatpush1.msra.mxu0 0.0
    %2746 = vmatprep.subr.mxu0 0.0
    %2747 = vmatpush1.msra.mxu0 0.0
    %2748 = vmatprep.subr.mxu0 0.0
    %2749 = vmatpush1.msra.mxu0 0.0
    %2750 = vmatprep.subr.mxu0 0.0
    %2751 = vmatpush1.msra.mxu0 0.0
    %2752 = vmatprep.mubr.f32.mxu0 0.0
    %2753 = vmatmul.mubr.f32.gmra.mrb[0].mxu0 %v2686
    %v2754 = vpop.f32.mrb[0].mxu0
    %v2755 = vadd.f32 0.0, %v2754
    %v2756 = vpop.f32.mrb[0].mxu0
    %2757 = vdwg.mxu0
    %2758 = vrot.lane.b32.xlu0 %v173, 100
    %v2759 = vpop.permute.xlu0 %2758
    %v2762 = vsel %vm176, %v2225, 0
    %2764 = vmatprep.subr.mxu0 0.0
    %2765 = vmatpush1.msra.mxu0 %v2759
    %2766 = vmatprep.subr.mxu0 0.0
    %2767 = vmatpush1.msra.mxu0 0.0
    %2768 = vmatprep.subr.mxu0 0.0
    %2769 = vmatpush1.msra.mxu0 0.0
    %2770 = vmatprep.subr.mxu0 0.0
    %2771 = vmatpush1.msra.mxu0 0.0
    %2772 = vmatprep.subr.mxu0 0.0
    %2773 = vmatpush1.msra.mxu0 0.0
    %2774 = vmatprep.subr.mxu0 0.0
    %2775 = vmatpush1.msra.mxu0 0.0
    %2776 = vmatprep.subr.mxu0 0.0
    %2777 = vmatpush1.msra.mxu0 0.0
    %2778 = vmatprep.subr.mxu0 0.0
    %2779 = vmatpush1.msra.mxu0 0.0
    %2780 = vmatprep.subr.mxu0 0.0
    %2781 = vmatpush1.msra.mxu0 0.0
    %2782 = vmatprep.subr.mxu0 0.0
    %2783 = vmatpush1.msra.mxu0 0.0
    %2784 = vmatprep.subr.mxu0 0.0
    %2785 = vmatpush1.msra.mxu0 0.0
    %2786 = vmatprep.subr.mxu0 0.0
    %2787 = vmatpush1.msra.mxu0 0.0
    %2788 = vmatprep.subr.mxu0 0.0
    %2789 = vmatpush1.msra.mxu0 0.0
    %2790 = vmatprep.subr.mxu0 0.0
    %2791 = vmatpush1.msra.mxu0 0.0
    %2792 = vmatprep.subr.mxu0 0.0
    %2793 = vmatpush1.msra.mxu0 0.0
    %2794 = vmatprep.subr.mxu0 0.0
    %2795 = vmatpush1.msra.mxu0 0.0
    %2796 = vmatprep.subr.mxu0 0.0
    %2797 = vmatpush1.msra.mxu0 0.0
    %2798 = vmatprep.subr.mxu0 0.0
    %2799 = vmatpush1.msra.mxu0 0.0
    %2800 = vmatprep.subr.mxu0 0.0
    %2801 = vmatpush1.msra.mxu0 0.0
    %2802 = vmatprep.subr.mxu0 0.0
    %2803 = vmatpush1.msra.mxu0 0.0
    %2804 = vmatprep.subr.mxu0 0.0
    %2805 = vmatpush1.msra.mxu0 0.0
    %2806 = vmatprep.subr.mxu0 0.0
    %2807 = vmatpush1.msra.mxu0 0.0
    %2808 = vmatprep.subr.mxu0 0.0
    %2809 = vmatpush1.msra.mxu0 0.0
    %2810 = vmatprep.subr.mxu0 0.0
    %2811 = vmatpush1.msra.mxu0 0.0
    %2812 = vmatprep.subr.mxu0 0.0
    %2813 = vmatpush1.msra.mxu0 0.0
    %2814 = vmatprep.subr.mxu0 0.0
    %2815 = vmatpush1.msra.mxu0 0.0
    %2816 = vmatprep.subr.mxu0 0.0
    %2817 = vmatpush1.msra.mxu0 0.0
    %2818 = vmatprep.subr.mxu0 0.0
    %2819 = vmatpush1.msra.mxu0 0.0
    %2820 = vmatprep.subr.mxu0 0.0
    %2821 = vmatpush1.msra.mxu0 0.0
    %2822 = vmatprep.subr.mxu0 0.0
    %2823 = vmatpush1.msra.mxu0 0.0
    %2824 = vmatprep.subr.mxu0 0.0
    %2825 = vmatpush1.msra.mxu0 0.0
    %2826 = vmatprep.subr.mxu0 0.0
    %2827 = vmatpush1.msra.mxu0 0.0
    %2828 = vmatprep.mubr.f32.mxu0 0.0
    %2829 = vmatmul.mubr.f32.gmra.mrb[0].mxu0 %v2762
    %v2830 = vpop.f32.mrb[0].mxu0
    %v2831 = vadd.f32 0.0, %v2830
    %v2832 = vpop.f32.mrb[0].mxu0
    %2833 = vdwg.mxu0
    %2842 = vrot.lane.b32.xlu0 %v2299, 4
    %v2843 = vpop.permute.xlu0 %2842
    %2844 = vrot.lane.b32.xlu0 %v2375, 4
    %v2845 = vpop.permute.xlu0 %2844
    %2846 = vrot.lane.b32.xlu0 %v2451, 4
    %v2847 = vpop.permute.xlu0 %2846
    %2848 = vrot.lane.b32.xlu0 %v2527, 4
    %v2849 = vpop.permute.xlu0 %2848
    %2850 = vrot.lane.b32.xlu0 %v2603, 4
    %v2851 = vpop.permute.xlu0 %2850
    %2852 = vrot.lane.b32.xlu0 %v2679, 4
    %v2853 = vpop.permute.xlu0 %2852
    %2854 = vrot.lane.b32.xlu0 %v2755, 4
    %v2855 = vpop.permute.xlu0 %2854
    %2856 = vrot.lane.b32.xlu0 %v2831, 4
    %v2857 = vpop.permute.xlu0 %2856
    %v2866 = vsel %vm190, %v979, %v2843
    %v2867 = vsel %vm190, %v1055, %v2845
    %v2868 = vsel %vm190, %v1131, %v2847
    %v2869 = vsel %vm190, %v1207, %v2849
    %v2870 = vsel %vm190, %v1283, %v2851
    %v2871 = vsel %vm190, %v1359, %v2853
    %v2872 = vsel %vm190, %v1435, %v2855
    %v2873 = vsel %vm190, %v1511, %v2857
    %2874 = vst.msk [vmem:[#allocation4] sm:$0xff] %vm176, %v2866
    %2875 = vst.msk [vmem:[#allocation4 + $0x8] sm:$0xff] %vm176, %v2867
    %2876 = vst.msk [vmem:[#allocation4 + $0x10] sm:$0xff] %vm176, %v2868
    %2877 = vst.msk [vmem:[#allocation4 + $0x18] sm:$0xff] %vm176, %v2869
    %2878 = vst.msk [vmem:[#allocation4 + $0x20] sm:$0xff] %vm176, %v2870
    %2879 = vst.msk [vmem:[#allocation4 + $0x28] sm:$0xff] %vm176, %v2871
    %2880 = vst.msk [vmem:[#allocation4 + $0x30] sm:$0xff] %vm176, %v2872
    %2881 = vst.msk [vmem:[#allocation4 + $0x38] sm:$0xff] %vm176, %v2873
    %v2882 = vld [vmem:[%s3] sm:$0xff]
    %v2883 = vld [vmem:[%s4] sm:$0x1]
    %v2885 = vlaneseq
    %v2886 = vshrl.u32 %v2885, 7
    %v2887 = vsub.s32 0, %v2886
    %v2888 = vrot.slane %v2883, %v2887
    %v2891 = vsel %vm176, %v2866, 0
    %v2894 = vsel %vm176, %v2867, 0
    %v2897 = vsel %vm176, %v2868, 0
    %v2900 = vsel %vm176, %v2869, 0
    %v2903 = vsel %vm176, %v2870, 0
    %v2906 = vsel %vm176, %v2871, 0
    %v2909 = vsel %vm176, %v2872, 0
    %v2912 = vsel %vm176, %v2873, 0
    %2914 = vmatprep.subr.mxu0 0.0
    %2915 = vmatpush1.msra.mxu0 %v2882
    %2916 = vmatprep.subr.mxu0 0.0
    %2917 = vmatpush1.msra.mxu0 0.0
    %2918 = vmatprep.subr.mxu0 0.0
    %2919 = vmatpush1.msra.mxu0 0.0
    %2920 = vmatprep.subr.mxu0 0.0
    %2921 = vmatpush1.msra.mxu0 0.0
    %2922 = vmatprep.subr.mxu0 0.0
    %2923 = vmatpush1.msra.mxu0 0.0
    %2924 = vmatprep.subr.mxu0 0.0
    %2925 = vmatpush1.msra.mxu0 0.0
    %2926 = vmatprep.subr.mxu0 0.0
    %2927 = vmatpush1.msra.mxu0 0.0
    %2928 = vmatprep.subr.mxu0 0.0
    %2929 = vmatpush1.msra.mxu0 0.0
    %2930 = vmatprep.subr.mxu0 0.0
    %2931 = vmatpush1.msra.mxu0 0.0
    %2932 = vmatprep.subr.mxu0 0.0
    %2933 = vmatpush1.msra.mxu0 0.0
    %2934 = vmatprep.subr.mxu0 0.0
    %2935 = vmatpush1.msra.mxu0 0.0
    %2936 = vmatprep.subr.mxu0 0.0
    %2937 = vmatpush1.msra.mxu0 0.0
    %2938 = vmatprep.subr.mxu0 0.0
    %2939 = vmatpush1.msra.mxu0 0.0
    %2940 = vmatprep.subr.mxu0 0.0
    %2941 = vmatpush1.msra.mxu0 0.0
    %2942 = vmatprep.subr.mxu0 0.0
    %2943 = vmatpush1.msra.mxu0 0.0
    %2944 = vmatprep.subr.mxu0 0.0
    %2945 = vmatpush1.msra.mxu0 0.0
    %2946 = vmatprep.subr.mxu0 0.0
    %2947 = vmatpush1.msra.mxu0 0.0
    %2948 = vmatprep.subr.mxu0 0.0
    %2949 = vmatpush1.msra.mxu0 0.0
    %2950 = vmatprep.subr.mxu0 0.0
    %2951 = vmatpush1.msra.mxu0 0.0
    %2952 = vmatprep.subr.mxu0 0.0
    %2953 = vmatpush1.msra.mxu0 0.0
    %2954 = vmatprep.subr.mxu0 0.0
    %2955 = vmatpush1.msra.mxu0 0.0
    %2956 = vmatprep.subr.mxu0 0.0
    %2957 = vmatpush1.msra.mxu0 0.0
    %2958 = vmatprep.subr.mxu0 0.0
    %2959 = vmatpush1.msra.mxu0 0.0
    %2960 = vmatprep.subr.mxu0 0.0
    %2961 = vmatpush1.msra.mxu0 0.0
    %2962 = vmatprep.subr.mxu0 0.0
    %2963 = vmatpush1.msra.mxu0 0.0
    %2964 = vmatprep.subr.mxu0 0.0
    %2965 = vmatpush1.msra.mxu0 0.0
    %2966 = vmatprep.subr.mxu0 0.0
    %2967 = vmatpush1.msra.mxu0 0.0
    %2968 = vmatprep.subr.mxu0 0.0
    %2969 = vmatpush1.msra.mxu0 0.0
    %2970 = vmatprep.subr.mxu0 0.0
    %2971 = vmatpush1.msra.mxu0 0.0
    %2972 = vmatprep.subr.mxu0 0.0
    %2973 = vmatpush1.msra.mxu0 0.0
    %2974 = vmatprep.subr.mxu0 0.0
    %2975 = vmatpush1.msra.mxu0 0.0
    %2976 = vmatprep.subr.mxu0 0.0
    %2977 = vmatpush1.msra.mxu0 0.0
    %2978 = vmatprep.mubr.f32.mxu0 0.0
    %2979 = vmatmul.mubr.f32.gmra.mrb[0].mxu0 %v2891
    %v2980 = vpop.f32.mrb[0].mxu0
    %v2981 = vadd.f32 %v2888, %v2980
    %v2982 = vpop.f32.mrb[0].mxu0
    %2983 = vmatprep.mubr.f32.mxu0 0.0
    %2984 = vmatmul.mubr.f32.gmra.mrb[0].mxu0 %v2894
    %v2985 = vpop.f32.mrb[0].mxu0
    %v2986 = vadd.f32 %v2888, %v2985
    %v2987 = vpop.f32.mrb[0].mxu0
    %2988 = vmatprep.mubr.f32.mxu0 0.0
    %2989 = vmatmul.mubr.f32.gmra.mrb[0].mxu0 %v2897
    %v2990 = vpop.f32.mrb[0].mxu0
    %v2991 = vadd.f32 %v2888, %v2990
    %v2992 = vpop.f32.mrb[0].mxu0
    %2993 = vmatprep.mubr.f32.mxu0 0.0
    %2994 = vmatmul.mubr.f32.gmra.mrb[0].mxu0 %v2900
    %v2995 = vpop.f32.mrb[0].mxu0
    %v2996 = vadd.f32 %v2888, %v2995
    %v2997 = vpop.f32.mrb[0].mxu0
    %2998 = vmatprep.mubr.f32.mxu0 0.0
    %2999 = vmatmul.mubr.f32.gmra.mrb[0].mxu0 %v2903
    %v3000 = vpop.f32.mrb[0].mxu0
    %v3001 = vadd.f32 %v2888, %v3000
    %v3002 = vpop.f32.mrb[0].mxu0
    %3003 = vmatprep.mubr.f32.mxu0 0.0
    %3004 = vmatmul.mubr.f32.gmra.mrb[0].mxu0 %v2906
    %v3005 = vpop.f32.mrb[0].mxu0
    %v3006 = vadd.f32 %v2888, %v3005
    %v3007 = vpop.f32.mrb[0].mxu0
    %3008 = vmatprep.mubr.f32.mxu0 0.0
    %3009 = vmatmul.mubr.f32.gmra.mrb[0].mxu0 %v2909
    %v3010 = vpop.f32.mrb[0].mxu0
    %v3011 = vadd.f32 %v2888, %v3010
    %v3012 = vpop.f32.mrb[0].mxu0
    %3013 = vmatprep.mubr.f32.mxu0 0.0
    %3014 = vmatmul.mubr.f32.gmra.mrb[0].mxu0 %v2912
    %v3015 = vpop.f32.mrb[0].mxu0
    %v3016 = vadd.f32 %v2888, %v3015
    %v3017 = vpop.f32.mrb[0].mxu0
    %3018 = vdwg.mxu0
    %vm3019 = vcmask 80896
    %3020 = vst.msk [vmem:[#allocation6] sm:$0xff] %vm3019, %v2981
    %3021 = vst.msk [vmem:[#allocation6 + $0x8] sm:$0xff] %vm3019, %v2986
    %3022 = vst.msk [vmem:[#allocation6 + $0x10] sm:$0xff] %vm3019, %v2991
    %3023 = vst.msk [vmem:[#allocation6 + $0x18] sm:$0xff] %vm3019, %v2996
    %3024 = vst.msk [vmem:[#allocation6 + $0x20] sm:$0xff] %vm3019, %v3001
    %3025 = vst.msk [vmem:[#allocation6 + $0x28] sm:$0xff] %vm3019, %v3006
    %3026 = vst.msk [vmem:[#allocation6 + $0x30] sm:$0xff] %vm3019, %v3011
    %3027 = vst.msk [vmem:[#allocation6 + $0x38] sm:$0xff] %vm3019, %v3016
    // Predicated region
    $region22: #{testmodel_forward.1} parent=1 // pred_check
      _
    $region23: #{testmodel_forward.1} parent=1 // pred_check_branch
      %3029 = sbr.rel (0) target = $region25
    $region24: #{testmodel_forward.1} parent=1 // pred_region
      %s3031 = ssub.s32 1024, 1024
      %3032 = vsyncadd [#allocation3], %s3031
      %s3033 = sshll.u32 [#allocation2], 4
      %s3034 = int_to_ptr.vmem [resolvable:$true] %s3033
      %3039 = dma.vmem_to_hbm [thread:$0]  %s3034, 1024, %s5, [#allocation3], 128, 128, 8
    $region25: #{testmodel_forward.1} parent=1 // pred_fallthru
      _
    // Predicated region
    $region26: #{testmodel_forward.1} parent=1 // pred_check
      _
    $region27: #{testmodel_forward.1} parent=1 // pred_check_branch
      %3041 = sbr.rel (0) target = $region29
    $region28: #{testmodel_forward.1} parent=1 // pred_region
      %s3043 = ssub.s32 1024, 1024
      %3044 = vsyncadd [#allocation5], %s3043
      %s3045 = sshll.u32 [#allocation4], 4
      %s3046 = int_to_ptr.vmem [resolvable:$true] %s3045
      %3051 = dma.vmem_to_hbm [thread:$0]  %s3046, 1024, %s6, [#allocation5], 128, 128, 8
    $region29: #{testmodel_forward.1} parent=1 // pred_fallthru
      _
    // Predicated region
    $region30: #{testmodel_forward.1} parent=1 // pred_check
      _
    $region31: #{testmodel_forward.1} parent=1 // pred_check_branch
      %3053 = sbr.rel (0) target = $region33
    $region32: #{testmodel_forward.1} parent=1 // pred_region
      %s3055 = ssub.s32 1024, 1024
      %3056 = vsyncadd [#allocation5], %s3055
      %s3057 = sshll.u32 [#allocation6], 4
      %s3058 = int_to_ptr.vmem [resolvable:$true] %s3057
      %3063 = dma.vmem_to_hbm [thread:$0]  %s3058, 1024, %s7, [#allocation5], 128, 128, 8
    $region33: #{testmodel_forward.1} parent=1 // pred_fallthru
      _
    // Predicated region
    $region34: #{testmodel_forward.1} parent=1 // pred_check
      _
    $region35: #{testmodel_forward.1} parent=1 // pred_check_branch
      %3065 = sbr.rel (0) target = $region37
    $region36: #{testmodel_forward.1} parent=1 // pred_region
      %3066 = dma.done [#allocation3], 1024
    $region37: #{testmodel_forward.1} parent=1 // pred_fallthru
      _
    // Predicated region
    $region38: #{testmodel_forward.1} parent=1 // pred_check
      _
    $region39: #{testmodel_forward.1} parent=1 // pred_check_branch
      %3068 = sbr.rel (0) target = $region41
    $region40: #{testmodel_forward.1} parent=1 // pred_region
      %3069 = dma.done [#allocation5], 1024
    $region41: #{testmodel_forward.1} parent=1 // pred_fallthru
      _
    // Predicated region
    $region42: #{testmodel_forward.1} parent=1 // pred_check
      _
    $region43: #{testmodel_forward.1} parent=1 // pred_check_branch
      %3071 = sbr.rel (0) target = $region45
    $region44: #{testmodel_forward.1} parent=1 // pred_region
      %3072 = dma.done [#allocation5], 1024
    $region45: #{testmodel_forward.1} parent=1 // pred_fallthru
      _
    %3073 = vsyncpa [#allocation3], 1
    %3074 = vsyncpa [#allocation5], 1

</llo_original>
